<compile_context>
chip_gen: v7x
topology: tpu7x:2x2x1
jax: 0.10.0
libtpu: 0.0.40
codegen_flags: <defaults>
</compile_context>

<pallas_src>
import functools

import jax
import jax.numpy as jnp
import numpy as np
from jax.experimental import pallas as pl
from jax.experimental.pallas import tpu as pltpu

KCONV = 5    # both convs are 5x5, stride 1, valid
POOL = 2     # 2x2 max pools, stride 2
C1_OUT = 6
C2_OUT = 16


# ----------------------------------------------------------------------------
# Fused Pallas kernel (conv1 + pool1 + relu + conv2 + pool2 + relu + 3x FC)
# ----------------------------------------------------------------------------
def _make_kernel(N, P1):
    """N: batch; P1: pool1 output spatial size (conv2 input spatial size)."""

    def kernel(p1_ref, w1_ref, b1_ref, w2_ref, b2_ref, s0_ref,
               f1_ref, f2_ref, f3_ref, out_ref):
        n_par = p1_ref.shape[0]          # 4 pooling parities (2x2)
        c2 = w2_ref.shape[1]             # 16 conv2 output channels
        qw = s0_ref.shape[0]             # valid conv2 lane width (236)
        npp = s0_ref.shape[1] // n_par   # N*P2*P2 pooled-2 cols per parity (32)
        spp = npp // N                   # P2*P2 spatial positions per sample (16)

        # -------- conv1 (4 parity matmuls) + 2x2 max-pool + bias + relu ------
        w1 = w1_ref[...]                                           # (6, CI*25)
        y = None
        for p in range(n_par):
            yp = jnp.dot(w1, p1_ref[p], preferred_element_type=jnp.float32)
            y = yp if y is None else jnp.maximum(y, yp)
        # per-channel bias is constant within each pool window -> add after max
        act1 = jnp.maximum(y + b1_ref[...], 0.0)       # (6, N*P1*P1) cols=(n,r,c)

        # -------- conv2 as a sum of 25 shifted matmuls (lane-dense) ----------
        q = jnp.zeros((c2, qw), jnp.float32)
        for i in range(KCONV):
            for j in range(KCONV):
                d = i * P1 + j                          # static lane shift
                q = q + jnp.dot(w2_ref[i * KCONV + j], act1[:, d:d + qw],
                                preferred_element_type=jnp.float32)

        # -------- 2x2 max-pool via constant 0/1 selection matmul + relu ------
        y2 = jnp.dot(q, s0_ref[...], preferred_element_type=jnp.float32)  # (16, 4*npp)
        r = jnp.maximum(jnp.maximum(y2[:, 0:npp], y2[:, npp:2 * npp]),
                        jnp.maximum(y2[:, 2 * npp:3 * npp], y2[:, 3 * npp:4 * npp]))
        r = jnp.maximum(r + b2_ref[...], 0.0)           # (16, N*P2*P2) cols=(n,ph,pw)

        # -------- flatten to (N, 16*P2*P2) in PyTorch (c, ph, pw) order -------
        rows = []
        for n in range(N):
            pieces = [r[c:c + 1, n * spp:(n + 1) * spp] for c in range(c2)]
            rows.append(jnp.concatenate(pieces, axis=1))            # (1, 256)
        flat = jnp.concatenate(rows, axis=0)                        # (N, 256)

        # -------- fc1 -> relu -> fc2 -> relu -> fc3 (bias=False, 128-padded) --
        h = jnp.maximum(jnp.dot(flat, f1_ref[...],
                                preferred_element_type=jnp.float32), 0.0)
        h = jnp.maximum(jnp.dot(h, f2_ref[...],
                                preferred_element_type=jnp.float32), 0.0)
        out_ref[...] = jnp.dot(h, f3_ref[...],
                               preferred_element_type=jnp.float32)

    return kernel


# ----------------------------------------------------------------------------
# Host-side (XLA) prep: tiny, one fused prologue, no extra kernel launches
# ----------------------------------------------------------------------------
def _conv1_pooled_patches(x, P1):
    """(N,CI,H,W) -> (4, CI*25, N*P1*P1): im2col of the raw input, pre-split
    into the four 2x2-pooling parities so pool1 is a max of 4 matmul results."""
    N, CI, H, W = x.shape
    blocks = []
    for a in range(POOL):
        for b in range(POOL):
            rows = []
            for ci in range(CI):
                for i in range(KCONV):
                    for j in range(KCONV):
                        sl = x[:, ci,
                               a + i:a + i + POOL * (P1 - 1) + 1:POOL,
                               b + j:b + j + POOL * (P1 - 1) + 1:POOL]  # (N,P1,P1)
                        rows.append(sl.reshape(1, N * P1 * P1))
            blocks.append(jnp.concatenate(rows, axis=0))   # (CI*25, N*P1*P1)
    return jnp.stack(blocks, axis=0)


def _pool2_select(N, P1, P2):
    """Constant 0/1 matrix mapping valid conv2 columns -> (parity, n, ph, pw)."""
    H2 = P1 - KCONV + 1
    qw = (N - 1) * P1 * P1 + (H2 - 1) * (P1 + 1) + 1
    s = np.zeros((qw, POOL * POOL * N * P2 * P2), np.float32)
    for a in range(POOL):
        for b in range(POOL):
            for n in range(N):
                for ph in range(P2):
                    for pw in range(P2):
                        src = n * P1 * P1 + (2 * ph + a) * P1 + (2 * pw + b)
                        dst = ((a * POOL + b) * N + n) * P2 * P2 + ph * P2 + pw
                        s[src, dst] = 1.0
    return s


def _full_spec(arr):
    nd = arr.ndim
    return pl.BlockSpec(arr.shape, lambda i, _nd=nd: (0,) * _nd)


@jax.jit
def net_forward(params, x):
    N, CI, H, W = x.shape
    assert H == W
    P1 = (H - KCONV + 1) // POOL          # pool1 output spatial (12)
    H2 = P1 - KCONV + 1                   # conv2 output spatial (8)
    P2 = H2 // POOL                       # pool2 output spatial (4)
    features_in = C2_OUT * P2 * P2        # 256
    num_classes = params["fc3_w"].shape[0]

    # conv operands, laid out for lane-dense (C_out, N*OH*OW) matmuls
    patches1 = _conv1_pooled_patches(x, P1)                           # (4, CI*25, N*P1*P1)
    w1m = params["conv1_w"].reshape(C1_OUT, CI * KCONV * KCONV)       # (6, CI*25)
    b1c = params["conv1_b"].reshape(C1_OUT, 1)
    w2s = params["conv2_w"].transpose(2, 3, 0, 1).reshape(
        KCONV * KCONV, C2_OUT, C1_OUT)                                # (25, 16, 6)
    b2c = params["conv2_b"].reshape(C2_OUT, 1)
    s0 = jnp.asarray(_pool2_select(N, P1, P2))                        # (236, 128)

    # FC weights: transpose to (in, out) and zero-pad widths to multiples of 128
    pad = lambda v: ((v + 127) // 128) * 128
    d1, d2 = pad(120), pad(84)
    f1p = jnp.zeros((features_in, d1), jnp.float32).at[:, :120].set(params["fc1_w"].T)
    f2p = jnp.zeros((d1, d2), jnp.float32).at[:120, :84].set(params["fc2_w"].T)
    f3p = jnp.zeros((d2, num_classes), jnp.float32).at[:84, :].set(params["fc3_w"].T)

    args = (patches1, w1m, b1c, w2s, b2c, s0, f1p, f2p, f3p)
    return pl.pallas_call(
        _make_kernel(N, P1),
        out_shape=jax.ShapeDtypeStruct((N, num_classes), jnp.float32),
        grid=(1,),
        in_specs=[_full_spec(a) for a in args],
        out_specs=pl.BlockSpec((N, num_classes), lambda i: (0, 0)),
        compiler_params=pltpu.CompilerParams(
            dimension_semantics=("arbitrary",)),
    )(*args)


# ----------------------------------------------------------------------------
# Parameter init matching Net(channels_in, num_classes, bias=False)
# ----------------------------------------------------------------------------
def init_params(key, channels_in, num_classes):
    features_in = int((7 + channels_in) * (7 + channels_in) * 16 / 2 ** 2)
    ks = jax.random.split(key, 7)
    p = {
        "conv1_w": 0.1 * jax.random.normal(ks[0], (6, channels_in, 5, 5), jnp.float32),
        "conv1_b": 0.1 * jax.random.normal(ks[1], (6,), jnp.float32),
        "conv2_w": 0.1 * jax.random.normal(ks[2], (16, 6, 5, 5), jnp.float32),
        "conv2_b": 0.1 * jax.random.normal(ks[3], (16,), jnp.float32),
        # Linear layers are bias=False in the reference module.
        "fc1_w": 0.1 * jax.random.normal(ks[4], (120, features_in), jnp.float32),
        "fc2_w": 0.1 * jax.random.normal(ks[5], (84, 120), jnp.float32),
        "fc3_w": 0.1 * jax.random.normal(ks[6], (num_classes, 84), jnp.float32),
    }
    return p


if __name__ == "__main__":
    # Net(channels_in=1, num_classes=10, bias=False).  The module's features_in
    # formula implies spatial size H = W = 26 + 2*channels_in (28x28 for 1 channel).
    channels_in, num_classes = 1, 10
    batch, spatial = 2, 26 + 2 * channels_in

    key = jax.random.PRNGKey(0)
    k_x, k_p = jax.random.split(key)
    x = jax.random.normal(k_x, (batch, channels_in, spatial, spatial), jnp.float32)
    params = init_params(k_p, channels_in, num_classes)

    out = jax.block_until_ready(net_forward(params, x))
    assert out.shape == (batch, num_classes), out.shape
    print("KERNEL_OK")
</pallas_src>

<mosaic_0001>
module attributes {stable_mosaic.version = 11 : i64} {
  func.func @kernel(%arg0: i32, %arg1: memref<4x25x288xf32, #tpu.memory_space<vmem>>, %arg2: memref<6x25xf32, #tpu.memory_space<vmem>>, %arg3: memref<6x1xf32, #tpu.memory_space<vmem>>, %arg4: memref<25x16x6xf32, #tpu.memory_space<vmem>>, %arg5: memref<16x1xf32, #tpu.memory_space<vmem>>, %arg6: memref<236x128xf32, #tpu.memory_space<vmem>>, %arg7: memref<256x128xf32, #tpu.memory_space<vmem>>, %arg8: memref<128x128xf32, #tpu.memory_space<vmem>>, %arg9: memref<128x10xf32, #tpu.memory_space<vmem>>, %arg10: memref<2x10xf32, #tpu.memory_space<vmem>>) attributes {dimension_semantics = [#tpu.dimension_semantics<arbitrary>], iteration_bounds = array<i64: 1>, scalar_prefetch = 0 : i64, scratch_operands = 0 : i64, tpu.core_type = #tpu.core_type<tc>, window_params = [{pipeline_mode = #tpu.pipeline_mode<synchronous>, transform_indices = @transform_0, window_bounds = array<i64: 4, 25, 288>}, {pipeline_mode = #tpu.pipeline_mode<synchronous>, transform_indices = @transform_1, window_bounds = array<i64: 6, 25>}, {pipeline_mode = #tpu.pipeline_mode<synchronous>, transform_indices = @transform_2, window_bounds = array<i64: 6, 1>}, {pipeline_mode = #tpu.pipeline_mode<synchronous>, transform_indices = @transform_3, window_bounds = array<i64: 25, 16, 6>}, {pipeline_mode = #tpu.pipeline_mode<synchronous>, transform_indices = @transform_4, window_bounds = array<i64: 16, 1>}, {pipeline_mode = #tpu.pipeline_mode<synchronous>, transform_indices = @transform_5, window_bounds = array<i64: 236, 128>}, {pipeline_mode = #tpu.pipeline_mode<synchronous>, transform_indices = @transform_6, window_bounds = array<i64: 256, 128>}, {pipeline_mode = #tpu.pipeline_mode<synchronous>, transform_indices = @transform_7, window_bounds = array<i64: 128, 128>}, {pipeline_mode = #tpu.pipeline_mode<synchronous>, transform_indices = @transform_8, window_bounds = array<i64: 128, 10>}, {pipeline_mode = #tpu.pipeline_mode<synchronous>, transform_indices = @transform_9, window_bounds = array<i64: 2, 10>}]} {
    %c0 = arith.constant 0 : index
    %c0_0 = arith.constant 0 : index
    %0 = vector.load %arg2[%c0, %c0_0] : memref<6x25xf32, #tpu.memory_space<vmem>>, vector<6x25xf32>
    %c0_1 = arith.constant 0 : index
    %c0_2 = arith.constant 0 : index
    %c0_3 = arith.constant 0 : index
    %1 = vector.load %arg1[%c0_1, %c0_2, %c0_3] : memref<4x25x288xf32, #tpu.memory_space<vmem>>, vector<1x25x288xf32>
    %2 = vector.shape_cast %1 : vector<1x25x288xf32> to vector<25x288xf32>
    %cst = arith.constant dense<0.000000e+00> : vector<6x288xf32>
    %3 = tpu.matmul %0, %2, %cst {dimension_numbers = #tpu.dot_dimension_numbers<[1], [0], [0], [1], [0, 0, 1, 1], [], []>} : vector<6x25xf32>, vector<25x288xf32>, vector<6x288xf32> -> vector<6x288xf32>
    %c1 = arith.constant 1 : index
    %c0_4 = arith.constant 0 : index
    %c0_5 = arith.constant 0 : index
    %4 = vector.load %arg1[%c1, %c0_4, %c0_5] : memref<4x25x288xf32, #tpu.memory_space<vmem>>, vector<1x25x288xf32>
    %5 = vector.shape_cast %4 : vector<1x25x288xf32> to vector<25x288xf32>
    %cst_6 = arith.constant dense<0.000000e+00> : vector<6x288xf32>
    %6 = tpu.matmul %0, %5, %cst_6 {dimension_numbers = #tpu.dot_dimension_numbers<[1], [0], [0], [1], [0, 0, 1, 1], [], []>} : vector<6x25xf32>, vector<25x288xf32>, vector<6x288xf32> -> vector<6x288xf32>
    %7 = arith.maximumf %3, %6 : vector<6x288xf32>
    %c2 = arith.constant 2 : index
    %c0_7 = arith.constant 0 : index
    %c0_8 = arith.constant 0 : index
    %8 = vector.load %arg1[%c2, %c0_7, %c0_8] : memref<4x25x288xf32, #tpu.memory_space<vmem>>, vector<1x25x288xf32>
    %9 = vector.shape_cast %8 : vector<1x25x288xf32> to vector<25x288xf32>
    %cst_9 = arith.constant dense<0.000000e+00> : vector<6x288xf32>
    %10 = tpu.matmul %0, %9, %cst_9 {dimension_numbers = #tpu.dot_dimension_numbers<[1], [0], [0], [1], [0, 0, 1, 1], [], []>} : vector<6x25xf32>, vector<25x288xf32>, vector<6x288xf32> -> vector<6x288xf32>
    %11 = arith.maximumf %7, %10 : vector<6x288xf32>
    %c3 = arith.constant 3 : index
    %c0_10 = arith.constant 0 : index
    %c0_11 = arith.constant 0 : index
    %12 = vector.load %arg1[%c3, %c0_10, %c0_11] : memref<4x25x288xf32, #tpu.memory_space<vmem>>, vector<1x25x288xf32>
    %13 = vector.shape_cast %12 : vector<1x25x288xf32> to vector<25x288xf32>
    %cst_12 = arith.constant dense<0.000000e+00> : vector<6x288xf32>
    %14 = tpu.matmul %0, %13, %cst_12 {dimension_numbers = #tpu.dot_dimension_numbers<[1], [0], [0], [1], [0, 0, 1, 1], [], []>} : vector<6x25xf32>, vector<25x288xf32>, vector<6x288xf32> -> vector<6x288xf32>
    %15 = arith.maximumf %11, %14 : vector<6x288xf32>
    %c0_13 = arith.constant 0 : index
    %c0_14 = arith.constant 0 : index
    %16 = vector.load %arg3[%c0_13, %c0_14] : memref<6x1xf32, #tpu.memory_space<vmem>>, vector<6x1xf32>
    %17 = vector.broadcast %16 : vector<6x1xf32> to vector<6x288xf32>
    %18 = arith.addf %15, %17 : vector<6x288xf32>
    %cst_15 = arith.constant 0.000000e+00 : f32
    %19 = vector.broadcast %cst_15 : f32 to vector<6x288xf32>
    %20 = arith.maximumf %18, %19 : vector<6x288xf32>
    %cst_16 = arith.constant 0.000000e+00 : f32
    %21 = vector.broadcast %cst_16 : f32 to vector<16x236xf32>
    %c0_17 = arith.constant 0 : index
    %c0_18 = arith.constant 0 : index
    %c0_19 = arith.constant 0 : index
    %22 = vector.load %arg4[%c0_17, %c0_18, %c0_19] : memref<25x16x6xf32, #tpu.memory_space<vmem>>, vector<1x16x6xf32>
    %23 = vector.shape_cast %22 : vector<1x16x6xf32> to vector<16x6xf32>
    %24 = vector.extract_strided_slice %20 {offsets = [0, 0], sizes = [6, 236], strides = [1, 1]} : vector<6x288xf32> to vector<6x236xf32>
    %cst_20 = arith.constant dense<0.000000e+00> : vector<16x236xf32>
    %25 = tpu.matmul %23, %24, %cst_20 {dimension_numbers = #tpu.dot_dimension_numbers<[1], [0], [0], [1], [0, 0, 1, 1], [], []>} : vector<16x6xf32>, vector<6x236xf32>, vector<16x236xf32> -> vector<16x236xf32>
    %26 = arith.addf %21, %25 : vector<16x236xf32>
    %c1_21 = arith.constant 1 : index
    %c0_22 = arith.constant 0 : index
    %c0_23 = arith.constant 0 : index
    %27 = vector.load %arg4[%c1_21, %c0_22, %c0_23] : memref<25x16x6xf32, #tpu.memory_space<vmem>>, vector<1x16x6xf32>
    %28 = vector.shape_cast %27 : vector<1x16x6xf32> to vector<16x6xf32>
    %29 = vector.extract_strided_slice %20 {offsets = [0, 1], sizes = [6, 236], strides = [1, 1]} : vector<6x288xf32> to vector<6x236xf32>
    %cst_24 = arith.constant dense<0.000000e+00> : vector<16x236xf32>
    %30 = tpu.matmul %28, %29, %cst_24 {dimension_numbers = #tpu.dot_dimension_numbers<[1], [0], [0], [1], [0, 0, 1, 1], [], []>} : vector<16x6xf32>, vector<6x236xf32>, vector<16x236xf32> -> vector<16x236xf32>
    %31 = arith.addf %26, %30 : vector<16x236xf32>
    %c2_25 = arith.constant 2 : index
    %c0_26 = arith.constant 0 : index
    %c0_27 = arith.constant 0 : index
    %32 = vector.load %arg4[%c2_25, %c0_26, %c0_27] : memref<25x16x6xf32, #tpu.memory_space<vmem>>, vector<1x16x6xf32>
    %33 = vector.shape_cast %32 : vector<1x16x6xf32> to vector<16x6xf32>
    %34 = vector.extract_strided_slice %20 {offsets = [0, 2], sizes = [6, 236], strides = [1, 1]} : vector<6x288xf32> to vector<6x236xf32>
    %cst_28 = arith.constant dense<0.000000e+00> : vector<16x236xf32>
    %35 = tpu.matmul %33, %34, %cst_28 {dimension_numbers = #tpu.dot_dimension_numbers<[1], [0], [0], [1], [0, 0, 1, 1], [], []>} : vector<16x6xf32>, vector<6x236xf32>, vector<16x236xf32> -> vector<16x236xf32>
    %36 = arith.addf %31, %35 : vector<16x236xf32>
    %c3_29 = arith.constant 3 : index
    %c0_30 = arith.constant 0 : index
    %c0_31 = arith.constant 0 : index
    %37 = vector.load %arg4[%c3_29, %c0_30, %c0_31] : memref<25x16x6xf32, #tpu.memory_space<vmem>>, vector<1x16x6xf32>
    %38 = vector.shape_cast %37 : vector<1x16x6xf32> to vector<16x6xf32>
    %39 = vector.extract_strided_slice %20 {offsets = [0, 3], sizes = [6, 236], strides = [1, 1]} : vector<6x288xf32> to vector<6x236xf32>
    %cst_32 = arith.constant dense<0.000000e+00> : vector<16x236xf32>
    %40 = tpu.matmul %38, %39, %cst_32 {dimension_numbers = #tpu.dot_dimension_numbers<[1], [0], [0], [1], [0, 0, 1, 1], [], []>} : vector<16x6xf32>, vector<6x236xf32>, vector<16x236xf32> -> vector<16x236xf32>
    %41 = arith.addf %36, %40 : vector<16x236xf32>
    %c4 = arith.constant 4 : index
    %c0_33 = arith.constant 0 : index
    %c0_34 = arith.constant 0 : index
    %42 = vector.load %arg4[%c4, %c0_33, %c0_34] : memref<25x16x6xf32, #tpu.memory_space<vmem>>, vector<1x16x6xf32>
    %43 = vector.shape_cast %42 : vector<1x16x6xf32> to vector<16x6xf32>
    %44 = vector.extract_strided_slice %20 {offsets = [0, 4], sizes = [6, 236], strides = [1, 1]} : vector<6x288xf32> to vector<6x236xf32>
    %cst_35 = arith.constant dense<0.000000e+00> : vector<16x236xf32>
    %45 = tpu.matmul %43, %44, %cst_35 {dimension_numbers = #tpu.dot_dimension_numbers<[1], [0], [0], [1], [0, 0, 1, 1], [], []>} : vector<16x6xf32>, vector<6x236xf32>, vector<16x236xf32> -> vector<16x236xf32>
    %46 = arith.addf %41, %45 : vector<16x236xf32>
    %c5 = arith.constant 5 : index
    %c0_36 = arith.constant 0 : index
    %c0_37 = arith.constant 0 : index
    %47 = vector.load %arg4[%c5, %c0_36, %c0_37] : memref<25x16x6xf32, #tpu.memory_space<vmem>>, vector<1x16x6xf32>
    %48 = vector.shape_cast %47 : vector<1x16x6xf32> to vector<16x6xf32>
    %49 = vector.extract_strided_slice %20 {offsets = [0, 12], sizes = [6, 236], strides = [1, 1]} : vector<6x288xf32> to vector<6x236xf32>
    %cst_38 = arith.constant dense<0.000000e+00> : vector<16x236xf32>
    %50 = tpu.matmul %48, %49, %cst_38 {dimension_numbers = #tpu.dot_dimension_numbers<[1], [0], [0], [1], [0, 0, 1, 1], [], []>} : vector<16x6xf32>, vector<6x236xf32>, vector<16x236xf32> -> vector<16x236xf32>
    %51 = arith.addf %46, %50 : vector<16x236xf32>
    %c6 = arith.constant 6 : index
    %c0_39 = arith.constant 0 : index
    %c0_40 = arith.constant 0 : index
    %52 = vector.load %arg4[%c6, %c0_39, %c0_40] : memref<25x16x6xf32, #tpu.memory_space<vmem>>, vector<1x16x6xf32>
    %53 = vector.shape_cast %52 : vector<1x16x6xf32> to vector<16x6xf32>
    %54 = vector.extract_strided_slice %20 {offsets = [0, 13], sizes = [6, 236], strides = [1, 1]} : vector<6x288xf32> to vector<6x236xf32>
    %cst_41 = arith.constant dense<0.000000e+00> : vector<16x236xf32>
    %55 = tpu.matmul %53, %54, %cst_41 {dimension_numbers = #tpu.dot_dimension_numbers<[1], [0], [0], [1], [0, 0, 1, 1], [], []>} : vector<16x6xf32>, vector<6x236xf32>, vector<16x236xf32> -> vector<16x236xf32>
    %56 = arith.addf %51, %55 : vector<16x236xf32>
    %c7 = arith.constant 7 : index
    %c0_42 = arith.constant 0 : index
    %c0_43 = arith.constant 0 : index
    %57 = vector.load %arg4[%c7, %c0_42, %c0_43] : memref<25x16x6xf32, #tpu.memory_space<vmem>>, vector<1x16x6xf32>
    %58 = vector.shape_cast %57 : vector<1x16x6xf32> to vector<16x6xf32>
    %59 = vector.extract_strided_slice %20 {offsets = [0, 14], sizes = [6, 236], strides = [1, 1]} : vector<6x288xf32> to vector<6x236xf32>
    %cst_44 = arith.constant dense<0.000000e+00> : vector<16x236xf32>
    %60 = tpu.matmul %58, %59, %cst_44 {dimension_numbers = #tpu.dot_dimension_numbers<[1], [0], [0], [1], [0, 0, 1, 1], [], []>} : vector<16x6xf32>, vector<6x236xf32>, vector<16x236xf32> -> vector<16x236xf32>
    %61 = arith.addf %56, %60 : vector<16x236xf32>
    %c8 = arith.constant 8 : index
    %c0_45 = arith.constant 0 : index
    %c0_46 = arith.constant 0 : index
    %62 = vector.load %arg4[%c8, %c0_45, %c0_46] : memref<25x16x6xf32, #tpu.memory_space<vmem>>, vector<1x16x6xf32>
    %63 = vector.shape_cast %62 : vector<1x16x6xf32> to vector<16x6xf32>
    %64 = vector.extract_strided_slice %20 {offsets = [0, 15], sizes = [6, 236], strides = [1, 1]} : vector<6x288xf32> to vector<6x236xf32>
    %cst_47 = arith.constant dense<0.000000e+00> : vector<16x236xf32>
    %65 = tpu.matmul %63, %64, %cst_47 {dimension_numbers = #tpu.dot_dimension_numbers<[1], [0], [0], [1], [0, 0, 1, 1], [], []>} : vector<16x6xf32>, vector<6x236xf32>, vector<16x236xf32> -> vector<16x236xf32>
    %66 = arith.addf %61, %65 : vector<16x236xf32>
    %c9 = arith.constant 9 : index
    %c0_48 = arith.constant 0 : index
    %c0_49 = arith.constant 0 : index
    %67 = vector.load %arg4[%c9, %c0_48, %c0_49] : memref<25x16x6xf32, #tpu.memory_space<vmem>>, vector<1x16x6xf32>
    %68 = vector.shape_cast %67 : vector<1x16x6xf32> to vector<16x6xf32>
    %69 = vector.extract_strided_slice %20 {offsets = [0, 16], sizes = [6, 236], strides = [1, 1]} : vector<6x288xf32> to vector<6x236xf32>
    %cst_50 = arith.constant dense<0.000000e+00> : vector<16x236xf32>
    %70 = tpu.matmul %68, %69, %cst_50 {dimension_numbers = #tpu.dot_dimension_numbers<[1], [0], [0], [1], [0, 0, 1, 1], [], []>} : vector<16x6xf32>, vector<6x236xf32>, vector<16x236xf32> -> vector<16x236xf32>
    %71 = arith.addf %66, %70 : vector<16x236xf32>
    %c10 = arith.constant 10 : index
    %c0_51 = arith.constant 0 : index
    %c0_52 = arith.constant 0 : index
    %72 = vector.load %arg4[%c10, %c0_51, %c0_52] : memref<25x16x6xf32, #tpu.memory_space<vmem>>, vector<1x16x6xf32>
    %73 = vector.shape_cast %72 : vector<1x16x6xf32> to vector<16x6xf32>
    %74 = vector.extract_strided_slice %20 {offsets = [0, 24], sizes = [6, 236], strides = [1, 1]} : vector<6x288xf32> to vector<6x236xf32>
    %cst_53 = arith.constant dense<0.000000e+00> : vector<16x236xf32>
    %75 = tpu.matmul %73, %74, %cst_53 {dimension_numbers = #tpu.dot_dimension_numbers<[1], [0], [0], [1], [0, 0, 1, 1], [], []>} : vector<16x6xf32>, vector<6x236xf32>, vector<16x236xf32> -> vector<16x236xf32>
    %76 = arith.addf %71, %75 : vector<16x236xf32>
    %c11 = arith.constant 11 : index
    %c0_54 = arith.constant 0 : index
    %c0_55 = arith.constant 0 : index
    %77 = vector.load %arg4[%c11, %c0_54, %c0_55] : memref<25x16x6xf32, #tpu.memory_space<vmem>>, vector<1x16x6xf32>
    %78 = vector.shape_cast %77 : vector<1x16x6xf32> to vector<16x6xf32>
    %79 = vector.extract_strided_slice %20 {offsets = [0, 25], sizes = [6, 236], strides = [1, 1]} : vector<6x288xf32> to vector<6x236xf32>
    %cst_56 = arith.constant dense<0.000000e+00> : vector<16x236xf32>
    %80 = tpu.matmul %78, %79, %cst_56 {dimension_numbers = #tpu.dot_dimension_numbers<[1], [0], [0], [1], [0, 0, 1, 1], [], []>} : vector<16x6xf32>, vector<6x236xf32>, vector<16x236xf32> -> vector<16x236xf32>
    %81 = arith.addf %76, %80 : vector<16x236xf32>
    %c12 = arith.constant 12 : index
    %c0_57 = arith.constant 0 : index
    %c0_58 = arith.constant 0 : index
    %82 = vector.load %arg4[%c12, %c0_57, %c0_58] : memref<25x16x6xf32, #tpu.memory_space<vmem>>, vector<1x16x6xf32>
    %83 = vector.shape_cast %82 : vector<1x16x6xf32> to vector<16x6xf32>
    %84 = vector.extract_strided_slice %20 {offsets = [0, 26], sizes = [6, 236], strides = [1, 1]} : vector<6x288xf32> to vector<6x236xf32>
    %cst_59 = arith.constant dense<0.000000e+00> : vector<16x236xf32>
    %85 = tpu.matmul %83, %84, %cst_59 {dimension_numbers = #tpu.dot_dimension_numbers<[1], [0], [0], [1], [0, 0, 1, 1], [], []>} : vector<16x6xf32>, vector<6x236xf32>, vector<16x236xf32> -> vector<16x236xf32>
    %86 = arith.addf %81, %85 : vector<16x236xf32>
    %c13 = arith.constant 13 : index
    %c0_60 = arith.constant 0 : index
    %c0_61 = arith.constant 0 : index
    %87 = vector.load %arg4[%c13, %c0_60, %c0_61] : memref<25x16x6xf32, #tpu.memory_space<vmem>>, vector<1x16x6xf32>
    %88 = vector.shape_cast %87 : vector<1x16x6xf32> to vector<16x6xf32>
    %89 = vector.extract_strided_slice %20 {offsets = [0, 27], sizes = [6, 236], strides = [1, 1]} : vector<6x288xf32> to vector<6x236xf32>
    %cst_62 = arith.constant dense<0.000000e+00> : vector<16x236xf32>
    %90 = tpu.matmul %88, %89, %cst_62 {dimension_numbers = #tpu.dot_dimension_numbers<[1], [0], [0], [1], [0, 0, 1, 1], [], []>} : vector<16x6xf32>, vector<6x236xf32>, vector<16x236xf32> -> vector<16x236xf32>
    %91 = arith.addf %86, %90 : vector<16x236xf32>
    %c14 = arith.constant 14 : index
    %c0_63 = arith.constant 0 : index
    %c0_64 = arith.constant 0 : index
    %92 = vector.load %arg4[%c14, %c0_63, %c0_64] : memref<25x16x6xf32, #tpu.memory_space<vmem>>, vector<1x16x6xf32>
    %93 = vector.shape_cast %92 : vector<1x16x6xf32> to vector<16x6xf32>
    %94 = vector.extract_strided_slice %20 {offsets = [0, 28], sizes = [6, 236], strides = [1, 1]} : vector<6x288xf32> to vector<6x236xf32>
    %cst_65 = arith.constant dense<0.000000e+00> : vector<16x236xf32>
    %95 = tpu.matmul %93, %94, %cst_65 {dimension_numbers = #tpu.dot_dimension_numbers<[1], [0], [0], [1], [0, 0, 1, 1], [], []>} : vector<16x6xf32>, vector<6x236xf32>, vector<16x236xf32> -> vector<16x236xf32>
    %96 = arith.addf %91, %95 : vector<16x236xf32>
    %c15 = arith.constant 15 : index
    %c0_66 = arith.constant 0 : index
    %c0_67 = arith.constant 0 : index
    %97 = vector.load %arg4[%c15, %c0_66, %c0_67] : memref<25x16x6xf32, #tpu.memory_space<vmem>>, vector<1x16x6xf32>
    %98 = vector.shape_cast %97 : vector<1x16x6xf32> to vector<16x6xf32>
    %99 = vector.extract_strided_slice %20 {offsets = [0, 36], sizes = [6, 236], strides = [1, 1]} : vector<6x288xf32> to vector<6x236xf32>
    %cst_68 = arith.constant dense<0.000000e+00> : vector<16x236xf32>
    %100 = tpu.matmul %98, %99, %cst_68 {dimension_numbers = #tpu.dot_dimension_numbers<[1], [0], [0], [1], [0, 0, 1, 1], [], []>} : vector<16x6xf32>, vector<6x236xf32>, vector<16x236xf32> -> vector<16x236xf32>
    %101 = arith.addf %96, %100 : vector<16x236xf32>
    %c16 = arith.constant 16 : index
    %c0_69 = arith.constant 0 : index
    %c0_70 = arith.constant 0 : index
    %102 = vector.load %arg4[%c16, %c0_69, %c0_70] : memref<25x16x6xf32, #tpu.memory_space<vmem>>, vector<1x16x6xf32>
    %103 = vector.shape_cast %102 : vector<1x16x6xf32> to vector<16x6xf32>
    %104 = vector.extract_strided_slice %20 {offsets = [0, 37], sizes = [6, 236], strides = [1, 1]} : vector<6x288xf32> to vector<6x236xf32>
    %cst_71 = arith.constant dense<0.000000e+00> : vector<16x236xf32>
    %105 = tpu.matmul %103, %104, %cst_71 {dimension_numbers = #tpu.dot_dimension_numbers<[1], [0], [0], [1], [0, 0, 1, 1], [], []>} : vector<16x6xf32>, vector<6x236xf32>, vector<16x236xf32> -> vector<16x236xf32>
    %106 = arith.addf %101, %105 : vector<16x236xf32>
    %c17 = arith.constant 17 : index
    %c0_72 = arith.constant 0 : index
    %c0_73 = arith.constant 0 : index
    %107 = vector.load %arg4[%c17, %c0_72, %c0_73] : memref<25x16x6xf32, #tpu.memory_space<vmem>>, vector<1x16x6xf32>
    %108 = vector.shape_cast %107 : vector<1x16x6xf32> to vector<16x6xf32>
    %109 = vector.extract_strided_slice %20 {offsets = [0, 38], sizes = [6, 236], strides = [1, 1]} : vector<6x288xf32> to vector<6x236xf32>
    %cst_74 = arith.constant dense<0.000000e+00> : vector<16x236xf32>
    %110 = tpu.matmul %108, %109, %cst_74 {dimension_numbers = #tpu.dot_dimension_numbers<[1], [0], [0], [1], [0, 0, 1, 1], [], []>} : vector<16x6xf32>, vector<6x236xf32>, vector<16x236xf32> -> vector<16x236xf32>
    %111 = arith.addf %106, %110 : vector<16x236xf32>
    %c18 = arith.constant 18 : index
    %c0_75 = arith.constant 0 : index
    %c0_76 = arith.constant 0 : index
    %112 = vector.load %arg4[%c18, %c0_75, %c0_76] : memref<25x16x6xf32, #tpu.memory_space<vmem>>, vector<1x16x6xf32>
    %113 = vector.shape_cast %112 : vector<1x16x6xf32> to vector<16x6xf32>
    %114 = vector.extract_strided_slice %20 {offsets = [0, 39], sizes = [6, 236], strides = [1, 1]} : vector<6x288xf32> to vector<6x236xf32>
    %cst_77 = arith.constant dense<0.000000e+00> : vector<16x236xf32>
    %115 = tpu.matmul %113, %114, %cst_77 {dimension_numbers = #tpu.dot_dimension_numbers<[1], [0], [0], [1], [0, 0, 1, 1], [], []>} : vector<16x6xf32>, vector<6x236xf32>, vector<16x236xf32> -> vector<16x236xf32>
    %116 = arith.addf %111, %115 : vector<16x236xf32>
    %c19 = arith.constant 19 : index
    %c0_78 = arith.constant 0 : index
    %c0_79 = arith.constant 0 : index
    %117 = vector.load %arg4[%c19, %c0_78, %c0_79] : memref<25x16x6xf32, #tpu.memory_space<vmem>>, vector<1x16x6xf32>
    %118 = vector.shape_cast %117 : vector<1x16x6xf32> to vector<16x6xf32>
    %119 = vector.extract_strided_slice %20 {offsets = [0, 40], sizes = [6, 236], strides = [1, 1]} : vector<6x288xf32> to vector<6x236xf32>
    %cst_80 = arith.constant dense<0.000000e+00> : vector<16x236xf32>
    %120 = tpu.matmul %118, %119, %cst_80 {dimension_numbers = #tpu.dot_dimension_numbers<[1], [0], [0], [1], [0, 0, 1, 1], [], []>} : vector<16x6xf32>, vector<6x236xf32>, vector<16x236xf32> -> vector<16x236xf32>
    %121 = arith.addf %116, %120 : vector<16x236xf32>
    %c20 = arith.constant 20 : index
    %c0_81 = arith.constant 0 : index
    %c0_82 = arith.constant 0 : index
    %122 = vector.load %arg4[%c20, %c0_81, %c0_82] : memref<25x16x6xf32, #tpu.memory_space<vmem>>, vector<1x16x6xf32>
    %123 = vector.shape_cast %122 : vector<1x16x6xf32> to vector<16x6xf32>
    %124 = vector.extract_strided_slice %20 {offsets = [0, 48], sizes = [6, 236], strides = [1, 1]} : vector<6x288xf32> to vector<6x236xf32>
    %cst_83 = arith.constant dense<0.000000e+00> : vector<16x236xf32>
    %125 = tpu.matmul %123, %124, %cst_83 {dimension_numbers = #tpu.dot_dimension_numbers<[1], [0], [0], [1], [0, 0, 1, 1], [], []>} : vector<16x6xf32>, vector<6x236xf32>, vector<16x236xf32> -> vector<16x236xf32>
    %126 = arith.addf %121, %125 : vector<16x236xf32>
    %c21 = arith.constant 21 : index
    %c0_84 = arith.constant 0 : index
    %c0_85 = arith.constant 0 : index
    %127 = vector.load %arg4[%c21, %c0_84, %c0_85] : memref<25x16x6xf32, #tpu.memory_space<vmem>>, vector<1x16x6xf32>
    %128 = vector.shape_cast %127 : vector<1x16x6xf32> to vector<16x6xf32>
    %129 = vector.extract_strided_slice %20 {offsets = [0, 49], sizes = [6, 236], strides = [1, 1]} : vector<6x288xf32> to vector<6x236xf32>
    %cst_86 = arith.constant dense<0.000000e+00> : vector<16x236xf32>
    %130 = tpu.matmul %128, %129, %cst_86 {dimension_numbers = #tpu.dot_dimension_numbers<[1], [0], [0], [1], [0, 0, 1, 1], [], []>} : vector<16x6xf32>, vector<6x236xf32>, vector<16x236xf32> -> vector<16x236xf32>
    %131 = arith.addf %126, %130 : vector<16x236xf32>
    %c22 = arith.constant 22 : index
    %c0_87 = arith.constant 0 : index
    %c0_88 = arith.constant 0 : index
    %132 = vector.load %arg4[%c22, %c0_87, %c0_88] : memref<25x16x6xf32, #tpu.memory_space<vmem>>, vector<1x16x6xf32>
    %133 = vector.shape_cast %132 : vector<1x16x6xf32> to vector<16x6xf32>
    %134 = vector.extract_strided_slice %20 {offsets = [0, 50], sizes = [6, 236], strides = [1, 1]} : vector<6x288xf32> to vector<6x236xf32>
    %cst_89 = arith.constant dense<0.000000e+00> : vector<16x236xf32>
    %135 = tpu.matmul %133, %134, %cst_89 {dimension_numbers = #tpu.dot_dimension_numbers<[1], [0], [0], [1], [0, 0, 1, 1], [], []>} : vector<16x6xf32>, vector<6x236xf32>, vector<16x236xf32> -> vector<16x236xf32>
    %136 = arith.addf %131, %135 : vector<16x236xf32>
    %c23 = arith.constant 23 : index
    %c0_90 = arith.constant 0 : index
    %c0_91 = arith.constant 0 : index
    %137 = vector.load %arg4[%c23, %c0_90, %c0_91] : memref<25x16x6xf32, #tpu.memory_space<vmem>>, vector<1x16x6xf32>
    %138 = vector.shape_cast %137 : vector<1x16x6xf32> to vector<16x6xf32>
    %139 = vector.extract_strided_slice %20 {offsets = [0, 51], sizes = [6, 236], strides = [1, 1]} : vector<6x288xf32> to vector<6x236xf32>
    %cst_92 = arith.constant dense<0.000000e+00> : vector<16x236xf32>
    %140 = tpu.matmul %138, %139, %cst_92 {dimension_numbers = #tpu.dot_dimension_numbers<[1], [0], [0], [1], [0, 0, 1, 1], [], []>} : vector<16x6xf32>, vector<6x236xf32>, vector<16x236xf32> -> vector<16x236xf32>
    %141 = arith.addf %136, %140 : vector<16x236xf32>
    %c24 = arith.constant 24 : index
    %c0_93 = arith.constant 0 : index
    %c0_94 = arith.constant 0 : index
    %142 = vector.load %arg4[%c24, %c0_93, %c0_94] : memref<25x16x6xf32, #tpu.memory_space<vmem>>, vector<1x16x6xf32>
    %143 = vector.shape_cast %142 : vector<1x16x6xf32> to vector<16x6xf32>
    %144 = vector.extract_strided_slice %20 {offsets = [0, 52], sizes = [6, 236], strides = [1, 1]} : vector<6x288xf32> to vector<6x236xf32>
    %cst_95 = arith.constant dense<0.000000e+00> : vector<16x236xf32>
    %145 = tpu.matmul %143, %144, %cst_95 {dimension_numbers = #tpu.dot_dimension_numbers<[1], [0], [0], [1], [0, 0, 1, 1], [], []>} : vector<16x6xf32>, vector<6x236xf32>, vector<16x236xf32> -> vector<16x236xf32>
    %146 = arith.addf %141, %145 : vector<16x236xf32>
    %c0_96 = arith.constant 0 : index
    %c0_97 = arith.constant 0 : index
    %147 = vector.load %arg6[%c0_96, %c0_97] : memref<236x128xf32, #tpu.memory_space<vmem>>, vector<236x128xf32>
    %cst_98 = arith.constant dense<0.000000e+00> : vector<16x128xf32>
    %148 = tpu.matmul %146, %147, %cst_98 {dimension_numbers = #tpu.dot_dimension_numbers<[1], [0], [0], [1], [0, 0, 1, 1], [], []>} : vector<16x236xf32>, vector<236x128xf32>, vector<16x128xf32> -> vector<16x128xf32>
    %149 = vector.extract_strided_slice %148 {offsets = [0, 0], sizes = [16, 32], strides = [1, 1]} : vector<16x128xf32> to vector<16x32xf32>
    %150 = vector.extract_strided_slice %148 {offsets = [0, 32], sizes = [16, 32], strides = [1, 1]} : vector<16x128xf32> to vector<16x32xf32>
    %151 = arith.maximumf %149, %150 : vector<16x32xf32>
    %152 = vector.extract_strided_slice %148 {offsets = [0, 64], sizes = [16, 32], strides = [1, 1]} : vector<16x128xf32> to vector<16x32xf32>
    %153 = vector.extract_strided_slice %148 {offsets = [0, 96], sizes = [16, 32], strides = [1, 1]} : vector<16x128xf32> to vector<16x32xf32>
    %154 = arith.maximumf %152, %153 : vector<16x32xf32>
    %155 = arith.maximumf %151, %154 : vector<16x32xf32>
    %c0_99 = arith.constant 0 : index
    %c0_100 = arith.constant 0 : index
    %156 = vector.load %arg5[%c0_99, %c0_100] : memref<16x1xf32, #tpu.memory_space<vmem>>, vector<16x1xf32>
    %157 = vector.broadcast %156 : vector<16x1xf32> to vector<16x32xf32>
    %158 = arith.addf %155, %157 : vector<16x32xf32>
    %cst_101 = arith.constant 0.000000e+00 : f32
    %159 = vector.broadcast %cst_101 : f32 to vector<16x32xf32>
    %160 = arith.maximumf %158, %159 : vector<16x32xf32>
    %161 = vector.extract_strided_slice %160 {offsets = [0, 0], sizes = [1, 16], strides = [1, 1]} : vector<16x32xf32> to vector<1x16xf32>
    %162 = vector.extract_strided_slice %160 {offsets = [1, 0], sizes = [1, 16], strides = [1, 1]} : vector<16x32xf32> to vector<1x16xf32>
    %163 = vector.extract_strided_slice %160 {offsets = [2, 0], sizes = [1, 16], strides = [1, 1]} : vector<16x32xf32> to vector<1x16xf32>
    %164 = vector.extract_strided_slice %160 {offsets = [3, 0], sizes = [1, 16], strides = [1, 1]} : vector<16x32xf32> to vector<1x16xf32>
    %165 = vector.extract_strided_slice %160 {offsets = [4, 0], sizes = [1, 16], strides = [1, 1]} : vector<16x32xf32> to vector<1x16xf32>
    %166 = vector.extract_strided_slice %160 {offsets = [5, 0], sizes = [1, 16], strides = [1, 1]} : vector<16x32xf32> to vector<1x16xf32>
    %167 = vector.extract_strided_slice %160 {offsets = [6, 0], sizes = [1, 16], strides = [1, 1]} : vector<16x32xf32> to vector<1x16xf32>
    %168 = vector.extract_strided_slice %160 {offsets = [7, 0], sizes = [1, 16], strides = [1, 1]} : vector<16x32xf32> to vector<1x16xf32>
    %169 = vector.extract_strided_slice %160 {offsets = [8, 0], sizes = [1, 16], strides = [1, 1]} : vector<16x32xf32> to vector<1x16xf32>
    %170 = vector.extract_strided_slice %160 {offsets = [9, 0], sizes = [1, 16], strides = [1, 1]} : vector<16x32xf32> to vector<1x16xf32>
    %171 = vector.extract_strided_slice %160 {offsets = [10, 0], sizes = [1, 16], strides = [1, 1]} : vector<16x32xf32> to vector<1x16xf32>
    %172 = vector.extract_strided_slice %160 {offsets = [11, 0], sizes = [1, 16], strides = [1, 1]} : vector<16x32xf32> to vector<1x16xf32>
    %173 = vector.extract_strided_slice %160 {offsets = [12, 0], sizes = [1, 16], strides = [1, 1]} : vector<16x32xf32> to vector<1x16xf32>
    %174 = vector.extract_strided_slice %160 {offsets = [13, 0], sizes = [1, 16], strides = [1, 1]} : vector<16x32xf32> to vector<1x16xf32>
    %175 = vector.extract_strided_slice %160 {offsets = [14, 0], sizes = [1, 16], strides = [1, 1]} : vector<16x32xf32> to vector<1x16xf32>
    %176 = vector.extract_strided_slice %160 {offsets = [15, 0], sizes = [1, 16], strides = [1, 1]} : vector<16x32xf32> to vector<1x16xf32>
    %177 = tpu.concatenate %161, %162, %163, %164, %165, %166, %167, %168, %169, %170, %171, %172, %173, %174, %175, %176 in 1 : vector<1x16xf32>, vector<1x16xf32>, vector<1x16xf32>, vector<1x16xf32>, vector<1x16xf32>, vector<1x16xf32>, vector<1x16xf32>, vector<1x16xf32>, vector<1x16xf32>, vector<1x16xf32>, vector<1x16xf32>, vector<1x16xf32>, vector<1x16xf32>, vector<1x16xf32>, vector<1x16xf32>, vector<1x16xf32> -> vector<1x256xf32>
    %178 = vector.extract_strided_slice %160 {offsets = [0, 16], sizes = [1, 16], strides = [1, 1]} : vector<16x32xf32> to vector<1x16xf32>
    %179 = vector.extract_strided_slice %160 {offsets = [1, 16], sizes = [1, 16], strides = [1, 1]} : vector<16x32xf32> to vector<1x16xf32>
    %180 = vector.extract_strided_slice %160 {offsets = [2, 16], sizes = [1, 16], strides = [1, 1]} : vector<16x32xf32> to vector<1x16xf32>
    %181 = vector.extract_strided_slice %160 {offsets = [3, 16], sizes = [1, 16], strides = [1, 1]} : vector<16x32xf32> to vector<1x16xf32>
    %182 = vector.extract_strided_slice %160 {offsets = [4, 16], sizes = [1, 16], strides = [1, 1]} : vector<16x32xf32> to vector<1x16xf32>
    %183 = vector.extract_strided_slice %160 {offsets = [5, 16], sizes = [1, 16], strides = [1, 1]} : vector<16x32xf32> to vector<1x16xf32>
    %184 = vector.extract_strided_slice %160 {offsets = [6, 16], sizes = [1, 16], strides = [1, 1]} : vector<16x32xf32> to vector<1x16xf32>
    %185 = vector.extract_strided_slice %160 {offsets = [7, 16], sizes = [1, 16], strides = [1, 1]} : vector<16x32xf32> to vector<1x16xf32>
    %186 = vector.extract_strided_slice %160 {offsets = [8, 16], sizes = [1, 16], strides = [1, 1]} : vector<16x32xf32> to vector<1x16xf32>
    %187 = vector.extract_strided_slice %160 {offsets = [9, 16], sizes = [1, 16], strides = [1, 1]} : vector<16x32xf32> to vector<1x16xf32>
    %188 = vector.extract_strided_slice %160 {offsets = [10, 16], sizes = [1, 16], strides = [1, 1]} : vector<16x32xf32> to vector<1x16xf32>
    %189 = vector.extract_strided_slice %160 {offsets = [11, 16], sizes = [1, 16], strides = [1, 1]} : vector<16x32xf32> to vector<1x16xf32>
    %190 = vector.extract_strided_slice %160 {offsets = [12, 16], sizes = [1, 16], strides = [1, 1]} : vector<16x32xf32> to vector<1x16xf32>
    %191 = vector.extract_strided_slice %160 {offsets = [13, 16], sizes = [1, 16], strides = [1, 1]} : vector<16x32xf32> to vector<1x16xf32>
    %192 = vector.extract_strided_slice %160 {offsets = [14, 16], sizes = [1, 16], strides = [1, 1]} : vector<16x32xf32> to vector<1x16xf32>
    %193 = vector.extract_strided_slice %160 {offsets = [15, 16], sizes = [1, 16], strides = [1, 1]} : vector<16x32xf32> to vector<1x16xf32>
    %194 = tpu.concatenate %178, %179, %180, %181, %182, %183, %184, %185, %186, %187, %188, %189, %190, %191, %192, %193 in 1 : vector<1x16xf32>, vector<1x16xf32>, vector<1x16xf32>, vector<1x16xf32>, vector<1x16xf32>, vector<1x16xf32>, vector<1x16xf32>, vector<1x16xf32>, vector<1x16xf32>, vector<1x16xf32>, vector<1x16xf32>, vector<1x16xf32>, vector<1x16xf32>, vector<1x16xf32>, vector<1x16xf32>, vector<1x16xf32> -> vector<1x256xf32>
    %195 = tpu.concatenate %177, %194 in 0 : vector<1x256xf32>, vector<1x256xf32> -> vector<2x256xf32>
    %c0_102 = arith.constant 0 : index
    %c0_103 = arith.constant 0 : index
    %196 = vector.load %arg7[%c0_102, %c0_103] : memref<256x128xf32, #tpu.memory_space<vmem>>, vector<256x128xf32>
    %cst_104 = arith.constant dense<0.000000e+00> : vector<2x128xf32>
    %197 = tpu.matmul %195, %196, %cst_104 {dimension_numbers = #tpu.dot_dimension_numbers<[1], [0], [0], [1], [0, 0, 1, 1], [], []>} : vector<2x256xf32>, vector<256x128xf32>, vector<2x128xf32> -> vector<2x128xf32>
    %cst_105 = arith.constant 0.000000e+00 : f32
    %198 = vector.broadcast %cst_105 : f32 to vector<2x128xf32>
    %199 = arith.maximumf %197, %198 : vector<2x128xf32>
    %c0_106 = arith.constant 0 : index
    %c0_107 = arith.constant 0 : index
    %200 = vector.load %arg8[%c0_106, %c0_107] : memref<128x128xf32, #tpu.memory_space<vmem>>, vector<128x128xf32>
    %cst_108 = arith.constant dense<0.000000e+00> : vector<2x128xf32>
    %201 = tpu.matmul %199, %200, %cst_108 {dimension_numbers = #tpu.dot_dimension_numbers<[1], [0], [0], [1], [0, 0, 1, 1], [], []>} : vector<2x128xf32>, vector<128x128xf32>, vector<2x128xf32> -> vector<2x128xf32>
    %cst_109 = arith.constant 0.000000e+00 : f32
    %202 = vector.broadcast %cst_109 : f32 to vector<2x128xf32>
    %203 = arith.maximumf %201, %202 : vector<2x128xf32>
    %c0_110 = arith.constant 0 : index
    %c0_111 = arith.constant 0 : index
    %204 = vector.load %arg9[%c0_110, %c0_111] : memref<128x10xf32, #tpu.memory_space<vmem>>, vector<128x10xf32>
    %cst_112 = arith.constant dense<0.000000e+00> : vector<2x10xf32>
    %205 = tpu.matmul %203, %204, %cst_112 {dimension_numbers = #tpu.dot_dimension_numbers<[1], [0], [0], [1], [0, 0, 1, 1], [], []>} : vector<2x128xf32>, vector<128x10xf32>, vector<2x10xf32> -> vector<2x10xf32>
    %c0_113 = arith.constant 0 : index
    %c0_114 = arith.constant 0 : index
    %206 = vector.load %arg10[%c0_113, %c0_114] : memref<2x10xf32, #tpu.memory_space<vmem>>, vector<2x10xf32>
    tpu.vector_store %arg10[%c0_113, %c0_114], %205 {strides = array<i32>} : memref<2x10xf32, #tpu.memory_space<vmem>>, vector<2x10xf32>,
    return
  }
  func.func @transform_0(%arg0: i32) -> (i32, i32, i32) {
    %c0_i32 = arith.constant 0 : i32
    %c0_i32_0 = arith.constant 0 : i32
    %c0_i32_1 = arith.constant 0 : i32
    %c0_i32_2 = arith.constant 0 : i32
    return %c0_i32, %c0_i32_0, %c0_i32_1 : i32, i32, i32
  }
  func.func @transform_1(%arg0: i32) -> (i32, i32) {
    %c0_i32 = arith.constant 0 : i32
    %c0_i32_0 = arith.constant 0 : i32
    %c0_i32_1 = arith.constant 0 : i32
    return %c0_i32, %c0_i32_0 : i32, i32
  }
  func.func @transform_2(%arg0: i32) -> (i32, i32) {
    %c0_i32 = arith.constant 0 : i32
    %c0_i32_0 = arith.constant 0 : i32
    %c0_i32_1 = arith.constant 0 : i32
    return %c0_i32, %c0_i32_0 : i32, i32
  }
  func.func @transform_3(%arg0: i32) -> (i32, i32, i32) {
    %c0_i32 = arith.constant 0 : i32
    %c0_i32_0 = arith.constant 0 : i32
    %c0_i32_1 = arith.constant 0 : i32
    %c0_i32_2 = arith.constant 0 : i32
    return %c0_i32, %c0_i32_0, %c0_i32_1 : i32, i32, i32
  }
  func.func @transform_4(%arg0: i32) -> (i32, i32) {
    %c0_i32 = arith.constant 0 : i32
    %c0_i32_0 = arith.constant 0 : i32
    %c0_i32_1 = arith.constant 0 : i32
    return %c0_i32, %c0_i32_0 : i32, i32
  }
  func.func @transform_5(%arg0: i32) -> (i32, i32) {
    %c0_i32 = arith.constant 0 : i32
    %c0_i32_0 = arith.constant 0 : i32
    %c0_i32_1 = arith.constant 0 : i32
    return %c0_i32, %c0_i32_0 : i32, i32
  }
  func.func @transform_6(%arg0: i32) -> (i32, i32) {
    %c0_i32 = arith.constant 0 : i32
    %c0_i32_0 = arith.constant 0 : i32
    %c0_i32_1 = arith.constant 0 : i32
    return %c0_i32, %c0_i32_0 : i32, i32
  }
  func.func @transform_7(%arg0: i32) -> (i32, i32) {
    %c0_i32 = arith.constant 0 : i32
    %c0_i32_0 = arith.constant 0 : i32
    %c0_i32_1 = arith.constant 0 : i32
    return %c0_i32, %c0_i32_0 : i32, i32
  }
  func.func @transform_8(%arg0: i32) -> (i32, i32) {
    %c0_i32 = arith.constant 0 : i32
    %c0_i32_0 = arith.constant 0 : i32
    %c0_i32_1 = arith.constant 0 : i32
    return %c0_i32, %c0_i32_0 : i32, i32
  }
  func.func @transform_9(%arg0: i32) -> (i32, i32) {
    %c0_i32 = arith.constant 0 : i32
    %c0_i32_0 = arith.constant 0 : i32
    %c0_i32_1 = arith.constant 0 : i32
    return %c0_i32, %c0_i32_0 : i32, i32
  }
}

</mosaic_0001>

<llo_original>
// kernel: squeeze.174
$region0: #{squeeze.174}
  %s0 = inlined_call_operand.vmem [shape: f32[2,12,12], index: 0, kind: input, shape index: {}]
  %s1 = inlined_call_operand.vmem [shape: f32[1,288], index: 1, kind: output, shape index: {}]
  $region1: #{squeeze.174} parent=0
    #allocation0 [shape = 'u8[12288]{0}', space=vmem, size = 0x3000, scoped, tag = 'scoped mem for output reshape']
    %v2 = vld [vmem:[%s0] sm:$0x1]
    %vm3 = vcmask 97280
    %4 = vst.msk [vmem:[#allocation0] sm:$0x1] %vm3, %v2
    %s5 = scalar_lea.vmem %s0, 25
    %v6 = vld [vmem:[%s5] sm:$0x1]
    %s7 = scalar_lea.vmem %s0, 25
    %v8 = vld [vmem:[%s7] sm:$0x1]
    %vm9 = vcmask 31744
    %v10 = vsel %vm9, %v8, %v6
    %11 = vrot.lane.b32.xlu0 %v10, 124
    %v12 = vpop.permute.xlu0 %11
    %vm13 = vcmask 64512
    %s14 = scalar_lea.vmem [#allocation0], 16
    %15 = vst.msk [vmem:[%s14] sm:$0x1] %vm13, %v12
    %vm16 = vcmask 1048544
    %s17 = scalar_lea.vmem [#allocation0], 8
    %18 = vst.msk [vmem:[%s17] sm:$0x1] %vm16, %v12
    %s19 = scalar_lea.vmem %s0, 10
    %v20 = vld [vmem:[%s19] sm:$0x1]
    %s21 = scalar_lea.vmem %s0, 10
    %v22 = vld [vmem:[%s21] sm:$0x1]
    %vm23 = vcmask 64512
    %v24 = vsel %vm23, %v22, %v20
    %25 = vrot.lane.b32.xlu0 %v24, 120
    %v26 = vpop.permute.xlu0 %25
    %vm27 = vcmask 31744
    %s28 = scalar_lea.vmem [#allocation0], 8
    %29 = vst.msk [vmem:[%s28] sm:$0x1] %vm27, %v26
    %vm30 = vcmask 1048512
    %31 = vst.msk [vmem:[#allocation0] sm:$0x1] %vm30, %v26
    %s32 = scalar_lea.vmem %s0, 24
    %v33 = vld [vmem:[%s32] sm:$0x1]
    %34 = vrot.lane.b32.xlu0 %v33, 112
    %v35 = vpop.permute.xlu0 %34
    %vm36 = vcmask 1015680
    %s37 = scalar_lea.vmem [#allocation0], 8
    %38 = vst.msk [vmem:[%s37] sm:$0x1] %vm36, %v35
    %s39 = scalar_lea.vmem %s0, 9
    %v40 = vld [vmem:[%s39] sm:$0x1]
    %41 = vrot.lane.b32.xlu0 %v40, 108
    %v42 = vpop.permute.xlu0 %41
    %vm43 = vcmask 982880
    %44 = vst.msk [vmem:[#allocation0] sm:$0x1] %vm43, %v42
    %s45 = scalar_lea.vmem %s0, 23
    %v46 = vld [vmem:[%s45] sm:$0x1]
    %47 = vrot.lane.b32.xlu0 %v46, 100
    %v48 = vpop.permute.xlu0 %47
    %vm49 = vcmask 917280
    %s50 = scalar_lea.vmem [#allocation0], 8
    %51 = vst.msk [vmem:[%s50] sm:$0x1] %vm49, %v48
    %s52 = scalar_lea.vmem %s0, 8
    %v53 = vld [vmem:[%s52] sm:$0x1]
    %54 = vrot.lane.b32.xlu0 %v53, 96
    %v55 = vpop.permute.xlu0 %54
    %vm56 = vcmask 884480
    %57 = vst.msk [vmem:[#allocation0] sm:$0x1] %vm56, %v55
    %s58 = scalar_lea.vmem %s0, 22
    %v59 = vld [vmem:[%s58] sm:$0x1]
    %60 = vrot.lane.b32.xlu0 %v59, 88
    %v61 = vpop.permute.xlu0 %60
    %vm62 = vcmask 818880
    %s63 = scalar_lea.vmem [#allocation0], 8
    %64 = vst.msk [vmem:[%s63] sm:$0x1] %vm62, %v61
    %s65 = scalar_lea.vmem %s0, 7
    %v66 = vld [vmem:[%s65] sm:$0x1]
    %67 = vrot.lane.b32.xlu0 %v66, 84
    %v68 = vpop.permute.xlu0 %67
    %vm69 = vcmask 786080
    %70 = vst.msk [vmem:[#allocation0] sm:$0x1] %vm69, %v68
    %s71 = scalar_lea.vmem %s0, 21
    %v72 = vld [vmem:[%s71] sm:$0x1]
    %73 = vrot.lane.b32.xlu0 %v72, 76
    %v74 = vpop.permute.xlu0 %73
    %vm75 = vcmask 720480
    %s76 = scalar_lea.vmem [#allocation0], 8
    %77 = vst.msk [vmem:[%s76] sm:$0x1] %vm75, %v74
    %s78 = scalar_lea.vmem %s0, 6
    %v79 = vld [vmem:[%s78] sm:$0x1]
    %80 = vrot.lane.b32.xlu0 %v79, 72
    %v81 = vpop.permute.xlu0 %80
    %vm82 = vcmask 687680
    %83 = vst.msk [vmem:[#allocation0] sm:$0x1] %vm82, %v81
    %s84 = scalar_lea.vmem %s0, 20
    %v85 = vld [vmem:[%s84] sm:$0x1]
    %86 = vrot.lane.b32.xlu0 %v85, 64
    %v87 = vpop.permute.xlu0 %86
    %vm88 = vcmask 622080
    %s89 = scalar_lea.vmem [#allocation0], 8
    %90 = vst.msk [vmem:[%s89] sm:$0x1] %vm88, %v87
    %s91 = scalar_lea.vmem %s0, 5
    %v92 = vld [vmem:[%s91] sm:$0x1]
    %93 = vrot.lane.b32.xlu0 %v92, 60
    %v94 = vpop.permute.xlu0 %93
    %vm95 = vcmask 589280
    %96 = vst.msk [vmem:[#allocation0] sm:$0x1] %vm95, %v94
    %s97 = scalar_lea.vmem %s0, 19
    %v98 = vld [vmem:[%s97] sm:$0x1]
    %99 = vrot.lane.b32.xlu0 %v98, 52
    %v100 = vpop.permute.xlu0 %99
    %vm101 = vcmask 523680
    %s102 = scalar_lea.vmem [#allocation0], 8
    %103 = vst.msk [vmem:[%s102] sm:$0x1] %vm101, %v100
    %s104 = scalar_lea.vmem %s0, 4
    %v105 = vld [vmem:[%s104] sm:$0x1]
    %106 = vrot.lane.b32.xlu0 %v105, 48
    %v107 = vpop.permute.xlu0 %106
    %vm108 = vcmask 490880
    %109 = vst.msk [vmem:[#allocation0] sm:$0x1] %vm108, %v107
    %s110 = scalar_lea.vmem %s0, 18
    %v111 = vld [vmem:[%s110] sm:$0x1]
    %112 = vrot.lane.b32.xlu0 %v111, 40
    %v113 = vpop.permute.xlu0 %112
    %vm114 = vcmask 425280
    %s115 = scalar_lea.vmem [#allocation0], 8
    %116 = vst.msk [vmem:[%s115] sm:$0x1] %vm114, %v113
    %s117 = scalar_lea.vmem %s0, 3
    %v118 = vld [vmem:[%s117] sm:$0x1]
    %119 = vrot.lane.b32.xlu0 %v118, 36
    %v120 = vpop.permute.xlu0 %119
    %vm121 = vcmask 392480
    %122 = vst.msk [vmem:[#allocation0] sm:$0x1] %vm121, %v120
    %s123 = scalar_lea.vmem %s0, 17
    %v124 = vld [vmem:[%s123] sm:$0x1]
    %125 = vrot.lane.b32.xlu0 %v124, 28
    %v126 = vpop.permute.xlu0 %125
    %vm127 = vcmask 326880
    %s128 = scalar_lea.vmem [#allocation0], 8
    %129 = vst.msk [vmem:[%s128] sm:$0x1] %vm127, %v126
    %s130 = scalar_lea.vmem %s0, 2
    %v131 = vld [vmem:[%s130] sm:$0x1]
    %132 = vrot.lane.b32.xlu0 %v131, 24
    %v133 = vpop.permute.xlu0 %132
    %vm134 = vcmask 294080
    %135 = vst.msk [vmem:[#allocation0] sm:$0x1] %vm134, %v133
    %s136 = scalar_lea.vmem %s0, 27
    %v137 = vld [vmem:[%s136] sm:$0x1]
    %138 = vrot.lane.b32.xlu0 %v137, 20
    %v139 = vpop.permute.xlu0 %138
    %vm140 = vcmask 261280
    %s141 = scalar_lea.vmem [#allocation0], 16
    %142 = vst.msk [vmem:[%s141] sm:$0x1] %vm140, %v139
    %s143 = scalar_lea.vmem %s0, 16
    %v144 = vld [vmem:[%s143] sm:$0x1]
    %145 = vrot.lane.b32.xlu0 %v144, 16
    %v146 = vpop.permute.xlu0 %145
    %vm147 = vcmask 228480
    %s148 = scalar_lea.vmem [#allocation0], 8
    %149 = vst.msk [vmem:[%s148] sm:$0x1] %vm147, %v146
    %s150 = scalar_lea.vmem %s0, 1
    %v151 = vld [vmem:[%s150] sm:$0x1]
    %152 = vrot.lane.b32.xlu0 %v151, 12
    %v153 = vpop.permute.xlu0 %152
    %vm154 = vcmask 195680
    %155 = vst.msk [vmem:[#allocation0] sm:$0x1] %vm154, %v153
    %s156 = scalar_lea.vmem %s0, 26
    %v157 = vld [vmem:[%s156] sm:$0x1]
    %158 = vrot.lane.b32.xlu0 %v157, 8
    %v159 = vpop.permute.xlu0 %158
    %vm160 = vcmask 162880
    %s161 = scalar_lea.vmem [#allocation0], 16
    %162 = vst.msk [vmem:[%s161] sm:$0x1] %vm160, %v159
    %s163 = scalar_lea.vmem %s0, 11
    %v164 = vld [vmem:[%s163] sm:$0x1]
    %165 = vrot.lane.b32.xlu0 %v164, 4
    %v166 = vpop.permute.xlu0 %165
    %vm167 = vcmask 130080
    %s168 = scalar_lea.vmem [#allocation0], 8
    %169 = vst.msk [vmem:[%s168] sm:$0x1] %vm167, %v166
    %s171 = sshllo.u32 0, 1
    %v173 = vld [vmem:[#allocation0] sm:%s171]
    %s174 = sshllo.u32 0, 1
    %175 = vst [vmem:[%s1] sm:%s174] %v173
    %s176 = scalar_lea.vmem [#allocation0], 8
    %v177 = vld [vmem:[%s176] sm:%s171]
    %s178 = sshllo.u32 0, 1
    %s179 = scalar_lea.vmem %s1, 1
    %180 = vst [vmem:[%s179] sm:%s178] %v177
    %s181 = scalar_lea.vmem [#allocation0], 16
    %v182 = vld [vmem:[%s181] sm:%s171]
    %s183 = sshllo.u32 0, 1
    %s184 = smul.addr 1, 2
    %s185 = scalar_lea.vmem %s1, %s184
    %186 = vst [vmem:[%s185] sm:%s183] %v182

// kernel: net_forward.1
$region0: #{net_forward.1}
  #allocation0 [shape = 'u32[]', space=smem, size = 0x4, offset = 0x4, fixed_abs, tag = 'smem constant byte address 0x4 - core index']
  #allocation1 [shape = 'u32[144,128]{1,0:T(1,128)}', space=vmem, size = 0x12000, scoped, tag = 'internal scratch']
  %s0 = inlined_call_operand.vmem [shape: f32[4,25,288], index: 0, kind: input, shape index: {}]
  %s1 = inlined_call_operand.vmem [shape: f32[6,25], index: 1, kind: input, shape index: {}]
  %s2 = inlined_call_operand.vmem [shape: f32[6,1], index: 2, kind: input, shape index: {}]
  %s3 = inlined_call_operand.vmem [shape: f32[25,16,6], index: 3, kind: input, shape index: {}]
  %s4 = inlined_call_operand.vmem [shape: f32[16,1], index: 4, kind: input, shape index: {}]
  %s5 = inlined_call_operand.vmem [shape: f32[236,128], index: 5, kind: input, shape index: {}]
  %s6 = inlined_call_operand.vmem [shape: f32[256,128], index: 6, kind: input, shape index: {}]
  %s7 = inlined_call_operand.vmem [shape: f32[128,128], index: 7, kind: input, shape index: {}]
  %s8 = inlined_call_operand.vmem [shape: f32[128,10], index: 8, kind: input, shape index: {}]
  %s9 = inlined_call_operand.hbm [shape: f32[2,10], index: 9, kind: output, shape index: {}]
  %s10 = sld [smem:[#allocation0]]
  $region46: #{net_forward.1} parent=0
    _
  %s12 = ssub.s32 1, %s10
  %s13 = scalar_select 0, %s12, %s10
  $region1: #{net_forward.1} parent=0
    #allocation2 [shape = 'u8[1024]{0}', space=vmem, size = 0x400, scoped, tag = 'output window, operand 0, single buffered']
    #allocation3 [shape = 's32[1]{0}', space=sflag, size = 0x4, scoped, tag = 'scoped memory for net_forward.1']
    %14 = vsyncpa [#allocation3], 0
    // Predicated region
    $region2: #{net_forward.1} parent=1 // pred_check
      _
    $region3: #{net_forward.1} parent=1 // pred_check_branch
      %16 = sbr.rel (0) target = $region5
    $region4: #{net_forward.1} parent=1 // pred_region
      _
    $region5: #{net_forward.1} parent=1 // pred_fallthru
      _
    // Predicated region
    $region6: #{net_forward.1} parent=1 // pred_check
      _
    $region7: #{net_forward.1} parent=1 // pred_check_branch
      %18 = sbr.rel (0) target = $region9
    $region8: #{net_forward.1} parent=1 // pred_region
      _
    $region9: #{net_forward.1} parent=1 // pred_fallthru
      _
    // Predicated region
    $region10: #{net_forward.1} parent=1 // pred_check
      _
    $region11: #{net_forward.1} parent=1 // pred_check_branch
      %20 = sbr.rel (0) target = $region13
    $region12: #{net_forward.1} parent=1 // pred_region
      _
    $region13: #{net_forward.1} parent=1 // pred_fallthru
      _
    // Predicated region
    $region14: #{net_forward.1} parent=1 // pred_check
      _
    $region15: #{net_forward.1} parent=1 // pred_check_branch
      %22 = sbr.rel (0) target = $region17
    $region16: #{net_forward.1} parent=1 // pred_region
      _
    $region17: #{net_forward.1} parent=1 // pred_fallthru
      _
    // Predicated region
    $region18: #{net_forward.1} parent=1 // pred_check
      _
    $region19: #{net_forward.1} parent=1 // pred_check_branch
      %24 = sbr.rel (0) target = $region21
    $region20: #{net_forward.1} parent=1 // pred_region
      _
    $region21: #{net_forward.1} parent=1 // pred_fallthru
      _
    // Predicated region
    $region22: #{net_forward.1} parent=1 // pred_check
      _
    $region23: #{net_forward.1} parent=1 // pred_check_branch
      %26 = sbr.rel (0) target = $region25
    $region24: #{net_forward.1} parent=1 // pred_region
      _
    $region25: #{net_forward.1} parent=1 // pred_fallthru
      _
    // Predicated region
    $region26: #{net_forward.1} parent=1 // pred_check
      _
    $region27: #{net_forward.1} parent=1 // pred_check_branch
      %28 = sbr.rel (0) target = $region29
    $region28: #{net_forward.1} parent=1 // pred_region
      _
    $region29: #{net_forward.1} parent=1 // pred_fallthru
      _
    // Predicated region
    $region30: #{net_forward.1} parent=1 // pred_check
      _
    $region31: #{net_forward.1} parent=1 // pred_check_branch
      %30 = sbr.rel (0) target = $region33
    $region32: #{net_forward.1} parent=1 // pred_region
      _
    $region33: #{net_forward.1} parent=1 // pred_fallthru
      _
    // Predicated region
    $region34: #{net_forward.1} parent=1 // pred_check
      _
    $region35: #{net_forward.1} parent=1 // pred_check_branch
      %32 = sbr.rel (0) target = $region37
    $region36: #{net_forward.1} parent=1 // pred_region
      _
    $region37: #{net_forward.1} parent=1 // pred_fallthru
      _
    %v33 = vld [vmem:[%s1] sm:$0x3f]
    %v34 = vld [vmem:[%s0] sm:$0xff]
    %v35 = vld [vmem:[%s0 + $0x8] sm:$0xff]
    %v36 = vld [vmem:[%s0 + $0x10] sm:$0xff]
    %v37 = vld [vmem:[%s0 + $0x18] sm:$0xff]
    %v38 = vld [vmem:[%s0 + $0x20] sm:$0xff]
    %v39 = vld [vmem:[%s0 + $0x28] sm:$0xff]
    %v40 = vld [vmem:[%s0 + $0x30] sm:$0xff]
    %v41 = vld [vmem:[%s0 + $0x38] sm:$0xff]
    %v42 = vld [vmem:[%s0 + $0x40] sm:$0xff]
    %v43 = vld [vmem:[%s0 + $0x48] sm:$0x1]
    %v44 = vld [vmem:[%s0 + $0x50] sm:$0x1]
    %v45 = vld [vmem:[%s0 + $0x58] sm:$0x1]
    %vm46 = vcmask 203776
    %v48 = vsel %vm46, %v33, 0
    %vm50 = vcmask 1040384
    %v52 = vsel %vm50, %v43, 0
    %v55 = vsel %vm50, %v44, 0
    %v58 = vsel %vm50, %v45, 0
    %60 = vmatprep.subr.mxu0 %v35
    %61 = vmatpush1.msra.mxu0 %v34
    %62 = vmatprep.subr.mxu0 %v38
    %63 = vmatpush1.msra.mxu0 %v37
    %64 = vmatprep.subr.mxu0 %v41
    %65 = vmatpush1.msra.mxu0 %v40
    %66 = vmatprep.subr.mxu0 %v55
    %67 = vmatpush1.msra.mxu0 %v52
    %68 = vmatprep.subr.mxu0 0.0
    %69 = vmatpush1.msra.mxu0 0.0
    %70 = vmatprep.subr.mxu0 0.0
    %71 = vmatpush1.msra.mxu0 0.0
    %72 = vmatprep.subr.mxu0 0.0
    %73 = vmatpush1.msra.mxu0 0.0
    %74 = vmatprep.subr.mxu0 0.0
    %75 = vmatpush1.msra.mxu0 0.0
    %76 = vmatprep.subr.mxu0 0.0
    %77 = vmatpush1.msra.mxu0 0.0
    %78 = vmatprep.subr.mxu0 0.0
    %79 = vmatpush1.msra.mxu0 0.0
    %80 = vmatprep.subr.mxu0 0.0
    %81 = vmatpush1.msra.mxu0 0.0
    %82 = vmatprep.subr.mxu0 0.0
    %83 = vmatpush1.msra.mxu0 0.0
    %84 = vmatprep.subr.mxu0 0.0
    %85 = vmatpush1.msra.mxu0 0.0
    %86 = vmatprep.subr.mxu0 0.0
    %87 = vmatpush1.msra.mxu0 0.0
    %88 = vmatprep.subr.mxu0 0.0
    %89 = vmatpush1.msra.mxu0 0.0
    %90 = vmatprep.subr.mxu0 0.0
    %91 = vmatpush1.msra.mxu0 0.0
    %92 = vmatprep.subr.mxu0 0.0
    %93 = vmatpush1.msra.mxu0 0.0
    %94 = vmatprep.subr.mxu0 0.0
    %95 = vmatpush1.msra.mxu0 0.0
    %96 = vmatprep.subr.mxu0 0.0
    %97 = vmatpush1.msra.mxu0 0.0
    %98 = vmatprep.subr.mxu0 0.0
    %99 = vmatpush1.msra.mxu0 0.0
    %100 = vmatprep.subr.mxu0 0.0
    %101 = vmatpush1.msra.mxu0 0.0
    %102 = vmatprep.subr.mxu0 0.0
    %103 = vmatpush1.msra.mxu0 0.0
    %104 = vmatprep.subr.mxu0 0.0
    %105 = vmatpush1.msra.mxu0 0.0
    %106 = vmatprep.subr.mxu0 0.0
    %107 = vmatpush1.msra.mxu0 0.0
    %108 = vmatprep.subr.mxu0 0.0
    %109 = vmatpush1.msra.mxu0 0.0
    %110 = vmatprep.subr.mxu0 0.0
    %111 = vmatpush1.msra.mxu0 0.0
    %112 = vmatprep.subr.mxu0 0.0
    %113 = vmatpush1.msra.mxu0 0.0
    %114 = vmatprep.subr.mxu0 0.0
    %115 = vmatpush1.msra.mxu0 0.0
    %116 = vmatprep.subr.mxu0 0.0
    %117 = vmatpush1.msra.mxu0 0.0
    %118 = vmatprep.subr.mxu0 0.0
    %119 = vmatpush1.msra.mxu0 0.0
    %120 = vmatprep.subr.mxu0 0.0
    %121 = vmatpush1.msra.mxu0 0.0
    %122 = vmatprep.subr.mxu0 0.0
    %123 = vmatpush1.msra.mxu0 0.0
    %124 = vmatprep.mubr.f32.mxu0 0.0
    %125 = vmatmul.mubr.f32.gmra.mrb[0].mxu0 %v48
    %v126 = vpop.f32.mrb[0].mxu0
    %v127 = vadd.f32 0.0, %v126
    %v128 = vpop.f32.mrb[0].mxu0
    %v129 = vadd.f32 0.0, %v128
    %130 = vdwg.mxu0
    %131 = vmatprep.subr.mxu0 0.0
    %132 = vmatpush1.msra.mxu0 %v36
    %133 = vmatprep.subr.mxu0 0.0
    %134 = vmatpush1.msra.mxu0 %v39
    %135 = vmatprep.subr.mxu0 0.0
    %136 = vmatpush1.msra.mxu0 %v42
    %137 = vmatprep.subr.mxu0 0.0
    %138 = vmatpush1.msra.mxu0 %v58
    %139 = vmatprep.subr.mxu0 0.0
    %140 = vmatpush1.msra.mxu0 0.0
    %141 = vmatprep.subr.mxu0 0.0
    %142 = vmatpush1.msra.mxu0 0.0
    %143 = vmatprep.subr.mxu0 0.0
    %144 = vmatpush1.msra.mxu0 0.0
    %145 = vmatprep.subr.mxu0 0.0
    %146 = vmatpush1.msra.mxu0 0.0
    %147 = vmatprep.subr.mxu0 0.0
    %148 = vmatpush1.msra.mxu0 0.0
    %149 = vmatprep.subr.mxu0 0.0
    %150 = vmatpush1.msra.mxu0 0.0
    %151 = vmatprep.subr.mxu0 0.0
    %152 = vmatpush1.msra.mxu0 0.0
    %153 = vmatprep.subr.mxu0 0.0
    %154 = vmatpush1.msra.mxu0 0.0
    %155 = vmatprep.subr.mxu0 0.0
    %156 = vmatpush1.msra.mxu0 0.0
    %157 = vmatprep.subr.mxu0 0.0
    %158 = vmatpush1.msra.mxu0 0.0
    %159 = vmatprep.subr.mxu0 0.0
    %160 = vmatpush1.msra.mxu0 0.0
    %161 = vmatprep.subr.mxu0 0.0
    %162 = vmatpush1.msra.mxu0 0.0
    %163 = vmatprep.subr.mxu0 0.0
    %164 = vmatpush1.msra.mxu0 0.0
    %165 = vmatprep.subr.mxu0 0.0
    %166 = vmatpush1.msra.mxu0 0.0
    %167 = vmatprep.subr.mxu0 0.0
    %168 = vmatpush1.msra.mxu0 0.0
    %169 = vmatprep.subr.mxu0 0.0
    %170 = vmatpush1.msra.mxu0 0.0
    %171 = vmatprep.subr.mxu0 0.0
    %172 = vmatpush1.msra.mxu0 0.0
    %173 = vmatprep.subr.mxu0 0.0
    %174 = vmatpush1.msra.mxu0 0.0
    %175 = vmatprep.subr.mxu0 0.0
    %176 = vmatpush1.msra.mxu0 0.0
    %177 = vmatprep.subr.mxu0 0.0
    %178 = vmatpush1.msra.mxu0 0.0
    %179 = vmatprep.subr.mxu0 0.0
    %180 = vmatpush1.msra.mxu0 0.0
    %181 = vmatprep.subr.mxu0 0.0
    %182 = vmatpush1.msra.mxu0 0.0
    %183 = vmatprep.subr.mxu0 0.0
    %184 = vmatpush1.msra.mxu0 0.0
    %185 = vmatprep.subr.mxu0 0.0
    %186 = vmatpush1.msra.mxu0 0.0
    %187 = vmatprep.subr.mxu0 0.0
    %188 = vmatpush1.msra.mxu0 0.0
    %189 = vmatprep.subr.mxu0 0.0
    %190 = vmatpush1.msra.mxu0 0.0
    %191 = vmatprep.subr.mxu0 0.0
    %192 = vmatpush1.msra.mxu0 0.0
    %193 = vmatprep.subr.mxu0 0.0
    %194 = vmatpush1.msra.mxu0 0.0
    %195 = vmatprep.mubr.f32.mxu0 0.0
    %196 = vmatmul.mubr.f32.gmra.mrb[0].mxu0 %v48
    %v197 = vpop.f32.mrb[0].mxu0
    %v198 = vadd.f32 0.0, %v197
    %v199 = vpop.f32.mrb[0].mxu0
    %200 = vdwg.mxu0
    %s201 = scalar_lea.vmem %s0, 96
    %v202 = vld [vmem:[%s201] sm:$0xff]
    %v203 = vld [vmem:[%s201 + $0x8] sm:$0xff]
    %v204 = vld [vmem:[%s201 + $0x10] sm:$0xff]
    %v205 = vld [vmem:[%s201 + $0x18] sm:$0xff]
    %v206 = vld [vmem:[%s201 + $0x20] sm:$0xff]
    %v207 = vld [vmem:[%s201 + $0x28] sm:$0xff]
    %v208 = vld [vmem:[%s201 + $0x30] sm:$0xff]
    %v209 = vld [vmem:[%s201 + $0x38] sm:$0xff]
    %v210 = vld [vmem:[%s201 + $0x40] sm:$0xff]
    %v211 = vld [vmem:[%s201 + $0x48] sm:$0x1]
    %v212 = vld [vmem:[%s201 + $0x50] sm:$0x1]
    %v213 = vld [vmem:[%s201 + $0x58] sm:$0x1]
    %v215 = vsel %vm50, %v211, 0
    %v218 = vsel %vm50, %v212, 0
    %v221 = vsel %vm50, %v213, 0
    %223 = vmatprep.subr.mxu0 %v203
    %224 = vmatpush1.msra.mxu0 %v202
    %225 = vmatprep.subr.mxu0 %v206
    %226 = vmatpush1.msra.mxu0 %v205
    %227 = vmatprep.subr.mxu0 %v209
    %228 = vmatpush1.msra.mxu0 %v208
    %229 = vmatprep.subr.mxu0 %v218
    %230 = vmatpush1.msra.mxu0 %v215
    %231 = vmatprep.subr.mxu0 0.0
    %232 = vmatpush1.msra.mxu0 0.0
    %233 = vmatprep.subr.mxu0 0.0
    %234 = vmatpush1.msra.mxu0 0.0
    %235 = vmatprep.subr.mxu0 0.0
    %236 = vmatpush1.msra.mxu0 0.0
    %237 = vmatprep.subr.mxu0 0.0
    %238 = vmatpush1.msra.mxu0 0.0
    %239 = vmatprep.subr.mxu0 0.0
    %240 = vmatpush1.msra.mxu0 0.0
    %241 = vmatprep.subr.mxu0 0.0
    %242 = vmatpush1.msra.mxu0 0.0
    %243 = vmatprep.subr.mxu0 0.0
    %244 = vmatpush1.msra.mxu0 0.0
    %245 = vmatprep.subr.mxu0 0.0
    %246 = vmatpush1.msra.mxu0 0.0
    %247 = vmatprep.subr.mxu0 0.0
    %248 = vmatpush1.msra.mxu0 0.0
    %249 = vmatprep.subr.mxu0 0.0
    %250 = vmatpush1.msra.mxu0 0.0
    %251 = vmatprep.subr.mxu0 0.0
    %252 = vmatpush1.msra.mxu0 0.0
    %253 = vmatprep.subr.mxu0 0.0
    %254 = vmatpush1.msra.mxu0 0.0
    %255 = vmatprep.subr.mxu0 0.0
    %256 = vmatpush1.msra.mxu0 0.0
    %257 = vmatprep.subr.mxu0 0.0
    %258 = vmatpush1.msra.mxu0 0.0
    %259 = vmatprep.subr.mxu0 0.0
    %260 = vmatpush1.msra.mxu0 0.0
    %261 = vmatprep.subr.mxu0 0.0
    %262 = vmatpush1.msra.mxu0 0.0
    %263 = vmatprep.subr.mxu0 0.0
    %264 = vmatpush1.msra.mxu0 0.0
    %265 = vmatprep.subr.mxu0 0.0
    %266 = vmatpush1.msra.mxu0 0.0
    %267 = vmatprep.subr.mxu0 0.0
    %268 = vmatpush1.msra.mxu0 0.0
    %269 = vmatprep.subr.mxu0 0.0
    %270 = vmatpush1.msra.mxu0 0.0
    %271 = vmatprep.subr.mxu0 0.0
    %272 = vmatpush1.msra.mxu0 0.0
    %273 = vmatprep.subr.mxu0 0.0
    %274 = vmatpush1.msra.mxu0 0.0
    %275 = vmatprep.subr.mxu0 0.0
    %276 = vmatpush1.msra.mxu0 0.0
    %277 = vmatprep.subr.mxu0 0.0
    %278 = vmatpush1.msra.mxu0 0.0
    %279 = vmatprep.subr.mxu0 0.0
    %280 = vmatpush1.msra.mxu0 0.0
    %281 = vmatprep.subr.mxu0 0.0
    %282 = vmatpush1.msra.mxu0 0.0
    %283 = vmatprep.subr.mxu0 0.0
    %284 = vmatpush1.msra.mxu0 0.0
    %285 = vmatprep.subr.mxu0 0.0
    %286 = vmatpush1.msra.mxu0 0.0
    %287 = vmatprep.mubr.f32.mxu0 0.0
    %288 = vmatmul.mubr.f32.gmra.mrb[0].mxu0 %v48
    %v289 = vpop.f32.mrb[0].mxu0
    %v290 = vadd.f32 0.0, %v289
    %v291 = vpop.f32.mrb[0].mxu0
    %v292 = vadd.f32 0.0, %v291
    %293 = vdwg.mxu0
    %294 = vmatprep.subr.mxu0 0.0
    %295 = vmatpush1.msra.mxu0 %v204
    %296 = vmatprep.subr.mxu0 0.0
    %297 = vmatpush1.msra.mxu0 %v207
    %298 = vmatprep.subr.mxu0 0.0
    %299 = vmatpush1.msra.mxu0 %v210
    %300 = vmatprep.subr.mxu0 0.0
    %301 = vmatpush1.msra.mxu0 %v221
    %302 = vmatprep.subr.mxu0 0.0
    %303 = vmatpush1.msra.mxu0 0.0
    %304 = vmatprep.subr.mxu0 0.0
    %305 = vmatpush1.msra.mxu0 0.0
    %306 = vmatprep.subr.mxu0 0.0
    %307 = vmatpush1.msra.mxu0 0.0
    %308 = vmatprep.subr.mxu0 0.0
    %309 = vmatpush1.msra.mxu0 0.0
    %310 = vmatprep.subr.mxu0 0.0
    %311 = vmatpush1.msra.mxu0 0.0
    %312 = vmatprep.subr.mxu0 0.0
    %313 = vmatpush1.msra.mxu0 0.0
    %314 = vmatprep.subr.mxu0 0.0
    %315 = vmatpush1.msra.mxu0 0.0
    %316 = vmatprep.subr.mxu0 0.0
    %317 = vmatpush1.msra.mxu0 0.0
    %318 = vmatprep.subr.mxu0 0.0
    %319 = vmatpush1.msra.mxu0 0.0
    %320 = vmatprep.subr.mxu0 0.0
    %321 = vmatpush1.msra.mxu0 0.0
    %322 = vmatprep.subr.mxu0 0.0
    %323 = vmatpush1.msra.mxu0 0.0
    %324 = vmatprep.subr.mxu0 0.0
    %325 = vmatpush1.msra.mxu0 0.0
    %326 = vmatprep.subr.mxu0 0.0
    %327 = vmatpush1.msra.mxu0 0.0
    %328 = vmatprep.subr.mxu0 0.0
    %329 = vmatpush1.msra.mxu0 0.0
    %330 = vmatprep.subr.mxu0 0.0
    %331 = vmatpush1.msra.mxu0 0.0
    %332 = vmatprep.subr.mxu0 0.0
    %333 = vmatpush1.msra.mxu0 0.0
    %334 = vmatprep.subr.mxu0 0.0
    %335 = vmatpush1.msra.mxu0 0.0
    %336 = vmatprep.subr.mxu0 0.0
    %337 = vmatpush1.msra.mxu0 0.0
    %338 = vmatprep.subr.mxu0 0.0
    %339 = vmatpush1.msra.mxu0 0.0
    %340 = vmatprep.subr.mxu0 0.0
    %341 = vmatpush1.msra.mxu0 0.0
    %342 = vmatprep.subr.mxu0 0.0
    %343 = vmatpush1.msra.mxu0 0.0
    %344 = vmatprep.subr.mxu0 0.0
    %345 = vmatpush1.msra.mxu0 0.0
    %346 = vmatprep.subr.mxu0 0.0
    %347 = vmatpush1.msra.mxu0 0.0
    %348 = vmatprep.subr.mxu0 0.0
    %349 = vmatpush1.msra.mxu0 0.0
    %350 = vmatprep.subr.mxu0 0.0
    %351 = vmatpush1.msra.mxu0 0.0
    %352 = vmatprep.subr.mxu0 0.0
    %353 = vmatpush1.msra.mxu0 0.0
    %354 = vmatprep.subr.mxu0 0.0
    %355 = vmatpush1.msra.mxu0 0.0
    %356 = vmatprep.subr.mxu0 0.0
    %357 = vmatpush1.msra.mxu0 0.0
    %358 = vmatprep.mubr.f32.mxu0 0.0
    %359 = vmatmul.mubr.f32.gmra.mrb[0].mxu0 %v48
    %v360 = vpop.f32.mrb[0].mxu0
    %v361 = vadd.f32 0.0, %v360
    %v362 = vpop.f32.mrb[0].mxu0
    %363 = vdwg.mxu0
    %v364 = vmax.f32 %v127, %v290
    %v365 = vmax.f32 %v129, %v292
    %v366 = vmax.f32 %v198, %v361
    %s367 = scalar_lea.vmem %s0, 192
    %v368 = vld [vmem:[%s367] sm:$0xff]
    %v369 = vld [vmem:[%s367 + $0x8] sm:$0xff]
    %v370 = vld [vmem:[%s367 + $0x10] sm:$0xff]
    %v371 = vld [vmem:[%s367 + $0x18] sm:$0xff]
    %v372 = vld [vmem:[%s367 + $0x20] sm:$0xff]
    %v373 = vld [vmem:[%s367 + $0x28] sm:$0xff]
    %v374 = vld [vmem:[%s367 + $0x30] sm:$0xff]
    %v375 = vld [vmem:[%s367 + $0x38] sm:$0xff]
    %v376 = vld [vmem:[%s367 + $0x40] sm:$0xff]
    %v377 = vld [vmem:[%s367 + $0x48] sm:$0x1]
    %v378 = vld [vmem:[%s367 + $0x50] sm:$0x1]
    %v379 = vld [vmem:[%s367 + $0x58] sm:$0x1]
    %v381 = vsel %vm50, %v377, 0
    %v384 = vsel %vm50, %v378, 0
    %v387 = vsel %vm50, %v379, 0
    %389 = vmatprep.subr.mxu0 %v369
    %390 = vmatpush1.msra.mxu0 %v368
    %391 = vmatprep.subr.mxu0 %v372
    %392 = vmatpush1.msra.mxu0 %v371
    %393 = vmatprep.subr.mxu0 %v375
    %394 = vmatpush1.msra.mxu0 %v374
    %395 = vmatprep.subr.mxu0 %v384
    %396 = vmatpush1.msra.mxu0 %v381
    %397 = vmatprep.subr.mxu0 0.0
    %398 = vmatpush1.msra.mxu0 0.0
    %399 = vmatprep.subr.mxu0 0.0
    %400 = vmatpush1.msra.mxu0 0.0
    %401 = vmatprep.subr.mxu0 0.0
    %402 = vmatpush1.msra.mxu0 0.0
    %403 = vmatprep.subr.mxu0 0.0
    %404 = vmatpush1.msra.mxu0 0.0
    %405 = vmatprep.subr.mxu0 0.0
    %406 = vmatpush1.msra.mxu0 0.0
    %407 = vmatprep.subr.mxu0 0.0
    %408 = vmatpush1.msra.mxu0 0.0
    %409 = vmatprep.subr.mxu0 0.0
    %410 = vmatpush1.msra.mxu0 0.0
    %411 = vmatprep.subr.mxu0 0.0
    %412 = vmatpush1.msra.mxu0 0.0
    %413 = vmatprep.subr.mxu0 0.0
    %414 = vmatpush1.msra.mxu0 0.0
    %415 = vmatprep.subr.mxu0 0.0
    %416 = vmatpush1.msra.mxu0 0.0
    %417 = vmatprep.subr.mxu0 0.0
    %418 = vmatpush1.msra.mxu0 0.0
    %419 = vmatprep.subr.mxu0 0.0
    %420 = vmatpush1.msra.mxu0 0.0
    %421 = vmatprep.subr.mxu0 0.0
    %422 = vmatpush1.msra.mxu0 0.0
    %423 = vmatprep.subr.mxu0 0.0
    %424 = vmatpush1.msra.mxu0 0.0
    %425 = vmatprep.subr.mxu0 0.0
    %426 = vmatpush1.msra.mxu0 0.0
    %427 = vmatprep.subr.mxu0 0.0
    %428 = vmatpush1.msra.mxu0 0.0
    %429 = vmatprep.subr.mxu0 0.0
    %430 = vmatpush1.msra.mxu0 0.0
    %431 = vmatprep.subr.mxu0 0.0
    %432 = vmatpush1.msra.mxu0 0.0
    %433 = vmatprep.subr.mxu0 0.0
    %434 = vmatpush1.msra.mxu0 0.0
    %435 = vmatprep.subr.mxu0 0.0
    %436 = vmatpush1.msra.mxu0 0.0
    %437 = vmatprep.subr.mxu0 0.0
    %438 = vmatpush1.msra.mxu0 0.0
    %439 = vmatprep.subr.mxu0 0.0
    %440 = vmatpush1.msra.mxu0 0.0
    %441 = vmatprep.subr.mxu0 0.0
    %442 = vmatpush1.msra.mxu0 0.0
    %443 = vmatprep.subr.mxu0 0.0
    %444 = vmatpush1.msra.mxu0 0.0
    %445 = vmatprep.subr.mxu0 0.0
    %446 = vmatpush1.msra.mxu0 0.0
    %447 = vmatprep.subr.mxu0 0.0
    %448 = vmatpush1.msra.mxu0 0.0
    %449 = vmatprep.subr.mxu0 0.0
    %450 = vmatpush1.msra.mxu0 0.0
    %451 = vmatprep.subr.mxu0 0.0
    %452 = vmatpush1.msra.mxu0 0.0
    %453 = vmatprep.mubr.f32.mxu0 0.0
    %454 = vmatmul.mubr.f32.gmra.mrb[0].mxu0 %v48
    %v455 = vpop.f32.mrb[0].mxu0
    %v456 = vadd.f32 0.0, %v455
    %v457 = vpop.f32.mrb[0].mxu0
    %v458 = vadd.f32 0.0, %v457
    %459 = vdwg.mxu0
    %460 = vmatprep.subr.mxu0 0.0
    %461 = vmatpush1.msra.mxu0 %v370
    %462 = vmatprep.subr.mxu0 0.0
    %463 = vmatpush1.msra.mxu0 %v373
    %464 = vmatprep.subr.mxu0 0.0
    %465 = vmatpush1.msra.mxu0 %v376
    %466 = vmatprep.subr.mxu0 0.0
    %467 = vmatpush1.msra.mxu0 %v387
    %468 = vmatprep.subr.mxu0 0.0
    %469 = vmatpush1.msra.mxu0 0.0
    %470 = vmatprep.subr.mxu0 0.0
    %471 = vmatpush1.msra.mxu0 0.0
    %472 = vmatprep.subr.mxu0 0.0
    %473 = vmatpush1.msra.mxu0 0.0
    %474 = vmatprep.subr.mxu0 0.0
    %475 = vmatpush1.msra.mxu0 0.0
    %476 = vmatprep.subr.mxu0 0.0
    %477 = vmatpush1.msra.mxu0 0.0
    %478 = vmatprep.subr.mxu0 0.0
    %479 = vmatpush1.msra.mxu0 0.0
    %480 = vmatprep.subr.mxu0 0.0
    %481 = vmatpush1.msra.mxu0 0.0
    %482 = vmatprep.subr.mxu0 0.0
    %483 = vmatpush1.msra.mxu0 0.0
    %484 = vmatprep.subr.mxu0 0.0
    %485 = vmatpush1.msra.mxu0 0.0
    %486 = vmatprep.subr.mxu0 0.0
    %487 = vmatpush1.msra.mxu0 0.0
    %488 = vmatprep.subr.mxu0 0.0
    %489 = vmatpush1.msra.mxu0 0.0
    %490 = vmatprep.subr.mxu0 0.0
    %491 = vmatpush1.msra.mxu0 0.0
    %492 = vmatprep.subr.mxu0 0.0
    %493 = vmatpush1.msra.mxu0 0.0
    %494 = vmatprep.subr.mxu0 0.0
    %495 = vmatpush1.msra.mxu0 0.0
    %496 = vmatprep.subr.mxu0 0.0
    %497 = vmatpush1.msra.mxu0 0.0
    %498 = vmatprep.subr.mxu0 0.0
    %499 = vmatpush1.msra.mxu0 0.0
    %500 = vmatprep.subr.mxu0 0.0
    %501 = vmatpush1.msra.mxu0 0.0
    %502 = vmatprep.subr.mxu0 0.0
    %503 = vmatpush1.msra.mxu0 0.0
    %504 = vmatprep.subr.mxu0 0.0
    %505 = vmatpush1.msra.mxu0 0.0
    %506 = vmatprep.subr.mxu0 0.0
    %507 = vmatpush1.msra.mxu0 0.0
    %508 = vmatprep.subr.mxu0 0.0
    %509 = vmatpush1.msra.mxu0 0.0
    %510 = vmatprep.subr.mxu0 0.0
    %511 = vmatpush1.msra.mxu0 0.0
    %512 = vmatprep.subr.mxu0 0.0
    %513 = vmatpush1.msra.mxu0 0.0
    %514 = vmatprep.subr.mxu0 0.0
    %515 = vmatpush1.msra.mxu0 0.0
    %516 = vmatprep.subr.mxu0 0.0
    %517 = vmatpush1.msra.mxu0 0.0
    %518 = vmatprep.subr.mxu0 0.0
    %519 = vmatpush1.msra.mxu0 0.0
    %520 = vmatprep.subr.mxu0 0.0
    %521 = vmatpush1.msra.mxu0 0.0
    %522 = vmatprep.subr.mxu0 0.0
    %523 = vmatpush1.msra.mxu0 0.0
    %524 = vmatprep.mubr.f32.mxu0 0.0
    %525 = vmatmul.mubr.f32.gmra.mrb[0].mxu0 %v48
    %v526 = vpop.f32.mrb[0].mxu0
    %v527 = vadd.f32 0.0, %v526
    %v528 = vpop.f32.mrb[0].mxu0
    %529 = vdwg.mxu0
    %v530 = vmax.f32 %v364, %v456
    %v531 = vmax.f32 %v365, %v458
    %v532 = vmax.f32 %v366, %v527
    %s533 = scalar_lea.vmem %s0, 288
    %v534 = vld [vmem:[%s533] sm:$0xff]
    %v535 = vld [vmem:[%s533 + $0x8] sm:$0xff]
    %v536 = vld [vmem:[%s533 + $0x10] sm:$0xff]
    %v537 = vld [vmem:[%s533 + $0x18] sm:$0xff]
    %v538 = vld [vmem:[%s533 + $0x20] sm:$0xff]
    %v539 = vld [vmem:[%s533 + $0x28] sm:$0xff]
    %v540 = vld [vmem:[%s533 + $0x30] sm:$0xff]
    %v541 = vld [vmem:[%s533 + $0x38] sm:$0xff]
    %v542 = vld [vmem:[%s533 + $0x40] sm:$0xff]
    %v543 = vld [vmem:[%s533 + $0x48] sm:$0x1]
    %v544 = vld [vmem:[%s533 + $0x50] sm:$0x1]
    %v545 = vld [vmem:[%s533 + $0x58] sm:$0x1]
    %v547 = vsel %vm50, %v543, 0
    %v550 = vsel %vm50, %v544, 0
    %v553 = vsel %vm50, %v545, 0
    %555 = vmatprep.subr.mxu0 %v535
    %556 = vmatpush1.msra.mxu0 %v534
    %557 = vmatprep.subr.mxu0 %v538
    %558 = vmatpush1.msra.mxu0 %v537
    %559 = vmatprep.subr.mxu0 %v541
    %560 = vmatpush1.msra.mxu0 %v540
    %561 = vmatprep.subr.mxu0 %v550
    %562 = vmatpush1.msra.mxu0 %v547
    %563 = vmatprep.subr.mxu0 0.0
    %564 = vmatpush1.msra.mxu0 0.0
    %565 = vmatprep.subr.mxu0 0.0
    %566 = vmatpush1.msra.mxu0 0.0
    %567 = vmatprep.subr.mxu0 0.0
    %568 = vmatpush1.msra.mxu0 0.0
    %569 = vmatprep.subr.mxu0 0.0
    %570 = vmatpush1.msra.mxu0 0.0
    %571 = vmatprep.subr.mxu0 0.0
    %572 = vmatpush1.msra.mxu0 0.0
    %573 = vmatprep.subr.mxu0 0.0
    %574 = vmatpush1.msra.mxu0 0.0
    %575 = vmatprep.subr.mxu0 0.0
    %576 = vmatpush1.msra.mxu0 0.0
    %577 = vmatprep.subr.mxu0 0.0
    %578 = vmatpush1.msra.mxu0 0.0
    %579 = vmatprep.subr.mxu0 0.0
    %580 = vmatpush1.msra.mxu0 0.0
    %581 = vmatprep.subr.mxu0 0.0
    %582 = vmatpush1.msra.mxu0 0.0
    %583 = vmatprep.subr.mxu0 0.0
    %584 = vmatpush1.msra.mxu0 0.0
    %585 = vmatprep.subr.mxu0 0.0
    %586 = vmatpush1.msra.mxu0 0.0
    %587 = vmatprep.subr.mxu0 0.0
    %588 = vmatpush1.msra.mxu0 0.0
    %589 = vmatprep.subr.mxu0 0.0
    %590 = vmatpush1.msra.mxu0 0.0
    %591 = vmatprep.subr.mxu0 0.0
    %592 = vmatpush1.msra.mxu0 0.0
    %593 = vmatprep.subr.mxu0 0.0
    %594 = vmatpush1.msra.mxu0 0.0
    %595 = vmatprep.subr.mxu0 0.0
    %596 = vmatpush1.msra.mxu0 0.0
    %597 = vmatprep.subr.mxu0 0.0
    %598 = vmatpush1.msra.mxu0 0.0
    %599 = vmatprep.subr.mxu0 0.0
    %600 = vmatpush1.msra.mxu0 0.0
    %601 = vmatprep.subr.mxu0 0.0
    %602 = vmatpush1.msra.mxu0 0.0
    %603 = vmatprep.subr.mxu0 0.0
    %604 = vmatpush1.msra.mxu0 0.0
    %605 = vmatprep.subr.mxu0 0.0
    %606 = vmatpush1.msra.mxu0 0.0
    %607 = vmatprep.subr.mxu0 0.0
    %608 = vmatpush1.msra.mxu0 0.0
    %609 = vmatprep.subr.mxu0 0.0
    %610 = vmatpush1.msra.mxu0 0.0
    %611 = vmatprep.subr.mxu0 0.0
    %612 = vmatpush1.msra.mxu0 0.0
    %613 = vmatprep.subr.mxu0 0.0
    %614 = vmatpush1.msra.mxu0 0.0
    %615 = vmatprep.subr.mxu0 0.0
    %616 = vmatpush1.msra.mxu0 0.0
    %617 = vmatprep.subr.mxu0 0.0
    %618 = vmatpush1.msra.mxu0 0.0
    %619 = vmatprep.mubr.f32.mxu0 0.0
    %620 = vmatmul.mubr.f32.gmra.mrb[0].mxu0 %v48
    %v621 = vpop.f32.mrb[0].mxu0
    %v622 = vadd.f32 0.0, %v621
    %v623 = vpop.f32.mrb[0].mxu0
    %v624 = vadd.f32 0.0, %v623
    %625 = vdwg.mxu0
    %626 = vmatprep.subr.mxu0 0.0
    %627 = vmatpush1.msra.mxu0 %v536
    %628 = vmatprep.subr.mxu0 0.0
    %629 = vmatpush1.msra.mxu0 %v539
    %630 = vmatprep.subr.mxu0 0.0
    %631 = vmatpush1.msra.mxu0 %v542
    %632 = vmatprep.subr.mxu0 0.0
    %633 = vmatpush1.msra.mxu0 %v553
    %634 = vmatprep.subr.mxu0 0.0
    %635 = vmatpush1.msra.mxu0 0.0
    %636 = vmatprep.subr.mxu0 0.0
    %637 = vmatpush1.msra.mxu0 0.0
    %638 = vmatprep.subr.mxu0 0.0
    %639 = vmatpush1.msra.mxu0 0.0
    %640 = vmatprep.subr.mxu0 0.0
    %641 = vmatpush1.msra.mxu0 0.0
    %642 = vmatprep.subr.mxu0 0.0
    %643 = vmatpush1.msra.mxu0 0.0
    %644 = vmatprep.subr.mxu0 0.0
    %645 = vmatpush1.msra.mxu0 0.0
    %646 = vmatprep.subr.mxu0 0.0
    %647 = vmatpush1.msra.mxu0 0.0
    %648 = vmatprep.subr.mxu0 0.0
    %649 = vmatpush1.msra.mxu0 0.0
    %650 = vmatprep.subr.mxu0 0.0
    %651 = vmatpush1.msra.mxu0 0.0
    %652 = vmatprep.subr.mxu0 0.0
    %653 = vmatpush1.msra.mxu0 0.0
    %654 = vmatprep.subr.mxu0 0.0
    %655 = vmatpush1.msra.mxu0 0.0
    %656 = vmatprep.subr.mxu0 0.0
    %657 = vmatpush1.msra.mxu0 0.0
    %658 = vmatprep.subr.mxu0 0.0
    %659 = vmatpush1.msra.mxu0 0.0
    %660 = vmatprep.subr.mxu0 0.0
    %661 = vmatpush1.msra.mxu0 0.0
    %662 = vmatprep.subr.mxu0 0.0
    %663 = vmatpush1.msra.mxu0 0.0
    %664 = vmatprep.subr.mxu0 0.0
    %665 = vmatpush1.msra.mxu0 0.0
    %666 = vmatprep.subr.mxu0 0.0
    %667 = vmatpush1.msra.mxu0 0.0
    %668 = vmatprep.subr.mxu0 0.0
    %669 = vmatpush1.msra.mxu0 0.0
    %670 = vmatprep.subr.mxu0 0.0
    %671 = vmatpush1.msra.mxu0 0.0
    %672 = vmatprep.subr.mxu0 0.0
    %673 = vmatpush1.msra.mxu0 0.0
    %674 = vmatprep.subr.mxu0 0.0
    %675 = vmatpush1.msra.mxu0 0.0
    %676 = vmatprep.subr.mxu0 0.0
    %677 = vmatpush1.msra.mxu0 0.0
    %678 = vmatprep.subr.mxu0 0.0
    %679 = vmatpush1.msra.mxu0 0.0
    %680 = vmatprep.subr.mxu0 0.0
    %681 = vmatpush1.msra.mxu0 0.0
    %682 = vmatprep.subr.mxu0 0.0
    %683 = vmatpush1.msra.mxu0 0.0
    %684 = vmatprep.subr.mxu0 0.0
    %685 = vmatpush1.msra.mxu0 0.0
    %686 = vmatprep.subr.mxu0 0.0
    %687 = vmatpush1.msra.mxu0 0.0
    %688 = vmatprep.subr.mxu0 0.0
    %689 = vmatpush1.msra.mxu0 0.0
    %690 = vmatprep.mubr.f32.mxu0 0.0
    %691 = vmatmul.mubr.f32.gmra.mrb[0].mxu0 %v48
    %v692 = vpop.f32.mrb[0].mxu0
    %v693 = vadd.f32 0.0, %v692
    %v694 = vpop.f32.mrb[0].mxu0
    %695 = vdwg.mxu0
    %v696 = vmax.f32 %v530, %v622
    %v697 = vmax.f32 %v531, %v624
    %v698 = vmax.f32 %v532, %v693
    %v699 = vld [vmem:[%s2] sm:$0x3f]
    %701 = vset.pattern.permute.xlu0 0
    %702 = vperm.xlu0 %701, %v699
    %v703 = vpop.permute.xlu0 %702
    %v705 = vadd.f32 %v696, %v703
    %v706 = vadd.f32 %v697, %v703
    %v707 = vadd.f32 %v698, %v703
    %v708 = vmax.f32 %v705, 0.0
    %v709 = vmax.f32 %v706, 0.0
    %v710 = vmax.f32 %v707, 0.0
    %v711 = vld [vmem:[%s3] sm:$0xff]
    %v712 = vld [vmem:[%s3 + $0x8] sm:$0xff]
    %s713 = scalar_lea.vmem %s3, 16
    %v714 = vld [vmem:[%s713] sm:$0xff]
    %v715 = vld [vmem:[%s713 + $0x8] sm:$0xff]
    %718 = vrot.lane.b32.xlu0 %v708, 127
    %v719 = vpop.permute.xlu0 %718
    %720 = vrot.lane.b32.xlu0 %v709, 127
    %v721 = vpop.permute.xlu0 %720
    %vm722 = vcmask 1039360
    %v723 = vsel %vm722, %v719, %v721
    %vm724 = vcmask 48128
    %v726 = vsel %vm724, %v714, 0
    %v729 = vsel %vm724, %v715, 0
    %vm731 = vcmask 1045504
    %v732 = vsel %vm731, %v723, 0
    %v734 = vsel %vm731, %v721, 0
    %736 = vmatprep.subr.mxu0 %v734
    %737 = vmatpush1.msra.mxu0 %v732
    %738 = vmatprep.subr.mxu0 0.0
    %739 = vmatpush1.msra.mxu0 0.0
    %740 = vmatprep.subr.mxu0 0.0
    %741 = vmatpush1.msra.mxu0 0.0
    %742 = vmatprep.subr.mxu0 0.0
    %743 = vmatpush1.msra.mxu0 0.0
    %744 = vmatprep.subr.mxu0 0.0
    %745 = vmatpush1.msra.mxu0 0.0
    %746 = vmatprep.subr.mxu0 0.0
    %747 = vmatpush1.msra.mxu0 0.0
    %748 = vmatprep.subr.mxu0 0.0
    %749 = vmatpush1.msra.mxu0 0.0
    %750 = vmatprep.subr.mxu0 0.0
    %751 = vmatpush1.msra.mxu0 0.0
    %752 = vmatprep.subr.mxu0 0.0
    %753 = vmatpush1.msra.mxu0 0.0
    %754 = vmatprep.subr.mxu0 0.0
    %755 = vmatpush1.msra.mxu0 0.0
    %756 = vmatprep.subr.mxu0 0.0
    %757 = vmatpush1.msra.mxu0 0.0
    %758 = vmatprep.subr.mxu0 0.0
    %759 = vmatpush1.msra.mxu0 0.0
    %760 = vmatprep.subr.mxu0 0.0
    %761 = vmatpush1.msra.mxu0 0.0
    %762 = vmatprep.subr.mxu0 0.0
    %763 = vmatpush1.msra.mxu0 0.0
    %764 = vmatprep.subr.mxu0 0.0
    %765 = vmatpush1.msra.mxu0 0.0
    %766 = vmatprep.subr.mxu0 0.0
    %767 = vmatpush1.msra.mxu0 0.0
    %768 = vmatprep.subr.mxu0 0.0
    %769 = vmatpush1.msra.mxu0 0.0
    %770 = vmatprep.subr.mxu0 0.0
    %771 = vmatpush1.msra.mxu0 0.0
    %772 = vmatprep.subr.mxu0 0.0
    %773 = vmatpush1.msra.mxu0 0.0
    %774 = vmatprep.subr.mxu0 0.0
    %775 = vmatpush1.msra.mxu0 0.0
    %776 = vmatprep.subr.mxu0 0.0
    %777 = vmatpush1.msra.mxu0 0.0
    %778 = vmatprep.subr.mxu0 0.0
    %779 = vmatpush1.msra.mxu0 0.0
    %780 = vmatprep.subr.mxu0 0.0
    %781 = vmatpush1.msra.mxu0 0.0
    %782 = vmatprep.subr.mxu0 0.0
    %783 = vmatpush1.msra.mxu0 0.0
    %784 = vmatprep.subr.mxu0 0.0
    %785 = vmatpush1.msra.mxu0 0.0
    %786 = vmatprep.subr.mxu0 0.0
    %787 = vmatpush1.msra.mxu0 0.0
    %788 = vmatprep.subr.mxu0 0.0
    %789 = vmatpush1.msra.mxu0 0.0
    %790 = vmatprep.subr.mxu0 0.0
    %791 = vmatpush1.msra.mxu0 0.0
    %792 = vmatprep.subr.mxu0 0.0
    %793 = vmatpush1.msra.mxu0 0.0
    %794 = vmatprep.subr.mxu0 0.0
    %795 = vmatpush1.msra.mxu0 0.0
    %796 = vmatprep.subr.mxu0 0.0
    %797 = vmatpush1.msra.mxu0 0.0
    %798 = vmatprep.subr.mxu0 0.0
    %799 = vmatpush1.msra.mxu0 0.0
    %800 = vmatprep.mubr.f32.mxu0 0.0
    %801 = vmatmul.mubr.f32.gmra.mrb[0].mxu0 %v726
    %v802 = vpop.f32.mrb[0].mxu0
    %v803 = vadd.f32 0.0, %v802
    %v804 = vpop.f32.mrb[0].mxu0
    %v805 = vadd.f32 0.0, %v804
    %806 = vmatprep.mubr.f32.mxu0 0.0
    %807 = vmatmul.mubr.f32.gmra.mrb[0].mxu0 %v729
    %v808 = vpop.f32.mrb[0].mxu0
    %v809 = vadd.f32 0.0, %v808
    %v810 = vpop.f32.mrb[0].mxu0
    %v811 = vadd.f32 0.0, %v810
    %812 = vdwg.mxu0
    %v814 = vsel %vm724, %v711, 0
    %v817 = vsel %vm724, %v712, 0
    %v819 = vsel %vm731, %v708, 0
    %v821 = vsel %vm731, %v709, 0
    %823 = vmatprep.subr.mxu0 %v821
    %824 = vmatpush1.msra.mxu0 %v819
    %825 = vmatprep.subr.mxu0 0.0
    %826 = vmatpush1.msra.mxu0 0.0
    %827 = vmatprep.subr.mxu0 0.0
    %828 = vmatpush1.msra.mxu0 0.0
    %829 = vmatprep.subr.mxu0 0.0
    %830 = vmatpush1.msra.mxu0 0.0
    %831 = vmatprep.subr.mxu0 0.0
    %832 = vmatpush1.msra.mxu0 0.0
    %833 = vmatprep.subr.mxu0 0.0
    %834 = vmatpush1.msra.mxu0 0.0
    %835 = vmatprep.subr.mxu0 0.0
    %836 = vmatpush1.msra.mxu0 0.0
    %837 = vmatprep.subr.mxu0 0.0
    %838 = vmatpush1.msra.mxu0 0.0
    %839 = vmatprep.subr.mxu0 0.0
    %840 = vmatpush1.msra.mxu0 0.0
    %841 = vmatprep.subr.mxu0 0.0
    %842 = vmatpush1.msra.mxu0 0.0
    %843 = vmatprep.subr.mxu0 0.0
    %844 = vmatpush1.msra.mxu0 0.0
    %845 = vmatprep.subr.mxu0 0.0
    %846 = vmatpush1.msra.mxu0 0.0
    %847 = vmatprep.subr.mxu0 0.0
    %848 = vmatpush1.msra.mxu0 0.0
    %849 = vmatprep.subr.mxu0 0.0
    %850 = vmatpush1.msra.mxu0 0.0
    %851 = vmatprep.subr.mxu0 0.0
    %852 = vmatpush1.msra.mxu0 0.0
    %853 = vmatprep.subr.mxu0 0.0
    %854 = vmatpush1.msra.mxu0 0.0
    %855 = vmatprep.subr.mxu0 0.0
    %856 = vmatpush1.msra.mxu0 0.0
    %857 = vmatprep.subr.mxu0 0.0
    %858 = vmatpush1.msra.mxu0 0.0
    %859 = vmatprep.subr.mxu0 0.0
    %860 = vmatpush1.msra.mxu0 0.0
    %861 = vmatprep.subr.mxu0 0.0
    %862 = vmatpush1.msra.mxu0 0.0
    %863 = vmatprep.subr.mxu0 0.0
    %864 = vmatpush1.msra.mxu0 0.0
    %865 = vmatprep.subr.mxu0 0.0
    %866 = vmatpush1.msra.mxu0 0.0
    %867 = vmatprep.subr.mxu0 0.0
    %868 = vmatpush1.msra.mxu0 0.0
    %869 = vmatprep.subr.mxu0 0.0
    %870 = vmatpush1.msra.mxu0 0.0
    %871 = vmatprep.subr.mxu0 0.0
    %872 = vmatpush1.msra.mxu0 0.0
    %873 = vmatprep.subr.mxu0 0.0
    %874 = vmatpush1.msra.mxu0 0.0
    %875 = vmatprep.subr.mxu0 0.0
    %876 = vmatpush1.msra.mxu0 0.0
    %877 = vmatprep.subr.mxu0 0.0
    %878 = vmatpush1.msra.mxu0 0.0
    %879 = vmatprep.subr.mxu0 0.0
    %880 = vmatpush1.msra.mxu0 0.0
    %881 = vmatprep.subr.mxu0 0.0
    %882 = vmatpush1.msra.mxu0 0.0
    %883 = vmatprep.subr.mxu0 0.0
    %884 = vmatpush1.msra.mxu0 0.0
    %885 = vmatprep.subr.mxu0 0.0
    %886 = vmatpush1.msra.mxu0 0.0
    %887 = vmatprep.mubr.f32.mxu0 0.0
    %888 = vmatmul.mubr.f32.gmra.mrb[0].mxu0 %v814
    %v889 = vpop.f32.mrb[0].mxu0
    %v890 = vadd.f32 %v803, %v889
    %v891 = vpop.f32.mrb[0].mxu0
    %v892 = vadd.f32 %v805, %v891
    %893 = vmatprep.mubr.f32.mxu0 0.0
    %894 = vmatmul.mubr.f32.gmra.mrb[0].mxu0 %v817
    %v895 = vpop.f32.mrb[0].mxu0
    %v896 = vadd.f32 %v809, %v895
    %v897 = vpop.f32.mrb[0].mxu0
    %v898 = vadd.f32 %v811, %v897
    %899 = vdwg.mxu0
    %s900 = scalar_lea.vmem %s3, 32
    %v901 = vld [vmem:[%s900] sm:$0xff]
    %v902 = vld [vmem:[%s900 + $0x8] sm:$0xff]
    %903 = vrot.lane.b32.xlu0 %v708, 126
    %v904 = vpop.permute.xlu0 %903
    %905 = vrot.lane.b32.xlu0 %v709, 126
    %v906 = vpop.permute.xlu0 %905
    %vm907 = vcmask 1031168
    %v908 = vsel %vm907, %v904, %v906
    %v910 = vsel %vm724, %v901, 0
    %v913 = vsel %vm724, %v902, 0
    %v915 = vsel %vm731, %v908, 0
    %v917 = vsel %vm731, %v906, 0
    %919 = vmatprep.subr.mxu0 %v917
    %920 = vmatpush1.msra.mxu0 %v915
    %921 = vmatprep.subr.mxu0 0.0
    %922 = vmatpush1.msra.mxu0 0.0
    %923 = vmatprep.subr.mxu0 0.0
    %924 = vmatpush1.msra.mxu0 0.0
    %925 = vmatprep.subr.mxu0 0.0
    %926 = vmatpush1.msra.mxu0 0.0
    %927 = vmatprep.subr.mxu0 0.0
    %928 = vmatpush1.msra.mxu0 0.0
    %929 = vmatprep.subr.mxu0 0.0
    %930 = vmatpush1.msra.mxu0 0.0
    %931 = vmatprep.subr.mxu0 0.0
    %932 = vmatpush1.msra.mxu0 0.0
    %933 = vmatprep.subr.mxu0 0.0
    %934 = vmatpush1.msra.mxu0 0.0
    %935 = vmatprep.subr.mxu0 0.0
    %936 = vmatpush1.msra.mxu0 0.0
    %937 = vmatprep.subr.mxu0 0.0
    %938 = vmatpush1.msra.mxu0 0.0
    %939 = vmatprep.subr.mxu0 0.0
    %940 = vmatpush1.msra.mxu0 0.0
    %941 = vmatprep.subr.mxu0 0.0
    %942 = vmatpush1.msra.mxu0 0.0
    %943 = vmatprep.subr.mxu0 0.0
    %944 = vmatpush1.msra.mxu0 0.0
    %945 = vmatprep.subr.mxu0 0.0
    %946 = vmatpush1.msra.mxu0 0.0
    %947 = vmatprep.subr.mxu0 0.0
    %948 = vmatpush1.msra.mxu0 0.0
    %949 = vmatprep.subr.mxu0 0.0
    %950 = vmatpush1.msra.mxu0 0.0
    %951 = vmatprep.subr.mxu0 0.0
    %952 = vmatpush1.msra.mxu0 0.0
    %953 = vmatprep.subr.mxu0 0.0
    %954 = vmatpush1.msra.mxu0 0.0
    %955 = vmatprep.subr.mxu0 0.0
    %956 = vmatpush1.msra.mxu0 0.0
    %957 = vmatprep.subr.mxu0 0.0
    %958 = vmatpush1.msra.mxu0 0.0
    %959 = vmatprep.subr.mxu0 0.0
    %960 = vmatpush1.msra.mxu0 0.0
    %961 = vmatprep.subr.mxu0 0.0
    %962 = vmatpush1.msra.mxu0 0.0
    %963 = vmatprep.subr.mxu0 0.0
    %964 = vmatpush1.msra.mxu0 0.0
    %965 = vmatprep.subr.mxu0 0.0
    %966 = vmatpush1.msra.mxu0 0.0
    %967 = vmatprep.subr.mxu0 0.0
    %968 = vmatpush1.msra.mxu0 0.0
    %969 = vmatprep.subr.mxu0 0.0
    %970 = vmatpush1.msra.mxu0 0.0
    %971 = vmatprep.subr.mxu0 0.0
    %972 = vmatpush1.msra.mxu0 0.0
    %973 = vmatprep.subr.mxu0 0.0
    %974 = vmatpush1.msra.mxu0 0.0
    %975 = vmatprep.subr.mxu0 0.0
    %976 = vmatpush1.msra.mxu0 0.0
    %977 = vmatprep.subr.mxu0 0.0
    %978 = vmatpush1.msra.mxu0 0.0
    %979 = vmatprep.subr.mxu0 0.0
    %980 = vmatpush1.msra.mxu0 0.0
    %981 = vmatprep.subr.mxu0 0.0
    %982 = vmatpush1.msra.mxu0 0.0
    %983 = vmatprep.mubr.f32.mxu0 0.0
    %984 = vmatmul.mubr.f32.gmra.mrb[0].mxu0 %v910
    %v985 = vpop.f32.mrb[0].mxu0
    %v986 = vadd.f32 0.0, %v985
    %v987 = vpop.f32.mrb[0].mxu0
    %v988 = vadd.f32 0.0, %v987
    %989 = vmatprep.mubr.f32.mxu0 0.0
    %990 = vmatmul.mubr.f32.gmra.mrb[0].mxu0 %v913
    %v991 = vpop.f32.mrb[0].mxu0
    %v992 = vadd.f32 0.0, %v991
    %v993 = vpop.f32.mrb[0].mxu0
    %v994 = vadd.f32 0.0, %v993
    %995 = vdwg.mxu0
    %v996 = vadd.f32 %v890, %v986
    %v997 = vadd.f32 %v892, %v988
    %v998 = vadd.f32 %v896, %v992
    %v999 = vadd.f32 %v898, %v994
    %s1000 = scalar_lea.vmem %s3, 48
    %v1001 = vld [vmem:[%s1000] sm:$0xff]
    %v1002 = vld [vmem:[%s1000 + $0x8] sm:$0xff]
    %1003 = vrot.lane.b32.xlu0 %v708, 125
    %v1004 = vpop.permute.xlu0 %1003
    %1005 = vrot.lane.b32.xlu0 %v709, 125
    %v1006 = vpop.permute.xlu0 %1005
    %vm1007 = vcmask 1022976
    %v1008 = vsel %vm1007, %v1004, %v1006
    %v1010 = vsel %vm724, %v1001, 0
    %v1013 = vsel %vm724, %v1002, 0
    %v1015 = vsel %vm731, %v1008, 0
    %v1017 = vsel %vm731, %v1006, 0
    %1019 = vmatprep.subr.mxu0 %v1017
    %1020 = vmatpush1.msra.mxu0 %v1015
    %1021 = vmatprep.subr.mxu0 0.0
    %1022 = vmatpush1.msra.mxu0 0.0
    %1023 = vmatprep.subr.mxu0 0.0
    %1024 = vmatpush1.msra.mxu0 0.0
    %1025 = vmatprep.subr.mxu0 0.0
    %1026 = vmatpush1.msra.mxu0 0.0
    %1027 = vmatprep.subr.mxu0 0.0
    %1028 = vmatpush1.msra.mxu0 0.0
    %1029 = vmatprep.subr.mxu0 0.0
    %1030 = vmatpush1.msra.mxu0 0.0
    %1031 = vmatprep.subr.mxu0 0.0
    %1032 = vmatpush1.msra.mxu0 0.0
    %1033 = vmatprep.subr.mxu0 0.0
    %1034 = vmatpush1.msra.mxu0 0.0
    %1035 = vmatprep.subr.mxu0 0.0
    %1036 = vmatpush1.msra.mxu0 0.0
    %1037 = vmatprep.subr.mxu0 0.0
    %1038 = vmatpush1.msra.mxu0 0.0
    %1039 = vmatprep.subr.mxu0 0.0
    %1040 = vmatpush1.msra.mxu0 0.0
    %1041 = vmatprep.subr.mxu0 0.0
    %1042 = vmatpush1.msra.mxu0 0.0
    %1043 = vmatprep.subr.mxu0 0.0
    %1044 = vmatpush1.msra.mxu0 0.0
    %1045 = vmatprep.subr.mxu0 0.0
    %1046 = vmatpush1.msra.mxu0 0.0
    %1047 = vmatprep.subr.mxu0 0.0
    %1048 = vmatpush1.msra.mxu0 0.0
    %1049 = vmatprep.subr.mxu0 0.0
    %1050 = vmatpush1.msra.mxu0 0.0
    %1051 = vmatprep.subr.mxu0 0.0
    %1052 = vmatpush1.msra.mxu0 0.0
    %1053 = vmatprep.subr.mxu0 0.0
    %1054 = vmatpush1.msra.mxu0 0.0
    %1055 = vmatprep.subr.mxu0 0.0
    %1056 = vmatpush1.msra.mxu0 0.0
    %1057 = vmatprep.subr.mxu0 0.0
    %1058 = vmatpush1.msra.mxu0 0.0
    %1059 = vmatprep.subr.mxu0 0.0
    %1060 = vmatpush1.msra.mxu0 0.0
    %1061 = vmatprep.subr.mxu0 0.0
    %1062 = vmatpush1.msra.mxu0 0.0
    %1063 = vmatprep.subr.mxu0 0.0
    %1064 = vmatpush1.msra.mxu0 0.0
    %1065 = vmatprep.subr.mxu0 0.0
    %1066 = vmatpush1.msra.mxu0 0.0
    %1067 = vmatprep.subr.mxu0 0.0
    %1068 = vmatpush1.msra.mxu0 0.0
    %1069 = vmatprep.subr.mxu0 0.0
    %1070 = vmatpush1.msra.mxu0 0.0
    %1071 = vmatprep.subr.mxu0 0.0
    %1072 = vmatpush1.msra.mxu0 0.0
    %1073 = vmatprep.subr.mxu0 0.0
    %1074 = vmatpush1.msra.mxu0 0.0
    %1075 = vmatprep.subr.mxu0 0.0
    %1076 = vmatpush1.msra.mxu0 0.0
    %1077 = vmatprep.subr.mxu0 0.0
    %1078 = vmatpush1.msra.mxu0 0.0
    %1079 = vmatprep.subr.mxu0 0.0
    %1080 = vmatpush1.msra.mxu0 0.0
    %1081 = vmatprep.subr.mxu0 0.0
    %1082 = vmatpush1.msra.mxu0 0.0
    %1083 = vmatprep.mubr.f32.mxu0 0.0
    %1084 = vmatmul.mubr.f32.gmra.mrb[0].mxu0 %v1010
    %v1085 = vpop.f32.mrb[0].mxu0
    %v1086 = vadd.f32 0.0, %v1085
    %v1087 = vpop.f32.mrb[0].mxu0
    %v1088 = vadd.f32 0.0, %v1087
    %1089 = vmatprep.mubr.f32.mxu0 0.0
    %1090 = vmatmul.mubr.f32.gmra.mrb[0].mxu0 %v1013
    %v1091 = vpop.f32.mrb[0].mxu0
    %v1092 = vadd.f32 0.0, %v1091
    %v1093 = vpop.f32.mrb[0].mxu0
    %v1094 = vadd.f32 0.0, %v1093
    %1095 = vdwg.mxu0
    %v1096 = vadd.f32 %v996, %v1086
    %v1097 = vadd.f32 %v997, %v1088
    %v1098 = vadd.f32 %v998, %v1092
    %v1099 = vadd.f32 %v999, %v1094
    %s1100 = scalar_lea.vmem %s3, 64
    %v1101 = vld [vmem:[%s1100] sm:$0xff]
    %v1102 = vld [vmem:[%s1100 + $0x8] sm:$0xff]
    %1103 = vrot.lane.b32.xlu0 %v708, 124
    %v1104 = vpop.permute.xlu0 %1103
    %1105 = vrot.lane.b32.xlu0 %v709, 124
    %v1106 = vpop.permute.xlu0 %1105
    %vm1107 = vcmask 1014784
    %v1108 = vsel %vm1107, %v1104, %v1106
    %v1110 = vsel %vm724, %v1101, 0
    %v1113 = vsel %vm724, %v1102, 0
    %v1115 = vsel %vm731, %v1108, 0
    %v1117 = vsel %vm731, %v1106, 0
    %1119 = vmatprep.subr.mxu0 %v1117
    %1120 = vmatpush1.msra.mxu0 %v1115
    %1121 = vmatprep.subr.mxu0 0.0
    %1122 = vmatpush1.msra.mxu0 0.0
    %1123 = vmatprep.subr.mxu0 0.0
    %1124 = vmatpush1.msra.mxu0 0.0
    %1125 = vmatprep.subr.mxu0 0.0
    %1126 = vmatpush1.msra.mxu0 0.0
    %1127 = vmatprep.subr.mxu0 0.0
    %1128 = vmatpush1.msra.mxu0 0.0
    %1129 = vmatprep.subr.mxu0 0.0
    %1130 = vmatpush1.msra.mxu0 0.0
    %1131 = vmatprep.subr.mxu0 0.0
    %1132 = vmatpush1.msra.mxu0 0.0
    %1133 = vmatprep.subr.mxu0 0.0
    %1134 = vmatpush1.msra.mxu0 0.0
    %1135 = vmatprep.subr.mxu0 0.0
    %1136 = vmatpush1.msra.mxu0 0.0
    %1137 = vmatprep.subr.mxu0 0.0
    %1138 = vmatpush1.msra.mxu0 0.0
    %1139 = vmatprep.subr.mxu0 0.0
    %1140 = vmatpush1.msra.mxu0 0.0
    %1141 = vmatprep.subr.mxu0 0.0
    %1142 = vmatpush1.msra.mxu0 0.0
    %1143 = vmatprep.subr.mxu0 0.0
    %1144 = vmatpush1.msra.mxu0 0.0
    %1145 = vmatprep.subr.mxu0 0.0
    %1146 = vmatpush1.msra.mxu0 0.0
    %1147 = vmatprep.subr.mxu0 0.0
    %1148 = vmatpush1.msra.mxu0 0.0
    %1149 = vmatprep.subr.mxu0 0.0
    %1150 = vmatpush1.msra.mxu0 0.0
    %1151 = vmatprep.subr.mxu0 0.0
    %1152 = vmatpush1.msra.mxu0 0.0
    %1153 = vmatprep.subr.mxu0 0.0
    %1154 = vmatpush1.msra.mxu0 0.0
    %1155 = vmatprep.subr.mxu0 0.0
    %1156 = vmatpush1.msra.mxu0 0.0
    %1157 = vmatprep.subr.mxu0 0.0
    %1158 = vmatpush1.msra.mxu0 0.0
    %1159 = vmatprep.subr.mxu0 0.0
    %1160 = vmatpush1.msra.mxu0 0.0
    %1161 = vmatprep.subr.mxu0 0.0
    %1162 = vmatpush1.msra.mxu0 0.0
    %1163 = vmatprep.subr.mxu0 0.0
    %1164 = vmatpush1.msra.mxu0 0.0
    %1165 = vmatprep.subr.mxu0 0.0
    %1166 = vmatpush1.msra.mxu0 0.0
    %1167 = vmatprep.subr.mxu0 0.0
    %1168 = vmatpush1.msra.mxu0 0.0
    %1169 = vmatprep.subr.mxu0 0.0
    %1170 = vmatpush1.msra.mxu0 0.0
    %1171 = vmatprep.subr.mxu0 0.0
    %1172 = vmatpush1.msra.mxu0 0.0
    %1173 = vmatprep.subr.mxu0 0.0
    %1174 = vmatpush1.msra.mxu0 0.0
    %1175 = vmatprep.subr.mxu0 0.0
    %1176 = vmatpush1.msra.mxu0 0.0
    %1177 = vmatprep.subr.mxu0 0.0
    %1178 = vmatpush1.msra.mxu0 0.0
    %1179 = vmatprep.subr.mxu0 0.0
    %1180 = vmatpush1.msra.mxu0 0.0
    %1181 = vmatprep.subr.mxu0 0.0
    %1182 = vmatpush1.msra.mxu0 0.0
    %1183 = vmatprep.mubr.f32.mxu0 0.0
    %1184 = vmatmul.mubr.f32.gmra.mrb[0].mxu0 %v1110
    %v1185 = vpop.f32.mrb[0].mxu0
    %v1186 = vadd.f32 0.0, %v1185
    %v1187 = vpop.f32.mrb[0].mxu0
    %v1188 = vadd.f32 0.0, %v1187
    %1189 = vmatprep.mubr.f32.mxu0 0.0
    %1190 = vmatmul.mubr.f32.gmra.mrb[0].mxu0 %v1113
    %v1191 = vpop.f32.mrb[0].mxu0
    %v1192 = vadd.f32 0.0, %v1191
    %v1193 = vpop.f32.mrb[0].mxu0
    %v1194 = vadd.f32 0.0, %v1193
    %1195 = vdwg.mxu0
    %v1196 = vadd.f32 %v1096, %v1186
    %v1197 = vadd.f32 %v1097, %v1188
    %v1198 = vadd.f32 %v1098, %v1192
    %v1199 = vadd.f32 %v1099, %v1194
    %s1200 = scalar_lea.vmem %s3, 80
    %v1201 = vld [vmem:[%s1200] sm:$0xff]
    %v1202 = vld [vmem:[%s1200 + $0x8] sm:$0xff]
    %1203 = vrot.lane.b32.xlu0 %v708, 116
    %v1204 = vpop.permute.xlu0 %1203
    %1205 = vrot.lane.b32.xlu0 %v709, 116
    %v1206 = vpop.permute.xlu0 %1205
    %vm1207 = vcmask 949248
    %v1208 = vsel %vm1207, %v1204, %v1206
    %v1210 = vsel %vm724, %v1201, 0
    %v1213 = vsel %vm724, %v1202, 0
    %v1215 = vsel %vm731, %v1208, 0
    %v1217 = vsel %vm731, %v1206, 0
    %1219 = vmatprep.subr.mxu0 %v1217
    %1220 = vmatpush1.msra.mxu0 %v1215
    %1221 = vmatprep.subr.mxu0 0.0
    %1222 = vmatpush1.msra.mxu0 0.0
    %1223 = vmatprep.subr.mxu0 0.0
    %1224 = vmatpush1.msra.mxu0 0.0
    %1225 = vmatprep.subr.mxu0 0.0
    %1226 = vmatpush1.msra.mxu0 0.0
    %1227 = vmatprep.subr.mxu0 0.0
    %1228 = vmatpush1.msra.mxu0 0.0
    %1229 = vmatprep.subr.mxu0 0.0
    %1230 = vmatpush1.msra.mxu0 0.0
    %1231 = vmatprep.subr.mxu0 0.0
    %1232 = vmatpush1.msra.mxu0 0.0
    %1233 = vmatprep.subr.mxu0 0.0
    %1234 = vmatpush1.msra.mxu0 0.0
    %1235 = vmatprep.subr.mxu0 0.0
    %1236 = vmatpush1.msra.mxu0 0.0
    %1237 = vmatprep.subr.mxu0 0.0
    %1238 = vmatpush1.msra.mxu0 0.0
    %1239 = vmatprep.subr.mxu0 0.0
    %1240 = vmatpush1.msra.mxu0 0.0
    %1241 = vmatprep.subr.mxu0 0.0
    %1242 = vmatpush1.msra.mxu0 0.0
    %1243 = vmatprep.subr.mxu0 0.0
    %1244 = vmatpush1.msra.mxu0 0.0
    %1245 = vmatprep.subr.mxu0 0.0
    %1246 = vmatpush1.msra.mxu0 0.0
    %1247 = vmatprep.subr.mxu0 0.0
    %1248 = vmatpush1.msra.mxu0 0.0
    %1249 = vmatprep.subr.mxu0 0.0
    %1250 = vmatpush1.msra.mxu0 0.0
    %1251 = vmatprep.subr.mxu0 0.0
    %1252 = vmatpush1.msra.mxu0 0.0
    %1253 = vmatprep.subr.mxu0 0.0
    %1254 = vmatpush1.msra.mxu0 0.0
    %1255 = vmatprep.subr.mxu0 0.0
    %1256 = vmatpush1.msra.mxu0 0.0
    %1257 = vmatprep.subr.mxu0 0.0
    %1258 = vmatpush1.msra.mxu0 0.0
    %1259 = vmatprep.subr.mxu0 0.0
    %1260 = vmatpush1.msra.mxu0 0.0
    %1261 = vmatprep.subr.mxu0 0.0
    %1262 = vmatpush1.msra.mxu0 0.0
    %1263 = vmatprep.subr.mxu0 0.0
    %1264 = vmatpush1.msra.mxu0 0.0
    %1265 = vmatprep.subr.mxu0 0.0
    %1266 = vmatpush1.msra.mxu0 0.0
    %1267 = vmatprep.subr.mxu0 0.0
    %1268 = vmatpush1.msra.mxu0 0.0
    %1269 = vmatprep.subr.mxu0 0.0
    %1270 = vmatpush1.msra.mxu0 0.0
    %1271 = vmatprep.subr.mxu0 0.0
    %1272 = vmatpush1.msra.mxu0 0.0
    %1273 = vmatprep.subr.mxu0 0.0
    %1274 = vmatpush1.msra.mxu0 0.0
    %1275 = vmatprep.subr.mxu0 0.0
    %1276 = vmatpush1.msra.mxu0 0.0
    %1277 = vmatprep.subr.mxu0 0.0
    %1278 = vmatpush1.msra.mxu0 0.0
    %1279 = vmatprep.subr.mxu0 0.0
    %1280 = vmatpush1.msra.mxu0 0.0
    %1281 = vmatprep.subr.mxu0 0.0
    %1282 = vmatpush1.msra.mxu0 0.0
    %1283 = vmatprep.mubr.f32.mxu0 0.0
    %1284 = vmatmul.mubr.f32.gmra.mrb[0].mxu0 %v1210
    %v1285 = vpop.f32.mrb[0].mxu0
    %v1286 = vadd.f32 0.0, %v1285
    %v1287 = vpop.f32.mrb[0].mxu0
    %v1288 = vadd.f32 0.0, %v1287
    %1289 = vmatprep.mubr.f32.mxu0 0.0
    %1290 = vmatmul.mubr.f32.gmra.mrb[0].mxu0 %v1213
    %v1291 = vpop.f32.mrb[0].mxu0
    %v1292 = vadd.f32 0.0, %v1291
    %v1293 = vpop.f32.mrb[0].mxu0
    %v1294 = vadd.f32 0.0, %v1293
    %1295 = vdwg.mxu0
    %v1296 = vadd.f32 %v1196, %v1286
    %v1297 = vadd.f32 %v1197, %v1288
    %v1298 = vadd.f32 %v1198, %v1292
    %v1299 = vadd.f32 %v1199, %v1294
    %s1300 = scalar_lea.vmem %s3, 96
    %v1301 = vld [vmem:[%s1300] sm:$0xff]
    %v1302 = vld [vmem:[%s1300 + $0x8] sm:$0xff]
    %1303 = vrot.lane.b32.xlu0 %v708, 115
    %v1304 = vpop.permute.xlu0 %1303
    %1305 = vrot.lane.b32.xlu0 %v709, 115
    %v1306 = vpop.permute.xlu0 %1305
    %vm1307 = vcmask 941056
    %v1308 = vsel %vm1307, %v1304, %v1306
    %v1310 = vsel %vm724, %v1301, 0
    %v1313 = vsel %vm724, %v1302, 0
    %v1315 = vsel %vm731, %v1308, 0
    %v1317 = vsel %vm731, %v1306, 0
    %1319 = vmatprep.subr.mxu0 %v1317
    %1320 = vmatpush1.msra.mxu0 %v1315
    %1321 = vmatprep.subr.mxu0 0.0
    %1322 = vmatpush1.msra.mxu0 0.0
    %1323 = vmatprep.subr.mxu0 0.0
    %1324 = vmatpush1.msra.mxu0 0.0
    %1325 = vmatprep.subr.mxu0 0.0
    %1326 = vmatpush1.msra.mxu0 0.0
    %1327 = vmatprep.subr.mxu0 0.0
    %1328 = vmatpush1.msra.mxu0 0.0
    %1329 = vmatprep.subr.mxu0 0.0
    %1330 = vmatpush1.msra.mxu0 0.0
    %1331 = vmatprep.subr.mxu0 0.0
    %1332 = vmatpush1.msra.mxu0 0.0
    %1333 = vmatprep.subr.mxu0 0.0
    %1334 = vmatpush1.msra.mxu0 0.0
    %1335 = vmatprep.subr.mxu0 0.0
    %1336 = vmatpush1.msra.mxu0 0.0
    %1337 = vmatprep.subr.mxu0 0.0
    %1338 = vmatpush1.msra.mxu0 0.0
    %1339 = vmatprep.subr.mxu0 0.0
    %1340 = vmatpush1.msra.mxu0 0.0
    %1341 = vmatprep.subr.mxu0 0.0
    %1342 = vmatpush1.msra.mxu0 0.0
    %1343 = vmatprep.subr.mxu0 0.0
    %1344 = vmatpush1.msra.mxu0 0.0
    %1345 = vmatprep.subr.mxu0 0.0
    %1346 = vmatpush1.msra.mxu0 0.0
    %1347 = vmatprep.subr.mxu0 0.0
    %1348 = vmatpush1.msra.mxu0 0.0
    %1349 = vmatprep.subr.mxu0 0.0
    %1350 = vmatpush1.msra.mxu0 0.0
    %1351 = vmatprep.subr.mxu0 0.0
    %1352 = vmatpush1.msra.mxu0 0.0
    %1353 = vmatprep.subr.mxu0 0.0
    %1354 = vmatpush1.msra.mxu0 0.0
    %1355 = vmatprep.subr.mxu0 0.0
    %1356 = vmatpush1.msra.mxu0 0.0
    %1357 = vmatprep.subr.mxu0 0.0
    %1358 = vmatpush1.msra.mxu0 0.0
    %1359 = vmatprep.subr.mxu0 0.0
    %1360 = vmatpush1.msra.mxu0 0.0
    %1361 = vmatprep.subr.mxu0 0.0
    %1362 = vmatpush1.msra.mxu0 0.0
    %1363 = vmatprep.subr.mxu0 0.0
    %1364 = vmatpush1.msra.mxu0 0.0
    %1365 = vmatprep.subr.mxu0 0.0
    %1366 = vmatpush1.msra.mxu0 0.0
    %1367 = vmatprep.subr.mxu0 0.0
    %1368 = vmatpush1.msra.mxu0 0.0
    %1369 = vmatprep.subr.mxu0 0.0
    %1370 = vmatpush1.msra.mxu0 0.0
    %1371 = vmatprep.subr.mxu0 0.0
    %1372 = vmatpush1.msra.mxu0 0.0
    %1373 = vmatprep.subr.mxu0 0.0
    %1374 = vmatpush1.msra.mxu0 0.0
    %1375 = vmatprep.subr.mxu0 0.0
    %1376 = vmatpush1.msra.mxu0 0.0
    %1377 = vmatprep.subr.mxu0 0.0
    %1378 = vmatpush1.msra.mxu0 0.0
    %1379 = vmatprep.subr.mxu0 0.0
    %1380 = vmatpush1.msra.mxu0 0.0
    %1381 = vmatprep.subr.mxu0 0.0
    %1382 = vmatpush1.msra.mxu0 0.0
    %1383 = vmatprep.mubr.f32.mxu0 0.0
    %1384 = vmatmul.mubr.f32.gmra.mrb[0].mxu0 %v1310
    %v1385 = vpop.f32.mrb[0].mxu0
    %v1386 = vadd.f32 0.0, %v1385
    %v1387 = vpop.f32.mrb[0].mxu0
    %v1388 = vadd.f32 0.0, %v1387
    %1389 = vmatprep.mubr.f32.mxu0 0.0
    %1390 = vmatmul.mubr.f32.gmra.mrb[0].mxu0 %v1313
    %v1391 = vpop.f32.mrb[0].mxu0
    %v1392 = vadd.f32 0.0, %v1391
    %v1393 = vpop.f32.mrb[0].mxu0
    %v1394 = vadd.f32 0.0, %v1393
    %1395 = vdwg.mxu0
    %v1396 = vadd.f32 %v1296, %v1386
    %v1397 = vadd.f32 %v1297, %v1388
    %v1398 = vadd.f32 %v1298, %v1392
    %v1399 = vadd.f32 %v1299, %v1394
    %s1400 = scalar_lea.vmem %s3, 112
    %v1401 = vld [vmem:[%s1400] sm:$0xff]
    %v1402 = vld [vmem:[%s1400 + $0x8] sm:$0xff]
    %1403 = vrot.lane.b32.xlu0 %v708, 114
    %v1404 = vpop.permute.xlu0 %1403
    %1405 = vrot.lane.b32.xlu0 %v709, 114
    %v1406 = vpop.permute.xlu0 %1405
    %vm1407 = vcmask 932864
    %v1408 = vsel %vm1407, %v1404, %v1406
    %v1410 = vsel %vm724, %v1401, 0
    %v1413 = vsel %vm724, %v1402, 0
    %v1415 = vsel %vm731, %v1408, 0
    %v1417 = vsel %vm731, %v1406, 0
    %1419 = vmatprep.subr.mxu0 %v1417
    %1420 = vmatpush1.msra.mxu0 %v1415
    %1421 = vmatprep.subr.mxu0 0.0
    %1422 = vmatpush1.msra.mxu0 0.0
    %1423 = vmatprep.subr.mxu0 0.0
    %1424 = vmatpush1.msra.mxu0 0.0
    %1425 = vmatprep.subr.mxu0 0.0
    %1426 = vmatpush1.msra.mxu0 0.0
    %1427 = vmatprep.subr.mxu0 0.0
    %1428 = vmatpush1.msra.mxu0 0.0
    %1429 = vmatprep.subr.mxu0 0.0
    %1430 = vmatpush1.msra.mxu0 0.0
    %1431 = vmatprep.subr.mxu0 0.0
    %1432 = vmatpush1.msra.mxu0 0.0
    %1433 = vmatprep.subr.mxu0 0.0
    %1434 = vmatpush1.msra.mxu0 0.0
    %1435 = vmatprep.subr.mxu0 0.0
    %1436 = vmatpush1.msra.mxu0 0.0
    %1437 = vmatprep.subr.mxu0 0.0
    %1438 = vmatpush1.msra.mxu0 0.0
    %1439 = vmatprep.subr.mxu0 0.0
    %1440 = vmatpush1.msra.mxu0 0.0
    %1441 = vmatprep.subr.mxu0 0.0
    %1442 = vmatpush1.msra.mxu0 0.0
    %1443 = vmatprep.subr.mxu0 0.0
    %1444 = vmatpush1.msra.mxu0 0.0
    %1445 = vmatprep.subr.mxu0 0.0
    %1446 = vmatpush1.msra.mxu0 0.0
    %1447 = vmatprep.subr.mxu0 0.0
    %1448 = vmatpush1.msra.mxu0 0.0
    %1449 = vmatprep.subr.mxu0 0.0
    %1450 = vmatpush1.msra.mxu0 0.0
    %1451 = vmatprep.subr.mxu0 0.0
    %1452 = vmatpush1.msra.mxu0 0.0
    %1453 = vmatprep.subr.mxu0 0.0
    %1454 = vmatpush1.msra.mxu0 0.0
    %1455 = vmatprep.subr.mxu0 0.0
    %1456 = vmatpush1.msra.mxu0 0.0
    %1457 = vmatprep.subr.mxu0 0.0
    %1458 = vmatpush1.msra.mxu0 0.0
    %1459 = vmatprep.subr.mxu0 0.0
    %1460 = vmatpush1.msra.mxu0 0.0
    %1461 = vmatprep.subr.mxu0 0.0
    %1462 = vmatpush1.msra.mxu0 0.0
    %1463 = vmatprep.subr.mxu0 0.0
    %1464 = vmatpush1.msra.mxu0 0.0
    %1465 = vmatprep.subr.mxu0 0.0
    %1466 = vmatpush1.msra.mxu0 0.0
    %1467 = vmatprep.subr.mxu0 0.0
    %1468 = vmatpush1.msra.mxu0 0.0
    %1469 = vmatprep.subr.mxu0 0.0
    %1470 = vmatpush1.msra.mxu0 0.0
    %1471 = vmatprep.subr.mxu0 0.0
    %1472 = vmatpush1.msra.mxu0 0.0
    %1473 = vmatprep.subr.mxu0 0.0
    %1474 = vmatpush1.msra.mxu0 0.0
    %1475 = vmatprep.subr.mxu0 0.0
    %1476 = vmatpush1.msra.mxu0 0.0
    %1477 = vmatprep.subr.mxu0 0.0
    %1478 = vmatpush1.msra.mxu0 0.0
    %1479 = vmatprep.subr.mxu0 0.0
    %1480 = vmatpush1.msra.mxu0 0.0
    %1481 = vmatprep.subr.mxu0 0.0
    %1482 = vmatpush1.msra.mxu0 0.0
    %1483 = vmatprep.mubr.f32.mxu0 0.0
    %1484 = vmatmul.mubr.f32.gmra.mrb[0].mxu0 %v1410
    %v1485 = vpop.f32.mrb[0].mxu0
    %v1486 = vadd.f32 0.0, %v1485
    %v1487 = vpop.f32.mrb[0].mxu0
    %v1488 = vadd.f32 0.0, %v1487
    %1489 = vmatprep.mubr.f32.mxu0 0.0
    %1490 = vmatmul.mubr.f32.gmra.mrb[0].mxu0 %v1413
    %v1491 = vpop.f32.mrb[0].mxu0
    %v1492 = vadd.f32 0.0, %v1491
    %v1493 = vpop.f32.mrb[0].mxu0
    %v1494 = vadd.f32 0.0, %v1493
    %1495 = vdwg.mxu0
    %v1496 = vadd.f32 %v1396, %v1486
    %v1497 = vadd.f32 %v1397, %v1488
    %v1498 = vadd.f32 %v1398, %v1492
    %v1499 = vadd.f32 %v1399, %v1494
    %s1500 = scalar_lea.vmem %s3, 128
    %v1501 = vld [vmem:[%s1500] sm:$0xff]
    %v1502 = vld [vmem:[%s1500 + $0x8] sm:$0xff]
    %1503 = vrot.lane.b32.xlu0 %v708, 113
    %v1504 = vpop.permute.xlu0 %1503
    %1505 = vrot.lane.b32.xlu0 %v709, 113
    %v1506 = vpop.permute.xlu0 %1505
    %vm1507 = vcmask 924672
    %v1508 = vsel %vm1507, %v1504, %v1506
    %v1510 = vsel %vm724, %v1501, 0
    %v1513 = vsel %vm724, %v1502, 0
    %v1515 = vsel %vm731, %v1508, 0
    %v1517 = vsel %vm731, %v1506, 0
    %1519 = vmatprep.subr.mxu0 %v1517
    %1520 = vmatpush1.msra.mxu0 %v1515
    %1521 = vmatprep.subr.mxu0 0.0
    %1522 = vmatpush1.msra.mxu0 0.0
    %1523 = vmatprep.subr.mxu0 0.0
    %1524 = vmatpush1.msra.mxu0 0.0
    %1525 = vmatprep.subr.mxu0 0.0
    %1526 = vmatpush1.msra.mxu0 0.0
    %1527 = vmatprep.subr.mxu0 0.0
    %1528 = vmatpush1.msra.mxu0 0.0
    %1529 = vmatprep.subr.mxu0 0.0
    %1530 = vmatpush1.msra.mxu0 0.0
    %1531 = vmatprep.subr.mxu0 0.0
    %1532 = vmatpush1.msra.mxu0 0.0
    %1533 = vmatprep.subr.mxu0 0.0
    %1534 = vmatpush1.msra.mxu0 0.0
    %1535 = vmatprep.subr.mxu0 0.0
    %1536 = vmatpush1.msra.mxu0 0.0
    %1537 = vmatprep.subr.mxu0 0.0
    %1538 = vmatpush1.msra.mxu0 0.0
    %1539 = vmatprep.subr.mxu0 0.0
    %1540 = vmatpush1.msra.mxu0 0.0
    %1541 = vmatprep.subr.mxu0 0.0
    %1542 = vmatpush1.msra.mxu0 0.0
    %1543 = vmatprep.subr.mxu0 0.0
    %1544 = vmatpush1.msra.mxu0 0.0
    %1545 = vmatprep.subr.mxu0 0.0
    %1546 = vmatpush1.msra.mxu0 0.0
    %1547 = vmatprep.subr.mxu0 0.0
    %1548 = vmatpush1.msra.mxu0 0.0
    %1549 = vmatprep.subr.mxu0 0.0
    %1550 = vmatpush1.msra.mxu0 0.0
    %1551 = vmatprep.subr.mxu0 0.0
    %1552 = vmatpush1.msra.mxu0 0.0
    %1553 = vmatprep.subr.mxu0 0.0
    %1554 = vmatpush1.msra.mxu0 0.0
    %1555 = vmatprep.subr.mxu0 0.0
    %1556 = vmatpush1.msra.mxu0 0.0
    %1557 = vmatprep.subr.mxu0 0.0
    %1558 = vmatpush1.msra.mxu0 0.0
    %1559 = vmatprep.subr.mxu0 0.0
    %1560 = vmatpush1.msra.mxu0 0.0
    %1561 = vmatprep.subr.mxu0 0.0
    %1562 = vmatpush1.msra.mxu0 0.0
    %1563 = vmatprep.subr.mxu0 0.0
    %1564 = vmatpush1.msra.mxu0 0.0
    %1565 = vmatprep.subr.mxu0 0.0
    %1566 = vmatpush1.msra.mxu0 0.0
    %1567 = vmatprep.subr.mxu0 0.0
    %1568 = vmatpush1.msra.mxu0 0.0
    %1569 = vmatprep.subr.mxu0 0.0
    %1570 = vmatpush1.msra.mxu0 0.0
    %1571 = vmatprep.subr.mxu0 0.0
    %1572 = vmatpush1.msra.mxu0 0.0
    %1573 = vmatprep.subr.mxu0 0.0
    %1574 = vmatpush1.msra.mxu0 0.0
    %1575 = vmatprep.subr.mxu0 0.0
    %1576 = vmatpush1.msra.mxu0 0.0
    %1577 = vmatprep.subr.mxu0 0.0
    %1578 = vmatpush1.msra.mxu0 0.0
    %1579 = vmatprep.subr.mxu0 0.0
    %1580 = vmatpush1.msra.mxu0 0.0
    %1581 = vmatprep.subr.mxu0 0.0
    %1582 = vmatpush1.msra.mxu0 0.0
    %1583 = vmatprep.mubr.f32.mxu0 0.0
    %1584 = vmatmul.mubr.f32.gmra.mrb[0].mxu0 %v1510
    %v1585 = vpop.f32.mrb[0].mxu0
    %v1586 = vadd.f32 0.0, %v1585
    %v1587 = vpop.f32.mrb[0].mxu0
    %v1588 = vadd.f32 0.0, %v1587
    %1589 = vmatprep.mubr.f32.mxu0 0.0
    %1590 = vmatmul.mubr.f32.gmra.mrb[0].mxu0 %v1513
    %v1591 = vpop.f32.mrb[0].mxu0
    %v1592 = vadd.f32 0.0, %v1591
    %v1593 = vpop.f32.mrb[0].mxu0
    %v1594 = vadd.f32 0.0, %v1593
    %1595 = vdwg.mxu0
    %v1596 = vadd.f32 %v1496, %v1586
    %v1597 = vadd.f32 %v1497, %v1588
    %v1598 = vadd.f32 %v1498, %v1592
    %v1599 = vadd.f32 %v1499, %v1594
    %s1600 = scalar_lea.vmem %s3, 144
    %v1601 = vld [vmem:[%s1600] sm:$0xff]
    %v1602 = vld [vmem:[%s1600 + $0x8] sm:$0xff]
    %1603 = vrot.lane.b32.xlu0 %v708, 112
    %v1604 = vpop.permute.xlu0 %1603
    %1605 = vrot.lane.b32.xlu0 %v709, 112
    %v1606 = vpop.permute.xlu0 %1605
    %vm1607 = vcmask 916480
    %v1608 = vsel %vm1607, %v1604, %v1606
    %v1610 = vsel %vm724, %v1601, 0
    %v1613 = vsel %vm724, %v1602, 0
    %v1615 = vsel %vm731, %v1608, 0
    %v1617 = vsel %vm731, %v1606, 0
    %1619 = vmatprep.subr.mxu0 %v1617
    %1620 = vmatpush1.msra.mxu0 %v1615
    %1621 = vmatprep.subr.mxu0 0.0
    %1622 = vmatpush1.msra.mxu0 0.0
    %1623 = vmatprep.subr.mxu0 0.0
    %1624 = vmatpush1.msra.mxu0 0.0
    %1625 = vmatprep.subr.mxu0 0.0
    %1626 = vmatpush1.msra.mxu0 0.0
    %1627 = vmatprep.subr.mxu0 0.0
    %1628 = vmatpush1.msra.mxu0 0.0
    %1629 = vmatprep.subr.mxu0 0.0
    %1630 = vmatpush1.msra.mxu0 0.0
    %1631 = vmatprep.subr.mxu0 0.0
    %1632 = vmatpush1.msra.mxu0 0.0
    %1633 = vmatprep.subr.mxu0 0.0
    %1634 = vmatpush1.msra.mxu0 0.0
    %1635 = vmatprep.subr.mxu0 0.0
    %1636 = vmatpush1.msra.mxu0 0.0
    %1637 = vmatprep.subr.mxu0 0.0
    %1638 = vmatpush1.msra.mxu0 0.0
    %1639 = vmatprep.subr.mxu0 0.0
    %1640 = vmatpush1.msra.mxu0 0.0
    %1641 = vmatprep.subr.mxu0 0.0
    %1642 = vmatpush1.msra.mxu0 0.0
    %1643 = vmatprep.subr.mxu0 0.0
    %1644 = vmatpush1.msra.mxu0 0.0
    %1645 = vmatprep.subr.mxu0 0.0
    %1646 = vmatpush1.msra.mxu0 0.0
    %1647 = vmatprep.subr.mxu0 0.0
    %1648 = vmatpush1.msra.mxu0 0.0
    %1649 = vmatprep.subr.mxu0 0.0
    %1650 = vmatpush1.msra.mxu0 0.0
    %1651 = vmatprep.subr.mxu0 0.0
    %1652 = vmatpush1.msra.mxu0 0.0
    %1653 = vmatprep.subr.mxu0 0.0
    %1654 = vmatpush1.msra.mxu0 0.0
    %1655 = vmatprep.subr.mxu0 0.0
    %1656 = vmatpush1.msra.mxu0 0.0
    %1657 = vmatprep.subr.mxu0 0.0
    %1658 = vmatpush1.msra.mxu0 0.0
    %1659 = vmatprep.subr.mxu0 0.0
    %1660 = vmatpush1.msra.mxu0 0.0
    %1661 = vmatprep.subr.mxu0 0.0
    %1662 = vmatpush1.msra.mxu0 0.0
    %1663 = vmatprep.subr.mxu0 0.0
    %1664 = vmatpush1.msra.mxu0 0.0
    %1665 = vmatprep.subr.mxu0 0.0
    %1666 = vmatpush1.msra.mxu0 0.0
    %1667 = vmatprep.subr.mxu0 0.0
    %1668 = vmatpush1.msra.mxu0 0.0
    %1669 = vmatprep.subr.mxu0 0.0
    %1670 = vmatpush1.msra.mxu0 0.0
    %1671 = vmatprep.subr.mxu0 0.0
    %1672 = vmatpush1.msra.mxu0 0.0
    %1673 = vmatprep.subr.mxu0 0.0
    %1674 = vmatpush1.msra.mxu0 0.0
    %1675 = vmatprep.subr.mxu0 0.0
    %1676 = vmatpush1.msra.mxu0 0.0
    %1677 = vmatprep.subr.mxu0 0.0
    %1678 = vmatpush1.msra.mxu0 0.0
    %1679 = vmatprep.subr.mxu0 0.0
    %1680 = vmatpush1.msra.mxu0 0.0
    %1681 = vmatprep.subr.mxu0 0.0
    %1682 = vmatpush1.msra.mxu0 0.0
    %1683 = vmatprep.mubr.f32.mxu0 0.0
    %1684 = vmatmul.mubr.f32.gmra.mrb[0].mxu0 %v1610
    %v1685 = vpop.f32.mrb[0].mxu0
    %v1686 = vadd.f32 0.0, %v1685
    %v1687 = vpop.f32.mrb[0].mxu0
    %v1688 = vadd.f32 0.0, %v1687
    %1689 = vmatprep.mubr.f32.mxu0 0.0
    %1690 = vmatmul.mubr.f32.gmra.mrb[0].mxu0 %v1613
    %v1691 = vpop.f32.mrb[0].mxu0
    %v1692 = vadd.f32 0.0, %v1691
    %v1693 = vpop.f32.mrb[0].mxu0
    %v1694 = vadd.f32 0.0, %v1693
    %1695 = vdwg.mxu0
    %v1696 = vadd.f32 %v1596, %v1686
    %v1697 = vadd.f32 %v1597, %v1688
    %v1698 = vadd.f32 %v1598, %v1692
    %v1699 = vadd.f32 %v1599, %v1694
    %s1700 = scalar_lea.vmem %s3, 160
    %v1701 = vld [vmem:[%s1700] sm:$0xff]
    %v1702 = vld [vmem:[%s1700 + $0x8] sm:$0xff]
    %1704 = vrot.lane.b32.xlu0 %v708, 104
    %v1705 = vpop.permute.xlu0 %1704
    %1706 = vrot.lane.b32.xlu0 %v709, 104
    %v1707 = vpop.permute.xlu0 %1706
    %1708 = vrot.lane.b32.xlu0 %v710, 104
    %v1709 = vpop.permute.xlu0 %1708
    %vm1710 = vcmask 850944
    %v1711 = vsel %vm1710, %v1705, %v1707
    %v1712 = vsel %vm1710, %v1707, %v1709
    %v1714 = vsel %vm724, %v1701, 0
    %v1717 = vsel %vm724, %v1702, 0
    %v1719 = vsel %vm731, %v1711, 0
    %v1721 = vsel %vm731, %v1712, 0
    %1723 = vmatprep.subr.mxu0 %v1721
    %1724 = vmatpush1.msra.mxu0 %v1719
    %1725 = vmatprep.subr.mxu0 0.0
    %1726 = vmatpush1.msra.mxu0 0.0
    %1727 = vmatprep.subr.mxu0 0.0
    %1728 = vmatpush1.msra.mxu0 0.0
    %1729 = vmatprep.subr.mxu0 0.0
    %1730 = vmatpush1.msra.mxu0 0.0
    %1731 = vmatprep.subr.mxu0 0.0
    %1732 = vmatpush1.msra.mxu0 0.0
    %1733 = vmatprep.subr.mxu0 0.0
    %1734 = vmatpush1.msra.mxu0 0.0
    %1735 = vmatprep.subr.mxu0 0.0
    %1736 = vmatpush1.msra.mxu0 0.0
    %1737 = vmatprep.subr.mxu0 0.0
    %1738 = vmatpush1.msra.mxu0 0.0
    %1739 = vmatprep.subr.mxu0 0.0
    %1740 = vmatpush1.msra.mxu0 0.0
    %1741 = vmatprep.subr.mxu0 0.0
    %1742 = vmatpush1.msra.mxu0 0.0
    %1743 = vmatprep.subr.mxu0 0.0
    %1744 = vmatpush1.msra.mxu0 0.0
    %1745 = vmatprep.subr.mxu0 0.0
    %1746 = vmatpush1.msra.mxu0 0.0
    %1747 = vmatprep.subr.mxu0 0.0
    %1748 = vmatpush1.msra.mxu0 0.0
    %1749 = vmatprep.subr.mxu0 0.0
    %1750 = vmatpush1.msra.mxu0 0.0
    %1751 = vmatprep.subr.mxu0 0.0
    %1752 = vmatpush1.msra.mxu0 0.0
    %1753 = vmatprep.subr.mxu0 0.0
    %1754 = vmatpush1.msra.mxu0 0.0
    %1755 = vmatprep.subr.mxu0 0.0
    %1756 = vmatpush1.msra.mxu0 0.0
    %1757 = vmatprep.subr.mxu0 0.0
    %1758 = vmatpush1.msra.mxu0 0.0
    %1759 = vmatprep.subr.mxu0 0.0
    %1760 = vmatpush1.msra.mxu0 0.0
    %1761 = vmatprep.subr.mxu0 0.0
    %1762 = vmatpush1.msra.mxu0 0.0
    %1763 = vmatprep.subr.mxu0 0.0
    %1764 = vmatpush1.msra.mxu0 0.0
    %1765 = vmatprep.subr.mxu0 0.0
    %1766 = vmatpush1.msra.mxu0 0.0
    %1767 = vmatprep.subr.mxu0 0.0
    %1768 = vmatpush1.msra.mxu0 0.0
    %1769 = vmatprep.subr.mxu0 0.0
    %1770 = vmatpush1.msra.mxu0 0.0
    %1771 = vmatprep.subr.mxu0 0.0
    %1772 = vmatpush1.msra.mxu0 0.0
    %1773 = vmatprep.subr.mxu0 0.0
    %1774 = vmatpush1.msra.mxu0 0.0
    %1775 = vmatprep.subr.mxu0 0.0
    %1776 = vmatpush1.msra.mxu0 0.0
    %1777 = vmatprep.subr.mxu0 0.0
    %1778 = vmatpush1.msra.mxu0 0.0
    %1779 = vmatprep.subr.mxu0 0.0
    %1780 = vmatpush1.msra.mxu0 0.0
    %1781 = vmatprep.subr.mxu0 0.0
    %1782 = vmatpush1.msra.mxu0 0.0
    %1783 = vmatprep.subr.mxu0 0.0
    %1784 = vmatpush1.msra.mxu0 0.0
    %1785 = vmatprep.subr.mxu0 0.0
    %1786 = vmatpush1.msra.mxu0 0.0
    %1787 = vmatprep.mubr.f32.mxu0 0.0
    %1788 = vmatmul.mubr.f32.gmra.mrb[0].mxu0 %v1714
    %v1789 = vpop.f32.mrb[0].mxu0
    %v1790 = vadd.f32 0.0, %v1789
    %v1791 = vpop.f32.mrb[0].mxu0
    %v1792 = vadd.f32 0.0, %v1791
    %1793 = vmatprep.mubr.f32.mxu0 0.0
    %1794 = vmatmul.mubr.f32.gmra.mrb[0].mxu0 %v1717
    %v1795 = vpop.f32.mrb[0].mxu0
    %v1796 = vadd.f32 0.0, %v1795
    %v1797 = vpop.f32.mrb[0].mxu0
    %v1798 = vadd.f32 0.0, %v1797
    %1799 = vdwg.mxu0
    %v1800 = vadd.f32 %v1696, %v1790
    %v1801 = vadd.f32 %v1697, %v1792
    %v1802 = vadd.f32 %v1698, %v1796
    %v1803 = vadd.f32 %v1699, %v1798
    %s1804 = scalar_lea.vmem %s3, 176
    %v1805 = vld [vmem:[%s1804] sm:$0xff]
    %v1806 = vld [vmem:[%s1804 + $0x8] sm:$0xff]
    %1807 = vrot.lane.b32.xlu0 %v708, 103
    %v1808 = vpop.permute.xlu0 %1807
    %1809 = vrot.lane.b32.xlu0 %v709, 103
    %v1810 = vpop.permute.xlu0 %1809
    %1811 = vrot.lane.b32.xlu0 %v710, 103
    %v1812 = vpop.permute.xlu0 %1811
    %vm1813 = vcmask 842752
    %v1814 = vsel %vm1813, %v1808, %v1810
    %v1815 = vsel %vm1813, %v1810, %v1812
    %v1817 = vsel %vm724, %v1805, 0
    %v1820 = vsel %vm724, %v1806, 0
    %v1822 = vsel %vm731, %v1814, 0
    %v1824 = vsel %vm731, %v1815, 0
    %1826 = vmatprep.subr.mxu0 %v1824
    %1827 = vmatpush1.msra.mxu0 %v1822
    %1828 = vmatprep.subr.mxu0 0.0
    %1829 = vmatpush1.msra.mxu0 0.0
    %1830 = vmatprep.subr.mxu0 0.0
    %1831 = vmatpush1.msra.mxu0 0.0
    %1832 = vmatprep.subr.mxu0 0.0
    %1833 = vmatpush1.msra.mxu0 0.0
    %1834 = vmatprep.subr.mxu0 0.0
    %1835 = vmatpush1.msra.mxu0 0.0
    %1836 = vmatprep.subr.mxu0 0.0
    %1837 = vmatpush1.msra.mxu0 0.0
    %1838 = vmatprep.subr.mxu0 0.0
    %1839 = vmatpush1.msra.mxu0 0.0
    %1840 = vmatprep.subr.mxu0 0.0
    %1841 = vmatpush1.msra.mxu0 0.0
    %1842 = vmatprep.subr.mxu0 0.0
    %1843 = vmatpush1.msra.mxu0 0.0
    %1844 = vmatprep.subr.mxu0 0.0
    %1845 = vmatpush1.msra.mxu0 0.0
    %1846 = vmatprep.subr.mxu0 0.0
    %1847 = vmatpush1.msra.mxu0 0.0
    %1848 = vmatprep.subr.mxu0 0.0
    %1849 = vmatpush1.msra.mxu0 0.0
    %1850 = vmatprep.subr.mxu0 0.0
    %1851 = vmatpush1.msra.mxu0 0.0
    %1852 = vmatprep.subr.mxu0 0.0
    %1853 = vmatpush1.msra.mxu0 0.0
    %1854 = vmatprep.subr.mxu0 0.0
    %1855 = vmatpush1.msra.mxu0 0.0
    %1856 = vmatprep.subr.mxu0 0.0
    %1857 = vmatpush1.msra.mxu0 0.0
    %1858 = vmatprep.subr.mxu0 0.0
    %1859 = vmatpush1.msra.mxu0 0.0
    %1860 = vmatprep.subr.mxu0 0.0
    %1861 = vmatpush1.msra.mxu0 0.0
    %1862 = vmatprep.subr.mxu0 0.0
    %1863 = vmatpush1.msra.mxu0 0.0
    %1864 = vmatprep.subr.mxu0 0.0
    %1865 = vmatpush1.msra.mxu0 0.0
    %1866 = vmatprep.subr.mxu0 0.0
    %1867 = vmatpush1.msra.mxu0 0.0
    %1868 = vmatprep.subr.mxu0 0.0
    %1869 = vmatpush1.msra.mxu0 0.0
    %1870 = vmatprep.subr.mxu0 0.0
    %1871 = vmatpush1.msra.mxu0 0.0
    %1872 = vmatprep.subr.mxu0 0.0
    %1873 = vmatpush1.msra.mxu0 0.0
    %1874 = vmatprep.subr.mxu0 0.0
    %1875 = vmatpush1.msra.mxu0 0.0
    %1876 = vmatprep.subr.mxu0 0.0
    %1877 = vmatpush1.msra.mxu0 0.0
    %1878 = vmatprep.subr.mxu0 0.0
    %1879 = vmatpush1.msra.mxu0 0.0
    %1880 = vmatprep.subr.mxu0 0.0
    %1881 = vmatpush1.msra.mxu0 0.0
    %1882 = vmatprep.subr.mxu0 0.0
    %1883 = vmatpush1.msra.mxu0 0.0
    %1884 = vmatprep.subr.mxu0 0.0
    %1885 = vmatpush1.msra.mxu0 0.0
    %1886 = vmatprep.subr.mxu0 0.0
    %1887 = vmatpush1.msra.mxu0 0.0
    %1888 = vmatprep.subr.mxu0 0.0
    %1889 = vmatpush1.msra.mxu0 0.0
    %1890 = vmatprep.mubr.f32.mxu0 0.0
    %1891 = vmatmul.mubr.f32.gmra.mrb[0].mxu0 %v1817
    %v1892 = vpop.f32.mrb[0].mxu0
    %v1893 = vadd.f32 0.0, %v1892
    %v1894 = vpop.f32.mrb[0].mxu0
    %v1895 = vadd.f32 0.0, %v1894
    %1896 = vmatprep.mubr.f32.mxu0 0.0
    %1897 = vmatmul.mubr.f32.gmra.mrb[0].mxu0 %v1820
    %v1898 = vpop.f32.mrb[0].mxu0
    %v1899 = vadd.f32 0.0, %v1898
    %v1900 = vpop.f32.mrb[0].mxu0
    %v1901 = vadd.f32 0.0, %v1900
    %1902 = vdwg.mxu0
    %v1903 = vadd.f32 %v1800, %v1893
    %v1904 = vadd.f32 %v1801, %v1895
    %v1905 = vadd.f32 %v1802, %v1899
    %v1906 = vadd.f32 %v1803, %v1901
    %s1907 = scalar_lea.vmem %s3, 192
    %v1908 = vld [vmem:[%s1907] sm:$0xff]
    %v1909 = vld [vmem:[%s1907 + $0x8] sm:$0xff]
    %1910 = vrot.lane.b32.xlu0 %v708, 102
    %v1911 = vpop.permute.xlu0 %1910
    %1912 = vrot.lane.b32.xlu0 %v709, 102
    %v1913 = vpop.permute.xlu0 %1912
    %1914 = vrot.lane.b32.xlu0 %v710, 102
    %v1915 = vpop.permute.xlu0 %1914
    %vm1916 = vcmask 834560
    %v1917 = vsel %vm1916, %v1911, %v1913
    %v1918 = vsel %vm1916, %v1913, %v1915
    %v1920 = vsel %vm724, %v1908, 0
    %v1923 = vsel %vm724, %v1909, 0
    %v1925 = vsel %vm731, %v1917, 0
    %v1927 = vsel %vm731, %v1918, 0
    %1929 = vmatprep.subr.mxu0 %v1927
    %1930 = vmatpush1.msra.mxu0 %v1925
    %1931 = vmatprep.subr.mxu0 0.0
    %1932 = vmatpush1.msra.mxu0 0.0
    %1933 = vmatprep.subr.mxu0 0.0
    %1934 = vmatpush1.msra.mxu0 0.0
    %1935 = vmatprep.subr.mxu0 0.0
    %1936 = vmatpush1.msra.mxu0 0.0
    %1937 = vmatprep.subr.mxu0 0.0
    %1938 = vmatpush1.msra.mxu0 0.0
    %1939 = vmatprep.subr.mxu0 0.0
    %1940 = vmatpush1.msra.mxu0 0.0
    %1941 = vmatprep.subr.mxu0 0.0
    %1942 = vmatpush1.msra.mxu0 0.0
    %1943 = vmatprep.subr.mxu0 0.0
    %1944 = vmatpush1.msra.mxu0 0.0
    %1945 = vmatprep.subr.mxu0 0.0
    %1946 = vmatpush1.msra.mxu0 0.0
    %1947 = vmatprep.subr.mxu0 0.0
    %1948 = vmatpush1.msra.mxu0 0.0
    %1949 = vmatprep.subr.mxu0 0.0
    %1950 = vmatpush1.msra.mxu0 0.0
    %1951 = vmatprep.subr.mxu0 0.0
    %1952 = vmatpush1.msra.mxu0 0.0
    %1953 = vmatprep.subr.mxu0 0.0
    %1954 = vmatpush1.msra.mxu0 0.0
    %1955 = vmatprep.subr.mxu0 0.0
    %1956 = vmatpush1.msra.mxu0 0.0
    %1957 = vmatprep.subr.mxu0 0.0
    %1958 = vmatpush1.msra.mxu0 0.0
    %1959 = vmatprep.subr.mxu0 0.0
    %1960 = vmatpush1.msra.mxu0 0.0
    %1961 = vmatprep.subr.mxu0 0.0
    %1962 = vmatpush1.msra.mxu0 0.0
    %1963 = vmatprep.subr.mxu0 0.0
    %1964 = vmatpush1.msra.mxu0 0.0
    %1965 = vmatprep.subr.mxu0 0.0
    %1966 = vmatpush1.msra.mxu0 0.0
    %1967 = vmatprep.subr.mxu0 0.0
    %1968 = vmatpush1.msra.mxu0 0.0
    %1969 = vmatprep.subr.mxu0 0.0
    %1970 = vmatpush1.msra.mxu0 0.0
    %1971 = vmatprep.subr.mxu0 0.0
    %1972 = vmatpush1.msra.mxu0 0.0
    %1973 = vmatprep.subr.mxu0 0.0
    %1974 = vmatpush1.msra.mxu0 0.0
    %1975 = vmatprep.subr.mxu0 0.0
    %1976 = vmatpush1.msra.mxu0 0.0
    %1977 = vmatprep.subr.mxu0 0.0
    %1978 = vmatpush1.msra.mxu0 0.0
    %1979 = vmatprep.subr.mxu0 0.0
    %1980 = vmatpush1.msra.mxu0 0.0
    %1981 = vmatprep.subr.mxu0 0.0
    %1982 = vmatpush1.msra.mxu0 0.0
    %1983 = vmatprep.subr.mxu0 0.0
    %1984 = vmatpush1.msra.mxu0 0.0
    %1985 = vmatprep.subr.mxu0 0.0
    %1986 = vmatpush1.msra.mxu0 0.0
    %1987 = vmatprep.subr.mxu0 0.0
    %1988 = vmatpush1.msra.mxu0 0.0
    %1989 = vmatprep.subr.mxu0 0.0
    %1990 = vmatpush1.msra.mxu0 0.0
    %1991 = vmatprep.subr.mxu0 0.0
    %1992 = vmatpush1.msra.mxu0 0.0
    %1993 = vmatprep.mubr.f32.mxu0 0.0
    %1994 = vmatmul.mubr.f32.gmra.mrb[0].mxu0 %v1920
    %v1995 = vpop.f32.mrb[0].mxu0
    %v1996 = vadd.f32 0.0, %v1995
    %v1997 = vpop.f32.mrb[0].mxu0
    %v1998 = vadd.f32 0.0, %v1997
    %1999 = vmatprep.mubr.f32.mxu0 0.0
    %2000 = vmatmul.mubr.f32.gmra.mrb[0].mxu0 %v1923
    %v2001 = vpop.f32.mrb[0].mxu0
    %v2002 = vadd.f32 0.0, %v2001
    %v2003 = vpop.f32.mrb[0].mxu0
    %v2004 = vadd.f32 0.0, %v2003
    %2005 = vdwg.mxu0
    %v2006 = vadd.f32 %v1903, %v1996
    %v2007 = vadd.f32 %v1904, %v1998
    %v2008 = vadd.f32 %v1905, %v2002
    %v2009 = vadd.f32 %v1906, %v2004
    %s2010 = scalar_lea.vmem %s3, 208
    %v2011 = vld [vmem:[%s2010] sm:$0xff]
    %v2012 = vld [vmem:[%s2010 + $0x8] sm:$0xff]
    %2013 = vrot.lane.b32.xlu0 %v708, 101
    %v2014 = vpop.permute.xlu0 %2013
    %2015 = vrot.lane.b32.xlu0 %v709, 101
    %v2016 = vpop.permute.xlu0 %2015
    %2017 = vrot.lane.b32.xlu0 %v710, 101
    %v2018 = vpop.permute.xlu0 %2017
    %vm2019 = vcmask 826368
    %v2020 = vsel %vm2019, %v2014, %v2016
    %v2021 = vsel %vm2019, %v2016, %v2018
    %v2023 = vsel %vm724, %v2011, 0
    %v2026 = vsel %vm724, %v2012, 0
    %v2028 = vsel %vm731, %v2020, 0
    %v2030 = vsel %vm731, %v2021, 0
    %2032 = vmatprep.subr.mxu0 %v2030
    %2033 = vmatpush1.msra.mxu0 %v2028
    %2034 = vmatprep.subr.mxu0 0.0
    %2035 = vmatpush1.msra.mxu0 0.0
    %2036 = vmatprep.subr.mxu0 0.0
    %2037 = vmatpush1.msra.mxu0 0.0
    %2038 = vmatprep.subr.mxu0 0.0
    %2039 = vmatpush1.msra.mxu0 0.0
    %2040 = vmatprep.subr.mxu0 0.0
    %2041 = vmatpush1.msra.mxu0 0.0
    %2042 = vmatprep.subr.mxu0 0.0
    %2043 = vmatpush1.msra.mxu0 0.0
    %2044 = vmatprep.subr.mxu0 0.0
    %2045 = vmatpush1.msra.mxu0 0.0
    %2046 = vmatprep.subr.mxu0 0.0
    %2047 = vmatpush1.msra.mxu0 0.0
    %2048 = vmatprep.subr.mxu0 0.0
    %2049 = vmatpush1.msra.mxu0 0.0
    %2050 = vmatprep.subr.mxu0 0.0
    %2051 = vmatpush1.msra.mxu0 0.0
    %2052 = vmatprep.subr.mxu0 0.0
    %2053 = vmatpush1.msra.mxu0 0.0
    %2054 = vmatprep.subr.mxu0 0.0
    %2055 = vmatpush1.msra.mxu0 0.0
    %2056 = vmatprep.subr.mxu0 0.0
    %2057 = vmatpush1.msra.mxu0 0.0
    %2058 = vmatprep.subr.mxu0 0.0
    %2059 = vmatpush1.msra.mxu0 0.0
    %2060 = vmatprep.subr.mxu0 0.0
    %2061 = vmatpush1.msra.mxu0 0.0
    %2062 = vmatprep.subr.mxu0 0.0
    %2063 = vmatpush1.msra.mxu0 0.0
    %2064 = vmatprep.subr.mxu0 0.0
    %2065 = vmatpush1.msra.mxu0 0.0
    %2066 = vmatprep.subr.mxu0 0.0
    %2067 = vmatpush1.msra.mxu0 0.0
    %2068 = vmatprep.subr.mxu0 0.0
    %2069 = vmatpush1.msra.mxu0 0.0
    %2070 = vmatprep.subr.mxu0 0.0
    %2071 = vmatpush1.msra.mxu0 0.0
    %2072 = vmatprep.subr.mxu0 0.0
    %2073 = vmatpush1.msra.mxu0 0.0
    %2074 = vmatprep.subr.mxu0 0.0
    %2075 = vmatpush1.msra.mxu0 0.0
    %2076 = vmatprep.subr.mxu0 0.0
    %2077 = vmatpush1.msra.mxu0 0.0
    %2078 = vmatprep.subr.mxu0 0.0
    %2079 = vmatpush1.msra.mxu0 0.0
    %2080 = vmatprep.subr.mxu0 0.0
    %2081 = vmatpush1.msra.mxu0 0.0
    %2082 = vmatprep.subr.mxu0 0.0
    %2083 = vmatpush1.msra.mxu0 0.0
    %2084 = vmatprep.subr.mxu0 0.0
    %2085 = vmatpush1.msra.mxu0 0.0
    %2086 = vmatprep.subr.mxu0 0.0
    %2087 = vmatpush1.msra.mxu0 0.0
    %2088 = vmatprep.subr.mxu0 0.0
    %2089 = vmatpush1.msra.mxu0 0.0
    %2090 = vmatprep.subr.mxu0 0.0
    %2091 = vmatpush1.msra.mxu0 0.0
    %2092 = vmatprep.subr.mxu0 0.0
    %2093 = vmatpush1.msra.mxu0 0.0
    %2094 = vmatprep.subr.mxu0 0.0
    %2095 = vmatpush1.msra.mxu0 0.0
    %2096 = vmatprep.mubr.f32.mxu0 0.0
    %2097 = vmatmul.mubr.f32.gmra.mrb[0].mxu0 %v2023
    %v2098 = vpop.f32.mrb[0].mxu0
    %v2099 = vadd.f32 0.0, %v2098
    %v2100 = vpop.f32.mrb[0].mxu0
    %v2101 = vadd.f32 0.0, %v2100
    %2102 = vmatprep.mubr.f32.mxu0 0.0
    %2103 = vmatmul.mubr.f32.gmra.mrb[0].mxu0 %v2026
    %v2104 = vpop.f32.mrb[0].mxu0
    %v2105 = vadd.f32 0.0, %v2104
    %v2106 = vpop.f32.mrb[0].mxu0
    %v2107 = vadd.f32 0.0, %v2106
    %2108 = vdwg.mxu0
    %v2109 = vadd.f32 %v2006, %v2099
    %v2110 = vadd.f32 %v2007, %v2101
    %v2111 = vadd.f32 %v2008, %v2105
    %v2112 = vadd.f32 %v2009, %v2107
    %s2113 = scalar_lea.vmem %s3, 224
    %v2114 = vld [vmem:[%s2113] sm:$0xff]
    %v2115 = vld [vmem:[%s2113 + $0x8] sm:$0xff]
    %2116 = vrot.lane.b32.xlu0 %v708, 100
    %v2117 = vpop.permute.xlu0 %2116
    %2118 = vrot.lane.b32.xlu0 %v709, 100
    %v2119 = vpop.permute.xlu0 %2118
    %2120 = vrot.lane.b32.xlu0 %v710, 100
    %v2121 = vpop.permute.xlu0 %2120
    %vm2122 = vcmask 818176
    %v2123 = vsel %vm2122, %v2117, %v2119
    %v2124 = vsel %vm2122, %v2119, %v2121
    %v2126 = vsel %vm724, %v2114, 0
    %v2129 = vsel %vm724, %v2115, 0
    %v2131 = vsel %vm731, %v2123, 0
    %v2133 = vsel %vm731, %v2124, 0
    %2135 = vmatprep.subr.mxu0 %v2133
    %2136 = vmatpush1.msra.mxu0 %v2131
    %2137 = vmatprep.subr.mxu0 0.0
    %2138 = vmatpush1.msra.mxu0 0.0
    %2139 = vmatprep.subr.mxu0 0.0
    %2140 = vmatpush1.msra.mxu0 0.0
    %2141 = vmatprep.subr.mxu0 0.0
    %2142 = vmatpush1.msra.mxu0 0.0
    %2143 = vmatprep.subr.mxu0 0.0
    %2144 = vmatpush1.msra.mxu0 0.0
    %2145 = vmatprep.subr.mxu0 0.0
    %2146 = vmatpush1.msra.mxu0 0.0
    %2147 = vmatprep.subr.mxu0 0.0
    %2148 = vmatpush1.msra.mxu0 0.0
    %2149 = vmatprep.subr.mxu0 0.0
    %2150 = vmatpush1.msra.mxu0 0.0
    %2151 = vmatprep.subr.mxu0 0.0
    %2152 = vmatpush1.msra.mxu0 0.0
    %2153 = vmatprep.subr.mxu0 0.0
    %2154 = vmatpush1.msra.mxu0 0.0
    %2155 = vmatprep.subr.mxu0 0.0
    %2156 = vmatpush1.msra.mxu0 0.0
    %2157 = vmatprep.subr.mxu0 0.0
    %2158 = vmatpush1.msra.mxu0 0.0
    %2159 = vmatprep.subr.mxu0 0.0
    %2160 = vmatpush1.msra.mxu0 0.0
    %2161 = vmatprep.subr.mxu0 0.0
    %2162 = vmatpush1.msra.mxu0 0.0
    %2163 = vmatprep.subr.mxu0 0.0
    %2164 = vmatpush1.msra.mxu0 0.0
    %2165 = vmatprep.subr.mxu0 0.0
    %2166 = vmatpush1.msra.mxu0 0.0
    %2167 = vmatprep.subr.mxu0 0.0
    %2168 = vmatpush1.msra.mxu0 0.0
    %2169 = vmatprep.subr.mxu0 0.0
    %2170 = vmatpush1.msra.mxu0 0.0
    %2171 = vmatprep.subr.mxu0 0.0
    %2172 = vmatpush1.msra.mxu0 0.0
    %2173 = vmatprep.subr.mxu0 0.0
    %2174 = vmatpush1.msra.mxu0 0.0
    %2175 = vmatprep.subr.mxu0 0.0
    %2176 = vmatpush1.msra.mxu0 0.0
    %2177 = vmatprep.subr.mxu0 0.0
    %2178 = vmatpush1.msra.mxu0 0.0
    %2179 = vmatprep.subr.mxu0 0.0
    %2180 = vmatpush1.msra.mxu0 0.0
    %2181 = vmatprep.subr.mxu0 0.0
    %2182 = vmatpush1.msra.mxu0 0.0
    %2183 = vmatprep.subr.mxu0 0.0
    %2184 = vmatpush1.msra.mxu0 0.0
    %2185 = vmatprep.subr.mxu0 0.0
    %2186 = vmatpush1.msra.mxu0 0.0
    %2187 = vmatprep.subr.mxu0 0.0
    %2188 = vmatpush1.msra.mxu0 0.0
    %2189 = vmatprep.subr.mxu0 0.0
    %2190 = vmatpush1.msra.mxu0 0.0
    %2191 = vmatprep.subr.mxu0 0.0
    %2192 = vmatpush1.msra.mxu0 0.0
    %2193 = vmatprep.subr.mxu0 0.0
    %2194 = vmatpush1.msra.mxu0 0.0
    %2195 = vmatprep.subr.mxu0 0.0
    %2196 = vmatpush1.msra.mxu0 0.0
    %2197 = vmatprep.subr.mxu0 0.0
    %2198 = vmatpush1.msra.mxu0 0.0
    %2199 = vmatprep.mubr.f32.mxu0 0.0
    %2200 = vmatmul.mubr.f32.gmra.mrb[0].mxu0 %v2126
    %v2201 = vpop.f32.mrb[0].mxu0
    %v2202 = vadd.f32 0.0, %v2201
    %v2203 = vpop.f32.mrb[0].mxu0
    %v2204 = vadd.f32 0.0, %v2203
    %2205 = vmatprep.mubr.f32.mxu0 0.0
    %2206 = vmatmul.mubr.f32.gmra.mrb[0].mxu0 %v2129
    %v2207 = vpop.f32.mrb[0].mxu0
    %v2208 = vadd.f32 0.0, %v2207
    %v2209 = vpop.f32.mrb[0].mxu0
    %v2210 = vadd.f32 0.0, %v2209
    %2211 = vdwg.mxu0
    %v2212 = vadd.f32 %v2109, %v2202
    %v2213 = vadd.f32 %v2110, %v2204
    %v2214 = vadd.f32 %v2111, %v2208
    %v2215 = vadd.f32 %v2112, %v2210
    %s2216 = scalar_lea.vmem %s3, 240
    %v2217 = vld [vmem:[%s2216] sm:$0xff]
    %v2218 = vld [vmem:[%s2216 + $0x8] sm:$0xff]
    %2219 = vrot.lane.b32.xlu0 %v708, 92
    %v2220 = vpop.permute.xlu0 %2219
    %2221 = vrot.lane.b32.xlu0 %v709, 92
    %v2222 = vpop.permute.xlu0 %2221
    %2223 = vrot.lane.b32.xlu0 %v710, 92
    %v2224 = vpop.permute.xlu0 %2223
    %vm2225 = vcmask 752640
    %v2226 = vsel %vm2225, %v2220, %v2222
    %v2227 = vsel %vm2225, %v2222, %v2224
    %v2229 = vsel %vm724, %v2217, 0
    %v2232 = vsel %vm724, %v2218, 0
    %v2234 = vsel %vm731, %v2226, 0
    %v2236 = vsel %vm731, %v2227, 0
    %2238 = vmatprep.subr.mxu0 %v2236
    %2239 = vmatpush1.msra.mxu0 %v2234
    %2240 = vmatprep.subr.mxu0 0.0
    %2241 = vmatpush1.msra.mxu0 0.0
    %2242 = vmatprep.subr.mxu0 0.0
    %2243 = vmatpush1.msra.mxu0 0.0
    %2244 = vmatprep.subr.mxu0 0.0
    %2245 = vmatpush1.msra.mxu0 0.0
    %2246 = vmatprep.subr.mxu0 0.0
    %2247 = vmatpush1.msra.mxu0 0.0
    %2248 = vmatprep.subr.mxu0 0.0
    %2249 = vmatpush1.msra.mxu0 0.0
    %2250 = vmatprep.subr.mxu0 0.0
    %2251 = vmatpush1.msra.mxu0 0.0
    %2252 = vmatprep.subr.mxu0 0.0
    %2253 = vmatpush1.msra.mxu0 0.0
    %2254 = vmatprep.subr.mxu0 0.0
    %2255 = vmatpush1.msra.mxu0 0.0
    %2256 = vmatprep.subr.mxu0 0.0
    %2257 = vmatpush1.msra.mxu0 0.0
    %2258 = vmatprep.subr.mxu0 0.0
    %2259 = vmatpush1.msra.mxu0 0.0
    %2260 = vmatprep.subr.mxu0 0.0
    %2261 = vmatpush1.msra.mxu0 0.0
    %2262 = vmatprep.subr.mxu0 0.0
    %2263 = vmatpush1.msra.mxu0 0.0
    %2264 = vmatprep.subr.mxu0 0.0
    %2265 = vmatpush1.msra.mxu0 0.0
    %2266 = vmatprep.subr.mxu0 0.0
    %2267 = vmatpush1.msra.mxu0 0.0
    %2268 = vmatprep.subr.mxu0 0.0
    %2269 = vmatpush1.msra.mxu0 0.0
    %2270 = vmatprep.subr.mxu0 0.0
    %2271 = vmatpush1.msra.mxu0 0.0
    %2272 = vmatprep.subr.mxu0 0.0
    %2273 = vmatpush1.msra.mxu0 0.0
    %2274 = vmatprep.subr.mxu0 0.0
    %2275 = vmatpush1.msra.mxu0 0.0
    %2276 = vmatprep.subr.mxu0 0.0
    %2277 = vmatpush1.msra.mxu0 0.0
    %2278 = vmatprep.subr.mxu0 0.0
    %2279 = vmatpush1.msra.mxu0 0.0
    %2280 = vmatprep.subr.mxu0 0.0
    %2281 = vmatpush1.msra.mxu0 0.0
    %2282 = vmatprep.subr.mxu0 0.0
    %2283 = vmatpush1.msra.mxu0 0.0
    %2284 = vmatprep.subr.mxu0 0.0
    %2285 = vmatpush1.msra.mxu0 0.0
    %2286 = vmatprep.subr.mxu0 0.0
    %2287 = vmatpush1.msra.mxu0 0.0
    %2288 = vmatprep.subr.mxu0 0.0
    %2289 = vmatpush1.msra.mxu0 0.0
    %2290 = vmatprep.subr.mxu0 0.0
    %2291 = vmatpush1.msra.mxu0 0.0
    %2292 = vmatprep.subr.mxu0 0.0
    %2293 = vmatpush1.msra.mxu0 0.0
    %2294 = vmatprep.subr.mxu0 0.0
    %2295 = vmatpush1.msra.mxu0 0.0
    %2296 = vmatprep.subr.mxu0 0.0
    %2297 = vmatpush1.msra.mxu0 0.0
    %2298 = vmatprep.subr.mxu0 0.0
    %2299 = vmatpush1.msra.mxu0 0.0
    %2300 = vmatprep.subr.mxu0 0.0
    %2301 = vmatpush1.msra.mxu0 0.0
    %2302 = vmatprep.mubr.f32.mxu0 0.0
    %2303 = vmatmul.mubr.f32.gmra.mrb[0].mxu0 %v2229
    %v2304 = vpop.f32.mrb[0].mxu0
    %v2305 = vadd.f32 0.0, %v2304
    %v2306 = vpop.f32.mrb[0].mxu0
    %v2307 = vadd.f32 0.0, %v2306
    %2308 = vmatprep.mubr.f32.mxu0 0.0
    %2309 = vmatmul.mubr.f32.gmra.mrb[0].mxu0 %v2232
    %v2310 = vpop.f32.mrb[0].mxu0
    %v2311 = vadd.f32 0.0, %v2310
    %v2312 = vpop.f32.mrb[0].mxu0
    %v2313 = vadd.f32 0.0, %v2312
    %2314 = vdwg.mxu0
    %v2315 = vadd.f32 %v2212, %v2305
    %v2316 = vadd.f32 %v2213, %v2307
    %v2317 = vadd.f32 %v2214, %v2311
    %v2318 = vadd.f32 %v2215, %v2313
    %s2319 = scalar_lea.vmem %s3, 256
    %v2320 = vld [vmem:[%s2319] sm:$0xff]
    %v2321 = vld [vmem:[%s2319 + $0x8] sm:$0xff]
    %2322 = vrot.lane.b32.xlu0 %v708, 91
    %v2323 = vpop.permute.xlu0 %2322
    %2324 = vrot.lane.b32.xlu0 %v709, 91
    %v2325 = vpop.permute.xlu0 %2324
    %2326 = vrot.lane.b32.xlu0 %v710, 91
    %v2327 = vpop.permute.xlu0 %2326
    %vm2328 = vcmask 744448
    %v2329 = vsel %vm2328, %v2323, %v2325
    %v2330 = vsel %vm2328, %v2325, %v2327
    %v2332 = vsel %vm724, %v2320, 0
    %v2335 = vsel %vm724, %v2321, 0
    %v2337 = vsel %vm731, %v2329, 0
    %v2339 = vsel %vm731, %v2330, 0
    %2341 = vmatprep.subr.mxu0 %v2339
    %2342 = vmatpush1.msra.mxu0 %v2337
    %2343 = vmatprep.subr.mxu0 0.0
    %2344 = vmatpush1.msra.mxu0 0.0
    %2345 = vmatprep.subr.mxu0 0.0
    %2346 = vmatpush1.msra.mxu0 0.0
    %2347 = vmatprep.subr.mxu0 0.0
    %2348 = vmatpush1.msra.mxu0 0.0
    %2349 = vmatprep.subr.mxu0 0.0
    %2350 = vmatpush1.msra.mxu0 0.0
    %2351 = vmatprep.subr.mxu0 0.0
    %2352 = vmatpush1.msra.mxu0 0.0
    %2353 = vmatprep.subr.mxu0 0.0
    %2354 = vmatpush1.msra.mxu0 0.0
    %2355 = vmatprep.subr.mxu0 0.0
    %2356 = vmatpush1.msra.mxu0 0.0
    %2357 = vmatprep.subr.mxu0 0.0
    %2358 = vmatpush1.msra.mxu0 0.0
    %2359 = vmatprep.subr.mxu0 0.0
    %2360 = vmatpush1.msra.mxu0 0.0
    %2361 = vmatprep.subr.mxu0 0.0
    %2362 = vmatpush1.msra.mxu0 0.0
    %2363 = vmatprep.subr.mxu0 0.0
    %2364 = vmatpush1.msra.mxu0 0.0
    %2365 = vmatprep.subr.mxu0 0.0
    %2366 = vmatpush1.msra.mxu0 0.0
    %2367 = vmatprep.subr.mxu0 0.0
    %2368 = vmatpush1.msra.mxu0 0.0
    %2369 = vmatprep.subr.mxu0 0.0
    %2370 = vmatpush1.msra.mxu0 0.0
    %2371 = vmatprep.subr.mxu0 0.0
    %2372 = vmatpush1.msra.mxu0 0.0
    %2373 = vmatprep.subr.mxu0 0.0
    %2374 = vmatpush1.msra.mxu0 0.0
    %2375 = vmatprep.subr.mxu0 0.0
    %2376 = vmatpush1.msra.mxu0 0.0
    %2377 = vmatprep.subr.mxu0 0.0
    %2378 = vmatpush1.msra.mxu0 0.0
    %2379 = vmatprep.subr.mxu0 0.0
    %2380 = vmatpush1.msra.mxu0 0.0
    %2381 = vmatprep.subr.mxu0 0.0
    %2382 = vmatpush1.msra.mxu0 0.0
    %2383 = vmatprep.subr.mxu0 0.0
    %2384 = vmatpush1.msra.mxu0 0.0
    %2385 = vmatprep.subr.mxu0 0.0
    %2386 = vmatpush1.msra.mxu0 0.0
    %2387 = vmatprep.subr.mxu0 0.0
    %2388 = vmatpush1.msra.mxu0 0.0
    %2389 = vmatprep.subr.mxu0 0.0
    %2390 = vmatpush1.msra.mxu0 0.0
    %2391 = vmatprep.subr.mxu0 0.0
    %2392 = vmatpush1.msra.mxu0 0.0
    %2393 = vmatprep.subr.mxu0 0.0
    %2394 = vmatpush1.msra.mxu0 0.0
    %2395 = vmatprep.subr.mxu0 0.0
    %2396 = vmatpush1.msra.mxu0 0.0
    %2397 = vmatprep.subr.mxu0 0.0
    %2398 = vmatpush1.msra.mxu0 0.0
    %2399 = vmatprep.subr.mxu0 0.0
    %2400 = vmatpush1.msra.mxu0 0.0
    %2401 = vmatprep.subr.mxu0 0.0
    %2402 = vmatpush1.msra.mxu0 0.0
    %2403 = vmatprep.subr.mxu0 0.0
    %2404 = vmatpush1.msra.mxu0 0.0
    %2405 = vmatprep.mubr.f32.mxu0 0.0
    %2406 = vmatmul.mubr.f32.gmra.mrb[0].mxu0 %v2332
    %v2407 = vpop.f32.mrb[0].mxu0
    %v2408 = vadd.f32 0.0, %v2407
    %v2409 = vpop.f32.mrb[0].mxu0
    %v2410 = vadd.f32 0.0, %v2409
    %2411 = vmatprep.mubr.f32.mxu0 0.0
    %2412 = vmatmul.mubr.f32.gmra.mrb[0].mxu0 %v2335
    %v2413 = vpop.f32.mrb[0].mxu0
    %v2414 = vadd.f32 0.0, %v2413
    %v2415 = vpop.f32.mrb[0].mxu0
    %v2416 = vadd.f32 0.0, %v2415
    %2417 = vdwg.mxu0
    %v2418 = vadd.f32 %v2315, %v2408
    %v2419 = vadd.f32 %v2316, %v2410
    %v2420 = vadd.f32 %v2317, %v2414
    %v2421 = vadd.f32 %v2318, %v2416
    %s2422 = scalar_lea.vmem %s3, 272
    %v2423 = vld [vmem:[%s2422] sm:$0xff]
    %v2424 = vld [vmem:[%s2422 + $0x8] sm:$0xff]
    %2425 = vrot.lane.b32.xlu0 %v708, 90
    %v2426 = vpop.permute.xlu0 %2425
    %2427 = vrot.lane.b32.xlu0 %v709, 90
    %v2428 = vpop.permute.xlu0 %2427
    %2429 = vrot.lane.b32.xlu0 %v710, 90
    %v2430 = vpop.permute.xlu0 %2429
    %vm2431 = vcmask 736256
    %v2432 = vsel %vm2431, %v2426, %v2428
    %v2433 = vsel %vm2431, %v2428, %v2430
    %v2435 = vsel %vm724, %v2423, 0
    %v2438 = vsel %vm724, %v2424, 0
    %v2440 = vsel %vm731, %v2432, 0
    %v2442 = vsel %vm731, %v2433, 0
    %2444 = vmatprep.subr.mxu0 %v2442
    %2445 = vmatpush1.msra.mxu0 %v2440
    %2446 = vmatprep.subr.mxu0 0.0
    %2447 = vmatpush1.msra.mxu0 0.0
    %2448 = vmatprep.subr.mxu0 0.0
    %2449 = vmatpush1.msra.mxu0 0.0
    %2450 = vmatprep.subr.mxu0 0.0
    %2451 = vmatpush1.msra.mxu0 0.0
    %2452 = vmatprep.subr.mxu0 0.0
    %2453 = vmatpush1.msra.mxu0 0.0
    %2454 = vmatprep.subr.mxu0 0.0
    %2455 = vmatpush1.msra.mxu0 0.0
    %2456 = vmatprep.subr.mxu0 0.0
    %2457 = vmatpush1.msra.mxu0 0.0
    %2458 = vmatprep.subr.mxu0 0.0
    %2459 = vmatpush1.msra.mxu0 0.0
    %2460 = vmatprep.subr.mxu0 0.0
    %2461 = vmatpush1.msra.mxu0 0.0
    %2462 = vmatprep.subr.mxu0 0.0
    %2463 = vmatpush1.msra.mxu0 0.0
    %2464 = vmatprep.subr.mxu0 0.0
    %2465 = vmatpush1.msra.mxu0 0.0
    %2466 = vmatprep.subr.mxu0 0.0
    %2467 = vmatpush1.msra.mxu0 0.0
    %2468 = vmatprep.subr.mxu0 0.0
    %2469 = vmatpush1.msra.mxu0 0.0
    %2470 = vmatprep.subr.mxu0 0.0
    %2471 = vmatpush1.msra.mxu0 0.0
    %2472 = vmatprep.subr.mxu0 0.0
    %2473 = vmatpush1.msra.mxu0 0.0
    %2474 = vmatprep.subr.mxu0 0.0
    %2475 = vmatpush1.msra.mxu0 0.0
    %2476 = vmatprep.subr.mxu0 0.0
    %2477 = vmatpush1.msra.mxu0 0.0
    %2478 = vmatprep.subr.mxu0 0.0
    %2479 = vmatpush1.msra.mxu0 0.0
    %2480 = vmatprep.subr.mxu0 0.0
    %2481 = vmatpush1.msra.mxu0 0.0
    %2482 = vmatprep.subr.mxu0 0.0
    %2483 = vmatpush1.msra.mxu0 0.0
    %2484 = vmatprep.subr.mxu0 0.0
    %2485 = vmatpush1.msra.mxu0 0.0
    %2486 = vmatprep.subr.mxu0 0.0
    %2487 = vmatpush1.msra.mxu0 0.0
    %2488 = vmatprep.subr.mxu0 0.0
    %2489 = vmatpush1.msra.mxu0 0.0
    %2490 = vmatprep.subr.mxu0 0.0
    %2491 = vmatpush1.msra.mxu0 0.0
    %2492 = vmatprep.subr.mxu0 0.0
    %2493 = vmatpush1.msra.mxu0 0.0
    %2494 = vmatprep.subr.mxu0 0.0
    %2495 = vmatpush1.msra.mxu0 0.0
    %2496 = vmatprep.subr.mxu0 0.0
    %2497 = vmatpush1.msra.mxu0 0.0
    %2498 = vmatprep.subr.mxu0 0.0
    %2499 = vmatpush1.msra.mxu0 0.0
    %2500 = vmatprep.subr.mxu0 0.0
    %2501 = vmatpush1.msra.mxu0 0.0
    %2502 = vmatprep.subr.mxu0 0.0
    %2503 = vmatpush1.msra.mxu0 0.0
    %2504 = vmatprep.subr.mxu0 0.0
    %2505 = vmatpush1.msra.mxu0 0.0
    %2506 = vmatprep.subr.mxu0 0.0
    %2507 = vmatpush1.msra.mxu0 0.0
    %2508 = vmatprep.mubr.f32.mxu0 0.0
    %2509 = vmatmul.mubr.f32.gmra.mrb[0].mxu0 %v2435
    %v2510 = vpop.f32.mrb[0].mxu0
    %v2511 = vadd.f32 0.0, %v2510
    %v2512 = vpop.f32.mrb[0].mxu0
    %v2513 = vadd.f32 0.0, %v2512
    %2514 = vmatprep.mubr.f32.mxu0 0.0
    %2515 = vmatmul.mubr.f32.gmra.mrb[0].mxu0 %v2438
    %v2516 = vpop.f32.mrb[0].mxu0
    %v2517 = vadd.f32 0.0, %v2516
    %v2518 = vpop.f32.mrb[0].mxu0
    %v2519 = vadd.f32 0.0, %v2518
    %2520 = vdwg.mxu0
    %v2521 = vadd.f32 %v2418, %v2511
    %v2522 = vadd.f32 %v2419, %v2513
    %v2523 = vadd.f32 %v2420, %v2517
    %v2524 = vadd.f32 %v2421, %v2519
    %s2525 = scalar_lea.vmem %s3, 288
    %v2526 = vld [vmem:[%s2525] sm:$0xff]
    %v2527 = vld [vmem:[%s2525 + $0x8] sm:$0xff]
    %2528 = vrot.lane.b32.xlu0 %v708, 89
    %v2529 = vpop.permute.xlu0 %2528
    %2530 = vrot.lane.b32.xlu0 %v709, 89
    %v2531 = vpop.permute.xlu0 %2530
    %2532 = vrot.lane.b32.xlu0 %v710, 89
    %v2533 = vpop.permute.xlu0 %2532
    %vm2534 = vcmask 728064
    %v2535 = vsel %vm2534, %v2529, %v2531
    %v2536 = vsel %vm2534, %v2531, %v2533
    %v2538 = vsel %vm724, %v2526, 0
    %v2541 = vsel %vm724, %v2527, 0
    %v2543 = vsel %vm731, %v2535, 0
    %v2545 = vsel %vm731, %v2536, 0
    %2547 = vmatprep.subr.mxu0 %v2545
    %2548 = vmatpush1.msra.mxu0 %v2543
    %2549 = vmatprep.subr.mxu0 0.0
    %2550 = vmatpush1.msra.mxu0 0.0
    %2551 = vmatprep.subr.mxu0 0.0
    %2552 = vmatpush1.msra.mxu0 0.0
    %2553 = vmatprep.subr.mxu0 0.0
    %2554 = vmatpush1.msra.mxu0 0.0
    %2555 = vmatprep.subr.mxu0 0.0
    %2556 = vmatpush1.msra.mxu0 0.0
    %2557 = vmatprep.subr.mxu0 0.0
    %2558 = vmatpush1.msra.mxu0 0.0
    %2559 = vmatprep.subr.mxu0 0.0
    %2560 = vmatpush1.msra.mxu0 0.0
    %2561 = vmatprep.subr.mxu0 0.0
    %2562 = vmatpush1.msra.mxu0 0.0
    %2563 = vmatprep.subr.mxu0 0.0
    %2564 = vmatpush1.msra.mxu0 0.0
    %2565 = vmatprep.subr.mxu0 0.0
    %2566 = vmatpush1.msra.mxu0 0.0
    %2567 = vmatprep.subr.mxu0 0.0
    %2568 = vmatpush1.msra.mxu0 0.0
    %2569 = vmatprep.subr.mxu0 0.0
    %2570 = vmatpush1.msra.mxu0 0.0
    %2571 = vmatprep.subr.mxu0 0.0
    %2572 = vmatpush1.msra.mxu0 0.0
    %2573 = vmatprep.subr.mxu0 0.0
    %2574 = vmatpush1.msra.mxu0 0.0
    %2575 = vmatprep.subr.mxu0 0.0
    %2576 = vmatpush1.msra.mxu0 0.0
    %2577 = vmatprep.subr.mxu0 0.0
    %2578 = vmatpush1.msra.mxu0 0.0
    %2579 = vmatprep.subr.mxu0 0.0
    %2580 = vmatpush1.msra.mxu0 0.0
    %2581 = vmatprep.subr.mxu0 0.0
    %2582 = vmatpush1.msra.mxu0 0.0
    %2583 = vmatprep.subr.mxu0 0.0
    %2584 = vmatpush1.msra.mxu0 0.0
    %2585 = vmatprep.subr.mxu0 0.0
    %2586 = vmatpush1.msra.mxu0 0.0
    %2587 = vmatprep.subr.mxu0 0.0
    %2588 = vmatpush1.msra.mxu0 0.0
    %2589 = vmatprep.subr.mxu0 0.0
    %2590 = vmatpush1.msra.mxu0 0.0
    %2591 = vmatprep.subr.mxu0 0.0
    %2592 = vmatpush1.msra.mxu0 0.0
    %2593 = vmatprep.subr.mxu0 0.0
    %2594 = vmatpush1.msra.mxu0 0.0
    %2595 = vmatprep.subr.mxu0 0.0
    %2596 = vmatpush1.msra.mxu0 0.0
    %2597 = vmatprep.subr.mxu0 0.0
    %2598 = vmatpush1.msra.mxu0 0.0
    %2599 = vmatprep.subr.mxu0 0.0
    %2600 = vmatpush1.msra.mxu0 0.0
    %2601 = vmatprep.subr.mxu0 0.0
    %2602 = vmatpush1.msra.mxu0 0.0
    %2603 = vmatprep.subr.mxu0 0.0
    %2604 = vmatpush1.msra.mxu0 0.0
    %2605 = vmatprep.subr.mxu0 0.0
    %2606 = vmatpush1.msra.mxu0 0.0
    %2607 = vmatprep.subr.mxu0 0.0
    %2608 = vmatpush1.msra.mxu0 0.0
    %2609 = vmatprep.subr.mxu0 0.0
    %2610 = vmatpush1.msra.mxu0 0.0
    %2611 = vmatprep.mubr.f32.mxu0 0.0
    %2612 = vmatmul.mubr.f32.gmra.mrb[0].mxu0 %v2538
    %v2613 = vpop.f32.mrb[0].mxu0
    %v2614 = vadd.f32 0.0, %v2613
    %v2615 = vpop.f32.mrb[0].mxu0
    %v2616 = vadd.f32 0.0, %v2615
    %2617 = vmatprep.mubr.f32.mxu0 0.0
    %2618 = vmatmul.mubr.f32.gmra.mrb[0].mxu0 %v2541
    %v2619 = vpop.f32.mrb[0].mxu0
    %v2620 = vadd.f32 0.0, %v2619
    %v2621 = vpop.f32.mrb[0].mxu0
    %v2622 = vadd.f32 0.0, %v2621
    %2623 = vdwg.mxu0
    %v2624 = vadd.f32 %v2521, %v2614
    %v2625 = vadd.f32 %v2522, %v2616
    %v2626 = vadd.f32 %v2523, %v2620
    %v2627 = vadd.f32 %v2524, %v2622
    %s2628 = scalar_lea.vmem %s3, 304
    %v2629 = vld [vmem:[%s2628] sm:$0xff]
    %v2630 = vld [vmem:[%s2628 + $0x8] sm:$0xff]
    %2631 = vrot.lane.b32.xlu0 %v708, 88
    %v2632 = vpop.permute.xlu0 %2631
    %2633 = vrot.lane.b32.xlu0 %v709, 88
    %v2634 = vpop.permute.xlu0 %2633
    %2635 = vrot.lane.b32.xlu0 %v710, 88
    %v2636 = vpop.permute.xlu0 %2635
    %vm2637 = vcmask 719872
    %v2638 = vsel %vm2637, %v2632, %v2634
    %v2639 = vsel %vm2637, %v2634, %v2636
    %v2641 = vsel %vm724, %v2629, 0
    %v2644 = vsel %vm724, %v2630, 0
    %v2646 = vsel %vm731, %v2638, 0
    %v2648 = vsel %vm731, %v2639, 0
    %2650 = vmatprep.subr.mxu0 %v2648
    %2651 = vmatpush1.msra.mxu0 %v2646
    %2652 = vmatprep.subr.mxu0 0.0
    %2653 = vmatpush1.msra.mxu0 0.0
    %2654 = vmatprep.subr.mxu0 0.0
    %2655 = vmatpush1.msra.mxu0 0.0
    %2656 = vmatprep.subr.mxu0 0.0
    %2657 = vmatpush1.msra.mxu0 0.0
    %2658 = vmatprep.subr.mxu0 0.0
    %2659 = vmatpush1.msra.mxu0 0.0
    %2660 = vmatprep.subr.mxu0 0.0
    %2661 = vmatpush1.msra.mxu0 0.0
    %2662 = vmatprep.subr.mxu0 0.0
    %2663 = vmatpush1.msra.mxu0 0.0
    %2664 = vmatprep.subr.mxu0 0.0
    %2665 = vmatpush1.msra.mxu0 0.0
    %2666 = vmatprep.subr.mxu0 0.0
    %2667 = vmatpush1.msra.mxu0 0.0
    %2668 = vmatprep.subr.mxu0 0.0
    %2669 = vmatpush1.msra.mxu0 0.0
    %2670 = vmatprep.subr.mxu0 0.0
    %2671 = vmatpush1.msra.mxu0 0.0
    %2672 = vmatprep.subr.mxu0 0.0
    %2673 = vmatpush1.msra.mxu0 0.0
    %2674 = vmatprep.subr.mxu0 0.0
    %2675 = vmatpush1.msra.mxu0 0.0
    %2676 = vmatprep.subr.mxu0 0.0
    %2677 = vmatpush1.msra.mxu0 0.0
    %2678 = vmatprep.subr.mxu0 0.0
    %2679 = vmatpush1.msra.mxu0 0.0
    %2680 = vmatprep.subr.mxu0 0.0
    %2681 = vmatpush1.msra.mxu0 0.0
    %2682 = vmatprep.subr.mxu0 0.0
    %2683 = vmatpush1.msra.mxu0 0.0
    %2684 = vmatprep.subr.mxu0 0.0
    %2685 = vmatpush1.msra.mxu0 0.0
    %2686 = vmatprep.subr.mxu0 0.0
    %2687 = vmatpush1.msra.mxu0 0.0
    %2688 = vmatprep.subr.mxu0 0.0
    %2689 = vmatpush1.msra.mxu0 0.0
    %2690 = vmatprep.subr.mxu0 0.0
    %2691 = vmatpush1.msra.mxu0 0.0
    %2692 = vmatprep.subr.mxu0 0.0
    %2693 = vmatpush1.msra.mxu0 0.0
    %2694 = vmatprep.subr.mxu0 0.0
    %2695 = vmatpush1.msra.mxu0 0.0
    %2696 = vmatprep.subr.mxu0 0.0
    %2697 = vmatpush1.msra.mxu0 0.0
    %2698 = vmatprep.subr.mxu0 0.0
    %2699 = vmatpush1.msra.mxu0 0.0
    %2700 = vmatprep.subr.mxu0 0.0
    %2701 = vmatpush1.msra.mxu0 0.0
    %2702 = vmatprep.subr.mxu0 0.0
    %2703 = vmatpush1.msra.mxu0 0.0
    %2704 = vmatprep.subr.mxu0 0.0
    %2705 = vmatpush1.msra.mxu0 0.0
    %2706 = vmatprep.subr.mxu0 0.0
    %2707 = vmatpush1.msra.mxu0 0.0
    %2708 = vmatprep.subr.mxu0 0.0
    %2709 = vmatpush1.msra.mxu0 0.0
    %2710 = vmatprep.subr.mxu0 0.0
    %2711 = vmatpush1.msra.mxu0 0.0
    %2712 = vmatprep.subr.mxu0 0.0
    %2713 = vmatpush1.msra.mxu0 0.0
    %2714 = vmatprep.mubr.f32.mxu0 0.0
    %2715 = vmatmul.mubr.f32.gmra.mrb[0].mxu0 %v2641
    %v2716 = vpop.f32.mrb[0].mxu0
    %v2717 = vadd.f32 0.0, %v2716
    %v2718 = vpop.f32.mrb[0].mxu0
    %v2719 = vadd.f32 0.0, %v2718
    %2720 = vmatprep.mubr.f32.mxu0 0.0
    %2721 = vmatmul.mubr.f32.gmra.mrb[0].mxu0 %v2644
    %v2722 = vpop.f32.mrb[0].mxu0
    %v2723 = vadd.f32 0.0, %v2722
    %v2724 = vpop.f32.mrb[0].mxu0
    %v2725 = vadd.f32 0.0, %v2724
    %2726 = vdwg.mxu0
    %v2727 = vadd.f32 %v2624, %v2717
    %v2728 = vadd.f32 %v2625, %v2719
    %v2729 = vadd.f32 %v2626, %v2723
    %v2730 = vadd.f32 %v2627, %v2725
    %s2731 = scalar_lea.vmem %s3, 320
    %v2732 = vld [vmem:[%s2731] sm:$0xff]
    %v2733 = vld [vmem:[%s2731 + $0x8] sm:$0xff]
    %2734 = vrot.lane.b32.xlu0 %v708, 80
    %v2735 = vpop.permute.xlu0 %2734
    %2736 = vrot.lane.b32.xlu0 %v709, 80
    %v2737 = vpop.permute.xlu0 %2736
    %2738 = vrot.lane.b32.xlu0 %v710, 80
    %v2739 = vpop.permute.xlu0 %2738
    %vm2740 = vcmask 654336
    %v2741 = vsel %vm2740, %v2735, %v2737
    %v2742 = vsel %vm2740, %v2737, %v2739
    %v2744 = vsel %vm724, %v2732, 0
    %v2747 = vsel %vm724, %v2733, 0
    %v2749 = vsel %vm731, %v2741, 0
    %v2751 = vsel %vm731, %v2742, 0
    %2753 = vmatprep.subr.mxu0 %v2751
    %2754 = vmatpush1.msra.mxu0 %v2749
    %2755 = vmatprep.subr.mxu0 0.0
    %2756 = vmatpush1.msra.mxu0 0.0
    %2757 = vmatprep.subr.mxu0 0.0
    %2758 = vmatpush1.msra.mxu0 0.0
    %2759 = vmatprep.subr.mxu0 0.0
    %2760 = vmatpush1.msra.mxu0 0.0
    %2761 = vmatprep.subr.mxu0 0.0
    %2762 = vmatpush1.msra.mxu0 0.0
    %2763 = vmatprep.subr.mxu0 0.0
    %2764 = vmatpush1.msra.mxu0 0.0
    %2765 = vmatprep.subr.mxu0 0.0
    %2766 = vmatpush1.msra.mxu0 0.0
    %2767 = vmatprep.subr.mxu0 0.0
    %2768 = vmatpush1.msra.mxu0 0.0
    %2769 = vmatprep.subr.mxu0 0.0
    %2770 = vmatpush1.msra.mxu0 0.0
    %2771 = vmatprep.subr.mxu0 0.0
    %2772 = vmatpush1.msra.mxu0 0.0
    %2773 = vmatprep.subr.mxu0 0.0
    %2774 = vmatpush1.msra.mxu0 0.0
    %2775 = vmatprep.subr.mxu0 0.0
    %2776 = vmatpush1.msra.mxu0 0.0
    %2777 = vmatprep.subr.mxu0 0.0
    %2778 = vmatpush1.msra.mxu0 0.0
    %2779 = vmatprep.subr.mxu0 0.0
    %2780 = vmatpush1.msra.mxu0 0.0
    %2781 = vmatprep.subr.mxu0 0.0
    %2782 = vmatpush1.msra.mxu0 0.0
    %2783 = vmatprep.subr.mxu0 0.0
    %2784 = vmatpush1.msra.mxu0 0.0
    %2785 = vmatprep.subr.mxu0 0.0
    %2786 = vmatpush1.msra.mxu0 0.0
    %2787 = vmatprep.subr.mxu0 0.0
    %2788 = vmatpush1.msra.mxu0 0.0
    %2789 = vmatprep.subr.mxu0 0.0
    %2790 = vmatpush1.msra.mxu0 0.0
    %2791 = vmatprep.subr.mxu0 0.0
    %2792 = vmatpush1.msra.mxu0 0.0
    %2793 = vmatprep.subr.mxu0 0.0
    %2794 = vmatpush1.msra.mxu0 0.0
    %2795 = vmatprep.subr.mxu0 0.0
    %2796 = vmatpush1.msra.mxu0 0.0
    %2797 = vmatprep.subr.mxu0 0.0
    %2798 = vmatpush1.msra.mxu0 0.0
    %2799 = vmatprep.subr.mxu0 0.0
    %2800 = vmatpush1.msra.mxu0 0.0
    %2801 = vmatprep.subr.mxu0 0.0
    %2802 = vmatpush1.msra.mxu0 0.0
    %2803 = vmatprep.subr.mxu0 0.0
    %2804 = vmatpush1.msra.mxu0 0.0
    %2805 = vmatprep.subr.mxu0 0.0
    %2806 = vmatpush1.msra.mxu0 0.0
    %2807 = vmatprep.subr.mxu0 0.0
    %2808 = vmatpush1.msra.mxu0 0.0
    %2809 = vmatprep.subr.mxu0 0.0
    %2810 = vmatpush1.msra.mxu0 0.0
    %2811 = vmatprep.subr.mxu0 0.0
    %2812 = vmatpush1.msra.mxu0 0.0
    %2813 = vmatprep.subr.mxu0 0.0
    %2814 = vmatpush1.msra.mxu0 0.0
    %2815 = vmatprep.subr.mxu0 0.0
    %2816 = vmatpush1.msra.mxu0 0.0
    %2817 = vmatprep.mubr.f32.mxu0 0.0
    %2818 = vmatmul.mubr.f32.gmra.mrb[0].mxu0 %v2744
    %v2819 = vpop.f32.mrb[0].mxu0
    %v2820 = vadd.f32 0.0, %v2819
    %v2821 = vpop.f32.mrb[0].mxu0
    %v2822 = vadd.f32 0.0, %v2821
    %2823 = vmatprep.mubr.f32.mxu0 0.0
    %2824 = vmatmul.mubr.f32.gmra.mrb[0].mxu0 %v2747
    %v2825 = vpop.f32.mrb[0].mxu0
    %v2826 = vadd.f32 0.0, %v2825
    %v2827 = vpop.f32.mrb[0].mxu0
    %v2828 = vadd.f32 0.0, %v2827
    %2829 = vdwg.mxu0
    %v2830 = vadd.f32 %v2727, %v2820
    %v2831 = vadd.f32 %v2728, %v2822
    %v2832 = vadd.f32 %v2729, %v2826
    %v2833 = vadd.f32 %v2730, %v2828
    %s2834 = scalar_lea.vmem %s3, 336
    %v2835 = vld [vmem:[%s2834] sm:$0xff]
    %v2836 = vld [vmem:[%s2834 + $0x8] sm:$0xff]
    %2837 = vrot.lane.b32.xlu0 %v708, 79
    %v2838 = vpop.permute.xlu0 %2837
    %2839 = vrot.lane.b32.xlu0 %v709, 79
    %v2840 = vpop.permute.xlu0 %2839
    %2841 = vrot.lane.b32.xlu0 %v710, 79
    %v2842 = vpop.permute.xlu0 %2841
    %vm2843 = vcmask 646144
    %v2844 = vsel %vm2843, %v2838, %v2840
    %v2845 = vsel %vm2843, %v2840, %v2842
    %v2847 = vsel %vm724, %v2835, 0
    %v2850 = vsel %vm724, %v2836, 0
    %v2852 = vsel %vm731, %v2844, 0
    %v2854 = vsel %vm731, %v2845, 0
    %2856 = vmatprep.subr.mxu0 %v2854
    %2857 = vmatpush1.msra.mxu0 %v2852
    %2858 = vmatprep.subr.mxu0 0.0
    %2859 = vmatpush1.msra.mxu0 0.0
    %2860 = vmatprep.subr.mxu0 0.0
    %2861 = vmatpush1.msra.mxu0 0.0
    %2862 = vmatprep.subr.mxu0 0.0
    %2863 = vmatpush1.msra.mxu0 0.0
    %2864 = vmatprep.subr.mxu0 0.0
    %2865 = vmatpush1.msra.mxu0 0.0
    %2866 = vmatprep.subr.mxu0 0.0
    %2867 = vmatpush1.msra.mxu0 0.0
    %2868 = vmatprep.subr.mxu0 0.0
    %2869 = vmatpush1.msra.mxu0 0.0
    %2870 = vmatprep.subr.mxu0 0.0
    %2871 = vmatpush1.msra.mxu0 0.0
    %2872 = vmatprep.subr.mxu0 0.0
    %2873 = vmatpush1.msra.mxu0 0.0
    %2874 = vmatprep.subr.mxu0 0.0
    %2875 = vmatpush1.msra.mxu0 0.0
    %2876 = vmatprep.subr.mxu0 0.0
    %2877 = vmatpush1.msra.mxu0 0.0
    %2878 = vmatprep.subr.mxu0 0.0
    %2879 = vmatpush1.msra.mxu0 0.0
    %2880 = vmatprep.subr.mxu0 0.0
    %2881 = vmatpush1.msra.mxu0 0.0
    %2882 = vmatprep.subr.mxu0 0.0
    %2883 = vmatpush1.msra.mxu0 0.0
    %2884 = vmatprep.subr.mxu0 0.0
    %2885 = vmatpush1.msra.mxu0 0.0
    %2886 = vmatprep.subr.mxu0 0.0
    %2887 = vmatpush1.msra.mxu0 0.0
    %2888 = vmatprep.subr.mxu0 0.0
    %2889 = vmatpush1.msra.mxu0 0.0
    %2890 = vmatprep.subr.mxu0 0.0
    %2891 = vmatpush1.msra.mxu0 0.0
    %2892 = vmatprep.subr.mxu0 0.0
    %2893 = vmatpush1.msra.mxu0 0.0
    %2894 = vmatprep.subr.mxu0 0.0
    %2895 = vmatpush1.msra.mxu0 0.0
    %2896 = vmatprep.subr.mxu0 0.0
    %2897 = vmatpush1.msra.mxu0 0.0
    %2898 = vmatprep.subr.mxu0 0.0
    %2899 = vmatpush1.msra.mxu0 0.0
    %2900 = vmatprep.subr.mxu0 0.0
    %2901 = vmatpush1.msra.mxu0 0.0
    %2902 = vmatprep.subr.mxu0 0.0
    %2903 = vmatpush1.msra.mxu0 0.0
    %2904 = vmatprep.subr.mxu0 0.0
    %2905 = vmatpush1.msra.mxu0 0.0
    %2906 = vmatprep.subr.mxu0 0.0
    %2907 = vmatpush1.msra.mxu0 0.0
    %2908 = vmatprep.subr.mxu0 0.0
    %2909 = vmatpush1.msra.mxu0 0.0
    %2910 = vmatprep.subr.mxu0 0.0
    %2911 = vmatpush1.msra.mxu0 0.0
    %2912 = vmatprep.subr.mxu0 0.0
    %2913 = vmatpush1.msra.mxu0 0.0
    %2914 = vmatprep.subr.mxu0 0.0
    %2915 = vmatpush1.msra.mxu0 0.0
    %2916 = vmatprep.subr.mxu0 0.0
    %2917 = vmatpush1.msra.mxu0 0.0
    %2918 = vmatprep.subr.mxu0 0.0
    %2919 = vmatpush1.msra.mxu0 0.0
    %2920 = vmatprep.mubr.f32.mxu0 0.0
    %2921 = vmatmul.mubr.f32.gmra.mrb[0].mxu0 %v2847
    %v2922 = vpop.f32.mrb[0].mxu0
    %v2923 = vadd.f32 0.0, %v2922
    %v2924 = vpop.f32.mrb[0].mxu0
    %v2925 = vadd.f32 0.0, %v2924
    %2926 = vmatprep.mubr.f32.mxu0 0.0
    %2927 = vmatmul.mubr.f32.gmra.mrb[0].mxu0 %v2850
    %v2928 = vpop.f32.mrb[0].mxu0
    %v2929 = vadd.f32 0.0, %v2928
    %v2930 = vpop.f32.mrb[0].mxu0
    %v2931 = vadd.f32 0.0, %v2930
    %2932 = vdwg.mxu0
    %v2933 = vadd.f32 %v2830, %v2923
    %v2934 = vadd.f32 %v2831, %v2925
    %v2935 = vadd.f32 %v2832, %v2929
    %v2936 = vadd.f32 %v2833, %v2931
    %s2937 = scalar_lea.vmem %s3, 352
    %v2938 = vld [vmem:[%s2937] sm:$0xff]
    %v2939 = vld [vmem:[%s2937 + $0x8] sm:$0xff]
    %2940 = vrot.lane.b32.xlu0 %v708, 78
    %v2941 = vpop.permute.xlu0 %2940
    %2942 = vrot.lane.b32.xlu0 %v709, 78
    %v2943 = vpop.permute.xlu0 %2942
    %2944 = vrot.lane.b32.xlu0 %v710, 78
    %v2945 = vpop.permute.xlu0 %2944
    %vm2946 = vcmask 637952
    %v2947 = vsel %vm2946, %v2941, %v2943
    %v2948 = vsel %vm2946, %v2943, %v2945
    %v2950 = vsel %vm724, %v2938, 0
    %v2953 = vsel %vm724, %v2939, 0
    %v2955 = vsel %vm731, %v2947, 0
    %v2957 = vsel %vm731, %v2948, 0
    %2959 = vmatprep.subr.mxu0 %v2957
    %2960 = vmatpush1.msra.mxu0 %v2955
    %2961 = vmatprep.subr.mxu0 0.0
    %2962 = vmatpush1.msra.mxu0 0.0
    %2963 = vmatprep.subr.mxu0 0.0
    %2964 = vmatpush1.msra.mxu0 0.0
    %2965 = vmatprep.subr.mxu0 0.0
    %2966 = vmatpush1.msra.mxu0 0.0
    %2967 = vmatprep.subr.mxu0 0.0
    %2968 = vmatpush1.msra.mxu0 0.0
    %2969 = vmatprep.subr.mxu0 0.0
    %2970 = vmatpush1.msra.mxu0 0.0
    %2971 = vmatprep.subr.mxu0 0.0
    %2972 = vmatpush1.msra.mxu0 0.0
    %2973 = vmatprep.subr.mxu0 0.0
    %2974 = vmatpush1.msra.mxu0 0.0
    %2975 = vmatprep.subr.mxu0 0.0
    %2976 = vmatpush1.msra.mxu0 0.0
    %2977 = vmatprep.subr.mxu0 0.0
    %2978 = vmatpush1.msra.mxu0 0.0
    %2979 = vmatprep.subr.mxu0 0.0
    %2980 = vmatpush1.msra.mxu0 0.0
    %2981 = vmatprep.subr.mxu0 0.0
    %2982 = vmatpush1.msra.mxu0 0.0
    %2983 = vmatprep.subr.mxu0 0.0
    %2984 = vmatpush1.msra.mxu0 0.0
    %2985 = vmatprep.subr.mxu0 0.0
    %2986 = vmatpush1.msra.mxu0 0.0
    %2987 = vmatprep.subr.mxu0 0.0
    %2988 = vmatpush1.msra.mxu0 0.0
    %2989 = vmatprep.subr.mxu0 0.0
    %2990 = vmatpush1.msra.mxu0 0.0
    %2991 = vmatprep.subr.mxu0 0.0
    %2992 = vmatpush1.msra.mxu0 0.0
    %2993 = vmatprep.subr.mxu0 0.0
    %2994 = vmatpush1.msra.mxu0 0.0
    %2995 = vmatprep.subr.mxu0 0.0
    %2996 = vmatpush1.msra.mxu0 0.0
    %2997 = vmatprep.subr.mxu0 0.0
    %2998 = vmatpush1.msra.mxu0 0.0
    %2999 = vmatprep.subr.mxu0 0.0
    %3000 = vmatpush1.msra.mxu0 0.0
    %3001 = vmatprep.subr.mxu0 0.0
    %3002 = vmatpush1.msra.mxu0 0.0
    %3003 = vmatprep.subr.mxu0 0.0
    %3004 = vmatpush1.msra.mxu0 0.0
    %3005 = vmatprep.subr.mxu0 0.0
    %3006 = vmatpush1.msra.mxu0 0.0
    %3007 = vmatprep.subr.mxu0 0.0
    %3008 = vmatpush1.msra.mxu0 0.0
    %3009 = vmatprep.subr.mxu0 0.0
    %3010 = vmatpush1.msra.mxu0 0.0
    %3011 = vmatprep.subr.mxu0 0.0
    %3012 = vmatpush1.msra.mxu0 0.0
    %3013 = vmatprep.subr.mxu0 0.0
    %3014 = vmatpush1.msra.mxu0 0.0
    %3015 = vmatprep.subr.mxu0 0.0
    %3016 = vmatpush1.msra.mxu0 0.0
    %3017 = vmatprep.subr.mxu0 0.0
    %3018 = vmatpush1.msra.mxu0 0.0
    %3019 = vmatprep.subr.mxu0 0.0
    %3020 = vmatpush1.msra.mxu0 0.0
    %3021 = vmatprep.subr.mxu0 0.0
    %3022 = vmatpush1.msra.mxu0 0.0
    %3023 = vmatprep.mubr.f32.mxu0 0.0
    %3024 = vmatmul.mubr.f32.gmra.mrb[0].mxu0 %v2950
    %v3025 = vpop.f32.mrb[0].mxu0
    %v3026 = vadd.f32 0.0, %v3025
    %v3027 = vpop.f32.mrb[0].mxu0
    %v3028 = vadd.f32 0.0, %v3027
    %3029 = vmatprep.mubr.f32.mxu0 0.0
    %3030 = vmatmul.mubr.f32.gmra.mrb[0].mxu0 %v2953
    %v3031 = vpop.f32.mrb[0].mxu0
    %v3032 = vadd.f32 0.0, %v3031
    %v3033 = vpop.f32.mrb[0].mxu0
    %v3034 = vadd.f32 0.0, %v3033
    %3035 = vdwg.mxu0
    %v3036 = vadd.f32 %v2933, %v3026
    %v3037 = vadd.f32 %v2934, %v3028
    %v3038 = vadd.f32 %v2935, %v3032
    %v3039 = vadd.f32 %v2936, %v3034
    %s3040 = scalar_lea.vmem %s3, 368
    %v3041 = vld [vmem:[%s3040] sm:$0xff]
    %v3042 = vld [vmem:[%s3040 + $0x8] sm:$0xff]
    %3043 = vrot.lane.b32.xlu0 %v708, 77
    %v3044 = vpop.permute.xlu0 %3043
    %3045 = vrot.lane.b32.xlu0 %v709, 77
    %v3046 = vpop.permute.xlu0 %3045
    %3047 = vrot.lane.b32.xlu0 %v710, 77
    %v3048 = vpop.permute.xlu0 %3047
    %vm3049 = vcmask 629760
    %v3050 = vsel %vm3049, %v3044, %v3046
    %v3051 = vsel %vm3049, %v3046, %v3048
    %v3053 = vsel %vm724, %v3041, 0
    %v3056 = vsel %vm724, %v3042, 0
    %v3058 = vsel %vm731, %v3050, 0
    %v3060 = vsel %vm731, %v3051, 0
    %3062 = vmatprep.subr.mxu0 %v3060
    %3063 = vmatpush1.msra.mxu0 %v3058
    %3064 = vmatprep.subr.mxu0 0.0
    %3065 = vmatpush1.msra.mxu0 0.0
    %3066 = vmatprep.subr.mxu0 0.0
    %3067 = vmatpush1.msra.mxu0 0.0
    %3068 = vmatprep.subr.mxu0 0.0
    %3069 = vmatpush1.msra.mxu0 0.0
    %3070 = vmatprep.subr.mxu0 0.0
    %3071 = vmatpush1.msra.mxu0 0.0
    %3072 = vmatprep.subr.mxu0 0.0
    %3073 = vmatpush1.msra.mxu0 0.0
    %3074 = vmatprep.subr.mxu0 0.0
    %3075 = vmatpush1.msra.mxu0 0.0
    %3076 = vmatprep.subr.mxu0 0.0
    %3077 = vmatpush1.msra.mxu0 0.0
    %3078 = vmatprep.subr.mxu0 0.0
    %3079 = vmatpush1.msra.mxu0 0.0
    %3080 = vmatprep.subr.mxu0 0.0
    %3081 = vmatpush1.msra.mxu0 0.0
    %3082 = vmatprep.subr.mxu0 0.0
    %3083 = vmatpush1.msra.mxu0 0.0
    %3084 = vmatprep.subr.mxu0 0.0
    %3085 = vmatpush1.msra.mxu0 0.0
    %3086 = vmatprep.subr.mxu0 0.0
    %3087 = vmatpush1.msra.mxu0 0.0
    %3088 = vmatprep.subr.mxu0 0.0
    %3089 = vmatpush1.msra.mxu0 0.0
    %3090 = vmatprep.subr.mxu0 0.0
    %3091 = vmatpush1.msra.mxu0 0.0
    %3092 = vmatprep.subr.mxu0 0.0
    %3093 = vmatpush1.msra.mxu0 0.0
    %3094 = vmatprep.subr.mxu0 0.0
    %3095 = vmatpush1.msra.mxu0 0.0
    %3096 = vmatprep.subr.mxu0 0.0
    %3097 = vmatpush1.msra.mxu0 0.0
    %3098 = vmatprep.subr.mxu0 0.0
    %3099 = vmatpush1.msra.mxu0 0.0
    %3100 = vmatprep.subr.mxu0 0.0
    %3101 = vmatpush1.msra.mxu0 0.0
    %3102 = vmatprep.subr.mxu0 0.0
    %3103 = vmatpush1.msra.mxu0 0.0
    %3104 = vmatprep.subr.mxu0 0.0
    %3105 = vmatpush1.msra.mxu0 0.0
    %3106 = vmatprep.subr.mxu0 0.0
    %3107 = vmatpush1.msra.mxu0 0.0
    %3108 = vmatprep.subr.mxu0 0.0
    %3109 = vmatpush1.msra.mxu0 0.0
    %3110 = vmatprep.subr.mxu0 0.0
    %3111 = vmatpush1.msra.mxu0 0.0
    %3112 = vmatprep.subr.mxu0 0.0
    %3113 = vmatpush1.msra.mxu0 0.0
    %3114 = vmatprep.subr.mxu0 0.0
    %3115 = vmatpush1.msra.mxu0 0.0
    %3116 = vmatprep.subr.mxu0 0.0
    %3117 = vmatpush1.msra.mxu0 0.0
    %3118 = vmatprep.subr.mxu0 0.0
    %3119 = vmatpush1.msra.mxu0 0.0
    %3120 = vmatprep.subr.mxu0 0.0
    %3121 = vmatpush1.msra.mxu0 0.0
    %3122 = vmatprep.subr.mxu0 0.0
    %3123 = vmatpush1.msra.mxu0 0.0
    %3124 = vmatprep.subr.mxu0 0.0
    %3125 = vmatpush1.msra.mxu0 0.0
    %3126 = vmatprep.mubr.f32.mxu0 0.0
    %3127 = vmatmul.mubr.f32.gmra.mrb[0].mxu0 %v3053
    %v3128 = vpop.f32.mrb[0].mxu0
    %v3129 = vadd.f32 0.0, %v3128
    %v3130 = vpop.f32.mrb[0].mxu0
    %v3131 = vadd.f32 0.0, %v3130
    %3132 = vmatprep.mubr.f32.mxu0 0.0
    %3133 = vmatmul.mubr.f32.gmra.mrb[0].mxu0 %v3056
    %v3134 = vpop.f32.mrb[0].mxu0
    %v3135 = vadd.f32 0.0, %v3134
    %v3136 = vpop.f32.mrb[0].mxu0
    %v3137 = vadd.f32 0.0, %v3136
    %3138 = vdwg.mxu0
    %v3139 = vadd.f32 %v3036, %v3129
    %v3140 = vadd.f32 %v3037, %v3131
    %v3141 = vadd.f32 %v3038, %v3135
    %v3142 = vadd.f32 %v3039, %v3137
    %s3143 = scalar_lea.vmem %s3, 384
    %v3144 = vld [vmem:[%s3143] sm:$0xff]
    %v3145 = vld [vmem:[%s3143 + $0x8] sm:$0xff]
    %3146 = vrot.lane.b32.xlu0 %v708, 76
    %v3147 = vpop.permute.xlu0 %3146
    %3148 = vrot.lane.b32.xlu0 %v709, 76
    %v3149 = vpop.permute.xlu0 %3148
    %3150 = vrot.lane.b32.xlu0 %v710, 76
    %v3151 = vpop.permute.xlu0 %3150
    %vm3152 = vcmask 621568
    %v3153 = vsel %vm3152, %v3147, %v3149
    %v3154 = vsel %vm3152, %v3149, %v3151
    %v3156 = vsel %vm724, %v3144, 0
    %v3159 = vsel %vm724, %v3145, 0
    %v3161 = vsel %vm731, %v3153, 0
    %v3163 = vsel %vm731, %v3154, 0
    %3165 = vmatprep.subr.mxu0 %v3163
    %3166 = vmatpush1.msra.mxu0 %v3161
    %3167 = vmatprep.subr.mxu0 0.0
    %3168 = vmatpush1.msra.mxu0 0.0
    %3169 = vmatprep.subr.mxu0 0.0
    %3170 = vmatpush1.msra.mxu0 0.0
    %3171 = vmatprep.subr.mxu0 0.0
    %3172 = vmatpush1.msra.mxu0 0.0
    %3173 = vmatprep.subr.mxu0 0.0
    %3174 = vmatpush1.msra.mxu0 0.0
    %3175 = vmatprep.subr.mxu0 0.0
    %3176 = vmatpush1.msra.mxu0 0.0
    %3177 = vmatprep.subr.mxu0 0.0
    %3178 = vmatpush1.msra.mxu0 0.0
    %3179 = vmatprep.subr.mxu0 0.0
    %3180 = vmatpush1.msra.mxu0 0.0
    %3181 = vmatprep.subr.mxu0 0.0
    %3182 = vmatpush1.msra.mxu0 0.0
    %3183 = vmatprep.subr.mxu0 0.0
    %3184 = vmatpush1.msra.mxu0 0.0
    %3185 = vmatprep.subr.mxu0 0.0
    %3186 = vmatpush1.msra.mxu0 0.0
    %3187 = vmatprep.subr.mxu0 0.0
    %3188 = vmatpush1.msra.mxu0 0.0
    %3189 = vmatprep.subr.mxu0 0.0
    %3190 = vmatpush1.msra.mxu0 0.0
    %3191 = vmatprep.subr.mxu0 0.0
    %3192 = vmatpush1.msra.mxu0 0.0
    %3193 = vmatprep.subr.mxu0 0.0
    %3194 = vmatpush1.msra.mxu0 0.0
    %3195 = vmatprep.subr.mxu0 0.0
    %3196 = vmatpush1.msra.mxu0 0.0
    %3197 = vmatprep.subr.mxu0 0.0
    %3198 = vmatpush1.msra.mxu0 0.0
    %3199 = vmatprep.subr.mxu0 0.0
    %3200 = vmatpush1.msra.mxu0 0.0
    %3201 = vmatprep.subr.mxu0 0.0
    %3202 = vmatpush1.msra.mxu0 0.0
    %3203 = vmatprep.subr.mxu0 0.0
    %3204 = vmatpush1.msra.mxu0 0.0
    %3205 = vmatprep.subr.mxu0 0.0
    %3206 = vmatpush1.msra.mxu0 0.0
    %3207 = vmatprep.subr.mxu0 0.0
    %3208 = vmatpush1.msra.mxu0 0.0
    %3209 = vmatprep.subr.mxu0 0.0
    %3210 = vmatpush1.msra.mxu0 0.0
    %3211 = vmatprep.subr.mxu0 0.0
    %3212 = vmatpush1.msra.mxu0 0.0
    %3213 = vmatprep.subr.mxu0 0.0
    %3214 = vmatpush1.msra.mxu0 0.0
    %3215 = vmatprep.subr.mxu0 0.0
    %3216 = vmatpush1.msra.mxu0 0.0
    %3217 = vmatprep.subr.mxu0 0.0
    %3218 = vmatpush1.msra.mxu0 0.0
    %3219 = vmatprep.subr.mxu0 0.0
    %3220 = vmatpush1.msra.mxu0 0.0
    %3221 = vmatprep.subr.mxu0 0.0
    %3222 = vmatpush1.msra.mxu0 0.0
    %3223 = vmatprep.subr.mxu0 0.0
    %3224 = vmatpush1.msra.mxu0 0.0
    %3225 = vmatprep.subr.mxu0 0.0
    %3226 = vmatpush1.msra.mxu0 0.0
    %3227 = vmatprep.subr.mxu0 0.0
    %3228 = vmatpush1.msra.mxu0 0.0
    %3229 = vmatprep.mubr.f32.mxu0 0.0
    %3230 = vmatmul.mubr.f32.gmra.mrb[0].mxu0 %v3156
    %v3231 = vpop.f32.mrb[0].mxu0
    %v3232 = vadd.f32 0.0, %v3231
    %v3233 = vpop.f32.mrb[0].mxu0
    %v3234 = vadd.f32 0.0, %v3233
    %3235 = vmatprep.mubr.f32.mxu0 0.0
    %3236 = vmatmul.mubr.f32.gmra.mrb[0].mxu0 %v3159
    %v3237 = vpop.f32.mrb[0].mxu0
    %v3238 = vadd.f32 0.0, %v3237
    %v3239 = vpop.f32.mrb[0].mxu0
    %v3240 = vadd.f32 0.0, %v3239
    %3241 = vdwg.mxu0
    %v3242 = vadd.f32 %v3139, %v3232
    %v3243 = vadd.f32 %v3140, %v3234
    %v3244 = vadd.f32 %v3141, %v3238
    %v3245 = vadd.f32 %v3142, %v3240
    %v3246 = vld [vmem:[%s5] sm:$0xff]
    %v3247 = vld [vmem:[%s5 + $0x8] sm:$0xff]
    %v3248 = vld [vmem:[%s5 + $0x10] sm:$0xff]
    %v3249 = vld [vmem:[%s5 + $0x18] sm:$0xff]
    %v3250 = vld [vmem:[%s5 + $0x20] sm:$0xff]
    %v3251 = vld [vmem:[%s5 + $0x28] sm:$0xff]
    %v3252 = vld [vmem:[%s5 + $0x30] sm:$0xff]
    %v3253 = vld [vmem:[%s5 + $0x38] sm:$0xff]
    %v3254 = vld [vmem:[%s5 + $0x40] sm:$0xff]
    %v3255 = vld [vmem:[%s5 + $0x48] sm:$0xff]
    %v3256 = vld [vmem:[%s5 + $0x50] sm:$0xff]
    %v3257 = vld [vmem:[%s5 + $0x58] sm:$0xff]
    %v3258 = vld [vmem:[%s5 + $0x60] sm:$0xff]
    %v3259 = vld [vmem:[%s5 + $0x68] sm:$0xff]
    %v3260 = vld [vmem:[%s5 + $0x70] sm:$0xff]
    %v3261 = vld [vmem:[%s5 + $0x78] sm:$0xff]
    %v3262 = vld [vmem:[%s5 + $0x80] sm:$0xff]
    %v3263 = vld [vmem:[%s5 + $0x88] sm:$0xff]
    %v3264 = vld [vmem:[%s5 + $0x90] sm:$0xff]
    %v3265 = vld [vmem:[%s5 + $0x98] sm:$0xff]
    %v3266 = vld [vmem:[%s5 + $0xa0] sm:$0xff]
    %v3267 = vld [vmem:[%s5 + $0xa8] sm:$0xff]
    %v3268 = vld [vmem:[%s5 + $0xb0] sm:$0xff]
    %v3269 = vld [vmem:[%s5 + $0xb8] sm:$0xff]
    %v3270 = vld [vmem:[%s5 + $0xc0] sm:$0xff]
    %v3271 = vld [vmem:[%s5 + $0xc8] sm:$0xff]
    %v3272 = vld [vmem:[%s5 + $0xd0] sm:$0xff]
    %v3273 = vld [vmem:[%s5 + $0xd8] sm:$0xff]
    %v3274 = vld [vmem:[%s5 + $0xe0] sm:$0xff]
    %v3275 = vld [vmem:[%s5 + $0xe8] sm:$0xf]
    %vm3276 = vcmask 883712
    %v3278 = vsel %vm3276, %v3243, 0
    %v3281 = vsel %vm3276, %v3245, 0
    %vm3283 = vcmask 1043456
    %v3285 = vsel %vm3283, %v3275, 0
    %3287 = vmatprep.subr.mxu0 0.0
    %3288 = vmatpush1.msra.mxu0 %v3246
    %3289 = vmatprep.subr.mxu0 0.0
    %3290 = vmatpush1.msra.mxu0 %v3247
    %3291 = vmatprep.subr.mxu0 0.0
    %3292 = vmatpush1.msra.mxu0 %v3248
    %3293 = vmatprep.subr.mxu0 0.0
    %3294 = vmatpush1.msra.mxu0 %v3249
    %3295 = vmatprep.subr.mxu0 0.0
    %3296 = vmatpush1.msra.mxu0 %v3250
    %3297 = vmatprep.subr.mxu0 0.0
    %3298 = vmatpush1.msra.mxu0 %v3251
    %3299 = vmatprep.subr.mxu0 0.0
    %3300 = vmatpush1.msra.mxu0 %v3252
    %3301 = vmatprep.subr.mxu0 0.0
    %3302 = vmatpush1.msra.mxu0 %v3253
    %3303 = vmatprep.subr.mxu0 0.0
    %3304 = vmatpush1.msra.mxu0 %v3254
    %3305 = vmatprep.subr.mxu0 0.0
    %3306 = vmatpush1.msra.mxu0 %v3255
    %3307 = vmatprep.subr.mxu0 0.0
    %3308 = vmatpush1.msra.mxu0 %v3256
    %3309 = vmatprep.subr.mxu0 0.0
    %3310 = vmatpush1.msra.mxu0 %v3257
    %3311 = vmatprep.subr.mxu0 0.0
    %3312 = vmatpush1.msra.mxu0 %v3258
    %3313 = vmatprep.subr.mxu0 0.0
    %3314 = vmatpush1.msra.mxu0 %v3259
    %3315 = vmatprep.subr.mxu0 0.0
    %3316 = vmatpush1.msra.mxu0 %v3260
    %3317 = vmatprep.subr.mxu0 0.0
    %3318 = vmatpush1.msra.mxu0 %v3261
    %3319 = vmatprep.subr.mxu0 0.0
    %3320 = vmatpush1.msra.mxu0 %v3262
    %3321 = vmatprep.subr.mxu0 0.0
    %3322 = vmatpush1.msra.mxu0 %v3263
    %3323 = vmatprep.subr.mxu0 0.0
    %3324 = vmatpush1.msra.mxu0 %v3264
    %3325 = vmatprep.subr.mxu0 0.0
    %3326 = vmatpush1.msra.mxu0 %v3265
    %3327 = vmatprep.subr.mxu0 0.0
    %3328 = vmatpush1.msra.mxu0 %v3266
    %3329 = vmatprep.subr.mxu0 0.0
    %3330 = vmatpush1.msra.mxu0 %v3267
    %3331 = vmatprep.subr.mxu0 0.0
    %3332 = vmatpush1.msra.mxu0 %v3268
    %3333 = vmatprep.subr.mxu0 0.0
    %3334 = vmatpush1.msra.mxu0 %v3269
    %3335 = vmatprep.subr.mxu0 0.0
    %3336 = vmatpush1.msra.mxu0 %v3270
    %3337 = vmatprep.subr.mxu0 0.0
    %3338 = vmatpush1.msra.mxu0 %v3271
    %3339 = vmatprep.subr.mxu0 0.0
    %3340 = vmatpush1.msra.mxu0 %v3272
    %3341 = vmatprep.subr.mxu0 0.0
    %3342 = vmatpush1.msra.mxu0 %v3273
    %3343 = vmatprep.subr.mxu0 0.0
    %3344 = vmatpush1.msra.mxu0 %v3274
    %3345 = vmatprep.subr.mxu0 0.0
    %3346 = vmatpush1.msra.mxu0 %v3285
    %3347 = vmatprep.subr.mxu0 0.0
    %3348 = vmatpush1.msra.mxu0 0.0
    %3349 = vmatprep.subr.mxu0 0.0
    %3350 = vmatpush1.msra.mxu0 0.0
    %3351 = vmatprep.mubr.f32.mxu0 %v3278
    %3352 = vmatmul.mubr.f32.gmra.mrb[0].mxu0 %v3242
    %v3353 = vpop.f32.mrb[0].mxu0
    %v3354 = vadd.f32 0.0, %v3353
    %v3355 = vpop.f32.mrb[0].mxu0
    %3356 = vmatprep.mubr.f32.mxu0 %v3281
    %3357 = vmatmul.mubr.f32.gmra.mrb[0].mxu0 %v3244
    %v3358 = vpop.f32.mrb[0].mxu0
    %v3359 = vadd.f32 0.0, %v3358
    %v3360 = vpop.f32.mrb[0].mxu0
    %3361 = vdwg.mxu0
    %3364 = vrot.lane.b32.xlu0 %v3354, 96
    %v3365 = vpop.permute.xlu0 %3364
    %3366 = vrot.lane.b32.xlu0 %v3359, 96
    %v3367 = vpop.permute.xlu0 %3366
    %v3370 = vmax.f32 %v3354, %v3365
    %v3371 = vmax.f32 %v3359, %v3367
    %3374 = vrot.lane.b32.xlu0 %v3370, 64
    %v3375 = vpop.permute.xlu0 %3374
    %3376 = vrot.lane.b32.xlu0 %v3371, 64
    %v3377 = vpop.permute.xlu0 %3376
    %v3380 = vmax.f32 %v3370, %v3375
    %v3381 = vmax.f32 %v3371, %v3377
    %v3382 = vld [vmem:[%s4] sm:$0xff]
    %v3383 = vld [vmem:[%s4 + $0x8] sm:$0xff]
    %3385 = vset.pattern.permute.xlu0 0
    %3386 = vperm.xlu0 %3385, %v3382
    %v3387 = vpop.permute.xlu0 %3386
    %3390 = vset.pattern.permute.xlu0 0
    %3391 = vperm.xlu0 %3390, %v3383
    %v3392 = vpop.permute.xlu0 %3391
    %v3394 = vadd.f32 %v3380, %v3387
    %v3395 = vadd.f32 %v3381, %v3392
    %v3396 = vmax.f32 %v3394, 0.0
    %v3397 = vmax.f32 %v3395, 0.0
    %v3399 = vrot.slane %v3396, 1
    %3400 = vrot.lane.b32.xlu0 %v3399, 16
    %v3401 = vpop.permute.xlu0 %3400
    %v3403 = vrot.slane %v3396, 2
    %3404 = vrot.lane.b32.xlu0 %v3403, 32
    %v3405 = vpop.permute.xlu0 %3404
    %v3407 = vrot.slane %v3396, 3
    %3408 = vrot.lane.b32.xlu0 %v3407, 48
    %v3409 = vpop.permute.xlu0 %3408
    %v3411 = vrot.slane %v3396, 4
    %3412 = vrot.lane.b32.xlu0 %v3411, 64
    %v3413 = vpop.permute.xlu0 %3412
    %v3415 = vrot.slane %v3396, 5
    %3416 = vrot.lane.b32.xlu0 %v3415, 80
    %v3417 = vpop.permute.xlu0 %3416
    %v3419 = vrot.slane %v3396, 6
    %3420 = vrot.lane.b32.xlu0 %v3419, 96
    %v3421 = vpop.permute.xlu0 %3420
    %v3423 = vrot.slane %v3396, 7
    %3424 = vrot.lane.b32.xlu0 %v3423, 112
    %v3425 = vpop.permute.xlu0 %3424
    %v3428 = vrot.slane %v3397, 1
    %3429 = vrot.lane.b32.xlu0 %v3428, 16
    %v3430 = vpop.permute.xlu0 %3429
    %v3432 = vrot.slane %v3397, 2
    %3433 = vrot.lane.b32.xlu0 %v3432, 32
    %v3434 = vpop.permute.xlu0 %3433
    %v3436 = vrot.slane %v3397, 3
    %3437 = vrot.lane.b32.xlu0 %v3436, 48
    %v3438 = vpop.permute.xlu0 %3437
    %v3440 = vrot.slane %v3397, 4
    %3441 = vrot.lane.b32.xlu0 %v3440, 64
    %v3442 = vpop.permute.xlu0 %3441
    %v3444 = vrot.slane %v3397, 5
    %3445 = vrot.lane.b32.xlu0 %v3444, 80
    %v3446 = vpop.permute.xlu0 %3445
    %v3448 = vrot.slane %v3397, 6
    %3449 = vrot.lane.b32.xlu0 %v3448, 96
    %v3450 = vpop.permute.xlu0 %3449
    %v3452 = vrot.slane %v3397, 7
    %3453 = vrot.lane.b32.xlu0 %v3452, 112
    %v3454 = vpop.permute.xlu0 %3453
    %vm3456 = vcmask 130048
    %v3457 = vsel %vm3456, %v3396, %v3401
    %vm3458 = vcmask 261120
    %v3459 = vsel %vm3458, %v3457, %v3405
    %vm3460 = vcmask 392192
    %v3461 = vsel %vm3460, %v3459, %v3409
    %vm3462 = vcmask 523264
    %v3463 = vsel %vm3462, %v3461, %v3413
    %v3464 = vsel %vm2740, %v3463, %v3417
    %vm3465 = vcmask 785408
    %v3466 = vsel %vm3465, %v3464, %v3421
    %v3467 = vsel %vm1607, %v3466, %v3425
    %v3468 = vsel %vm3456, %v3397, %v3430
    %v3469 = vsel %vm3458, %v3468, %v3434
    %v3470 = vsel %vm3460, %v3469, %v3438
    %v3471 = vsel %vm3462, %v3470, %v3442
    %v3472 = vsel %vm2740, %v3471, %v3446
    %v3473 = vsel %vm3465, %v3472, %v3450
    %v3474 = vsel %vm1607, %v3473, %v3454
    %3475 = vrot.lane.b32.xlu0 %v3396, 112
    %v3476 = vpop.permute.xlu0 %3475
    %3479 = vrot.lane.b32.xlu0 %v3403, 16
    %v3480 = vpop.permute.xlu0 %3479
    %3482 = vrot.lane.b32.xlu0 %v3407, 32
    %v3483 = vpop.permute.xlu0 %3482
    %3485 = vrot.lane.b32.xlu0 %v3411, 48
    %v3486 = vpop.permute.xlu0 %3485
    %3488 = vrot.lane.b32.xlu0 %v3415, 64
    %v3489 = vpop.permute.xlu0 %3488
    %3491 = vrot.lane.b32.xlu0 %v3419, 80
    %v3492 = vpop.permute.xlu0 %3491
    %3494 = vrot.lane.b32.xlu0 %v3423, 96
    %v3495 = vpop.permute.xlu0 %3494
    %3497 = vrot.lane.b32.xlu0 %v3397, 112
    %v3498 = vpop.permute.xlu0 %3497
    %3501 = vrot.lane.b32.xlu0 %v3432, 16
    %v3502 = vpop.permute.xlu0 %3501
    %3504 = vrot.lane.b32.xlu0 %v3436, 32
    %v3505 = vpop.permute.xlu0 %3504
    %3507 = vrot.lane.b32.xlu0 %v3440, 48
    %v3508 = vpop.permute.xlu0 %3507
    %3510 = vrot.lane.b32.xlu0 %v3444, 64
    %v3511 = vpop.permute.xlu0 %3510
    %3513 = vrot.lane.b32.xlu0 %v3448, 80
    %v3514 = vpop.permute.xlu0 %3513
    %3516 = vrot.lane.b32.xlu0 %v3452, 96
    %v3517 = vpop.permute.xlu0 %3516
    %v3519 = vsel %vm3456, %v3476, %v3399
    %v3520 = vsel %vm3458, %v3519, %v3480
    %v3521 = vsel %vm3460, %v3520, %v3483
    %v3522 = vsel %vm3462, %v3521, %v3486
    %v3523 = vsel %vm2740, %v3522, %v3489
    %v3524 = vsel %vm3465, %v3523, %v3492
    %v3525 = vsel %vm1607, %v3524, %v3495
    %v3526 = vsel %vm3456, %v3498, %v3428
    %v3527 = vsel %vm3458, %v3526, %v3502
    %v3528 = vsel %vm3460, %v3527, %v3505
    %v3529 = vsel %vm3462, %v3528, %v3508
    %v3530 = vsel %vm2740, %v3529, %v3511
    %v3531 = vsel %vm3465, %v3530, %v3514
    %v3532 = vsel %vm1607, %v3531, %v3517
    %v3535 = vrot.slane %v3525, 7
    %v3536 = vrot.slane %v3532, 7
    %v3539 = vsel %vm50, %v3467, %v3535
    %v3540 = vsel %vm50, %v3474, %v3536
    %v3541 = vld [vmem:[%s6] sm:$0xff]
    %v3542 = vld [vmem:[%s6 + $0x8] sm:$0xff]
    %v3543 = vld [vmem:[%s6 + $0x10] sm:$0xff]
    %v3544 = vld [vmem:[%s6 + $0x18] sm:$0xff]
    %v3545 = vld [vmem:[%s6 + $0x20] sm:$0xff]
    %v3546 = vld [vmem:[%s6 + $0x28] sm:$0xff]
    %v3547 = vld [vmem:[%s6 + $0x30] sm:$0xff]
    %v3548 = vld [vmem:[%s6 + $0x38] sm:$0xff]
    %v3549 = vld [vmem:[%s6 + $0x40] sm:$0xff]
    %v3550 = vld [vmem:[%s6 + $0x48] sm:$0xff]
    %v3551 = vld [vmem:[%s6 + $0x50] sm:$0xff]
    %v3552 = vld [vmem:[%s6 + $0x58] sm:$0xff]
    %v3553 = vld [vmem:[%s6 + $0x60] sm:$0xff]
    %v3554 = vld [vmem:[%s6 + $0x68] sm:$0xff]
    %v3555 = vld [vmem:[%s6 + $0x70] sm:$0xff]
    %v3556 = vld [vmem:[%s6 + $0x78] sm:$0xff]
    %v3557 = vld [vmem:[%s6 + $0x80] sm:$0xff]
    %v3558 = vld [vmem:[%s6 + $0x88] sm:$0xff]
    %v3559 = vld [vmem:[%s6 + $0x90] sm:$0xff]
    %v3560 = vld [vmem:[%s6 + $0x98] sm:$0xff]
    %v3561 = vld [vmem:[%s6 + $0xa0] sm:$0xff]
    %v3562 = vld [vmem:[%s6 + $0xa8] sm:$0xff]
    %v3563 = vld [vmem:[%s6 + $0xb0] sm:$0xff]
    %v3564 = vld [vmem:[%s6 + $0xb8] sm:$0xff]
    %v3565 = vld [vmem:[%s6 + $0xc0] sm:$0xff]
    %v3566 = vld [vmem:[%s6 + $0xc8] sm:$0xff]
    %v3567 = vld [vmem:[%s6 + $0xd0] sm:$0xff]
    %v3568 = vld [vmem:[%s6 + $0xd8] sm:$0xff]
    %v3569 = vld [vmem:[%s6 + $0xe0] sm:$0xff]
    %v3570 = vld [vmem:[%s6 + $0xe8] sm:$0xff]
    %v3571 = vld [vmem:[%s6 + $0xf0] sm:$0xff]
    %v3572 = vld [vmem:[%s6 + $0xf8] sm:$0xff]
    %3573 = vmatprep.subr.mxu0 0.0
    %3574 = vmatpush1.msra.mxu0 %v3541
    %3575 = vmatprep.subr.mxu0 0.0
    %3576 = vmatpush1.msra.mxu0 %v3542
    %3577 = vmatprep.subr.mxu0 0.0
    %3578 = vmatpush1.msra.mxu0 %v3543
    %3579 = vmatprep.subr.mxu0 0.0
    %3580 = vmatpush1.msra.mxu0 %v3544
    %3581 = vmatprep.subr.mxu0 0.0
    %3582 = vmatpush1.msra.mxu0 %v3545
    %3583 = vmatprep.subr.mxu0 0.0
    %3584 = vmatpush1.msra.mxu0 %v3546
    %3585 = vmatprep.subr.mxu0 0.0
    %3586 = vmatpush1.msra.mxu0 %v3547
    %3587 = vmatprep.subr.mxu0 0.0
    %3588 = vmatpush1.msra.mxu0 %v3548
    %3589 = vmatprep.subr.mxu0 0.0
    %3590 = vmatpush1.msra.mxu0 %v3549
    %3591 = vmatprep.subr.mxu0 0.0
    %3592 = vmatpush1.msra.mxu0 %v3550
    %3593 = vmatprep.subr.mxu0 0.0
    %3594 = vmatpush1.msra.mxu0 %v3551
    %3595 = vmatprep.subr.mxu0 0.0
    %3596 = vmatpush1.msra.mxu0 %v3552
    %3597 = vmatprep.subr.mxu0 0.0
    %3598 = vmatpush1.msra.mxu0 %v3553
    %3599 = vmatprep.subr.mxu0 0.0
    %3600 = vmatpush1.msra.mxu0 %v3554
    %3601 = vmatprep.subr.mxu0 0.0
    %3602 = vmatpush1.msra.mxu0 %v3555
    %3603 = vmatprep.subr.mxu0 0.0
    %3604 = vmatpush1.msra.mxu0 %v3556
    %3605 = vmatprep.subr.mxu0 0.0
    %3606 = vmatpush1.msra.mxu0 %v3557
    %3607 = vmatprep.subr.mxu0 0.0
    %3608 = vmatpush1.msra.mxu0 %v3558
    %3609 = vmatprep.subr.mxu0 0.0
    %3610 = vmatpush1.msra.mxu0 %v3559
    %3611 = vmatprep.subr.mxu0 0.0
    %3612 = vmatpush1.msra.mxu0 %v3560
    %3613 = vmatprep.subr.mxu0 0.0
    %3614 = vmatpush1.msra.mxu0 %v3561
    %3615 = vmatprep.subr.mxu0 0.0
    %3616 = vmatpush1.msra.mxu0 %v3562
    %3617 = vmatprep.subr.mxu0 0.0
    %3618 = vmatpush1.msra.mxu0 %v3563
    %3619 = vmatprep.subr.mxu0 0.0
    %3620 = vmatpush1.msra.mxu0 %v3564
    %3621 = vmatprep.subr.mxu0 0.0
    %3622 = vmatpush1.msra.mxu0 %v3565
    %3623 = vmatprep.subr.mxu0 0.0
    %3624 = vmatpush1.msra.mxu0 %v3566
    %3625 = vmatprep.subr.mxu0 0.0
    %3626 = vmatpush1.msra.mxu0 %v3567
    %3627 = vmatprep.subr.mxu0 0.0
    %3628 = vmatpush1.msra.mxu0 %v3568
    %3629 = vmatprep.subr.mxu0 0.0
    %3630 = vmatpush1.msra.mxu0 %v3569
    %3631 = vmatprep.subr.mxu0 0.0
    %3632 = vmatpush1.msra.mxu0 %v3570
    %3633 = vmatprep.subr.mxu0 0.0
    %3634 = vmatpush1.msra.mxu0 %v3571
    %3635 = vmatprep.subr.mxu0 0.0
    %3636 = vmatpush1.msra.mxu0 %v3572
    %3637 = vmatprep.mubr.f32.mxu0 %v3540
    %3638 = vmatmul.mubr.f32.gmra.mrb[0].mxu0 %v3539
    %v3639 = vpop.f32.mrb[0].mxu0
    %v3640 = vadd.f32 0.0, %v3639
    %v3641 = vpop.f32.mrb[0].mxu0
    %3642 = vdwg.mxu0
    %v3643 = vmax.f32 %v3640, 0.0
    %v3644 = vld [vmem:[%s7] sm:$0xff]
    %v3645 = vld [vmem:[%s7 + $0x8] sm:$0xff]
    %v3646 = vld [vmem:[%s7 + $0x10] sm:$0xff]
    %v3647 = vld [vmem:[%s7 + $0x18] sm:$0xff]
    %v3648 = vld [vmem:[%s7 + $0x20] sm:$0xff]
    %v3649 = vld [vmem:[%s7 + $0x28] sm:$0xff]
    %v3650 = vld [vmem:[%s7 + $0x30] sm:$0xff]
    %v3651 = vld [vmem:[%s7 + $0x38] sm:$0xff]
    %v3652 = vld [vmem:[%s7 + $0x40] sm:$0xff]
    %v3653 = vld [vmem:[%s7 + $0x48] sm:$0xff]
    %v3654 = vld [vmem:[%s7 + $0x50] sm:$0xff]
    %v3655 = vld [vmem:[%s7 + $0x58] sm:$0xff]
    %v3656 = vld [vmem:[%s7 + $0x60] sm:$0xff]
    %v3657 = vld [vmem:[%s7 + $0x68] sm:$0xff]
    %v3658 = vld [vmem:[%s7 + $0x70] sm:$0xff]
    %v3659 = vld [vmem:[%s7 + $0x78] sm:$0xff]
    %3660 = vmatprep.subr.mxu0 0.0
    %3661 = vmatpush1.msra.mxu0 %v3644
    %3662 = vmatprep.subr.mxu0 0.0
    %3663 = vmatpush1.msra.mxu0 %v3645
    %3664 = vmatprep.subr.mxu0 0.0
    %3665 = vmatpush1.msra.mxu0 %v3646
    %3666 = vmatprep.subr.mxu0 0.0
    %3667 = vmatpush1.msra.mxu0 %v3647
    %3668 = vmatprep.subr.mxu0 0.0
    %3669 = vmatpush1.msra.mxu0 %v3648
    %3670 = vmatprep.subr.mxu0 0.0
    %3671 = vmatpush1.msra.mxu0 %v3649
    %3672 = vmatprep.subr.mxu0 0.0
    %3673 = vmatpush1.msra.mxu0 %v3650
    %3674 = vmatprep.subr.mxu0 0.0
    %3675 = vmatpush1.msra.mxu0 %v3651
    %3676 = vmatprep.subr.mxu0 0.0
    %3677 = vmatpush1.msra.mxu0 %v3652
    %3678 = vmatprep.subr.mxu0 0.0
    %3679 = vmatpush1.msra.mxu0 %v3653
    %3680 = vmatprep.subr.mxu0 0.0
    %3681 = vmatpush1.msra.mxu0 %v3654
    %3682 = vmatprep.subr.mxu0 0.0
    %3683 = vmatpush1.msra.mxu0 %v3655
    %3684 = vmatprep.subr.mxu0 0.0
    %3685 = vmatpush1.msra.mxu0 %v3656
    %3686 = vmatprep.subr.mxu0 0.0
    %3687 = vmatpush1.msra.mxu0 %v3657
    %3688 = vmatprep.subr.mxu0 0.0
    %3689 = vmatpush1.msra.mxu0 %v3658
    %3690 = vmatprep.subr.mxu0 0.0
    %3691 = vmatpush1.msra.mxu0 %v3659
    %3692 = vmatprep.subr.mxu0 0.0
    %3693 = vmatpush1.msra.mxu0 0.0
    %3694 = vmatprep.subr.mxu0 0.0
    %3695 = vmatpush1.msra.mxu0 0.0
    %3696 = vmatprep.subr.mxu0 0.0
    %3697 = vmatpush1.msra.mxu0 0.0
    %3698 = vmatprep.subr.mxu0 0.0
    %3699 = vmatpush1.msra.mxu0 0.0
    %3700 = vmatprep.subr.mxu0 0.0
    %3701 = vmatpush1.msra.mxu0 0.0
    %3702 = vmatprep.subr.mxu0 0.0
    %3703 = vmatpush1.msra.mxu0 0.0
    %3704 = vmatprep.subr.mxu0 0.0
    %3705 = vmatpush1.msra.mxu0 0.0
    %3706 = vmatprep.subr.mxu0 0.0
    %3707 = vmatpush1.msra.mxu0 0.0
    %3708 = vmatprep.subr.mxu0 0.0
    %3709 = vmatpush1.msra.mxu0 0.0
    %3710 = vmatprep.subr.mxu0 0.0
    %3711 = vmatpush1.msra.mxu0 0.0
    %3712 = vmatprep.subr.mxu0 0.0
    %3713 = vmatpush1.msra.mxu0 0.0
    %3714 = vmatprep.subr.mxu0 0.0
    %3715 = vmatpush1.msra.mxu0 0.0
    %3716 = vmatprep.subr.mxu0 0.0
    %3717 = vmatpush1.msra.mxu0 0.0
    %3718 = vmatprep.subr.mxu0 0.0
    %3719 = vmatpush1.msra.mxu0 0.0
    %3720 = vmatprep.subr.mxu0 0.0
    %3721 = vmatpush1.msra.mxu0 0.0
    %3722 = vmatprep.subr.mxu0 0.0
    %3723 = vmatpush1.msra.mxu0 0.0
    %3724 = vmatprep.mubr.f32.mxu0 0.0
    %3725 = vmatmul.mubr.f32.gmra.mrb[0].mxu0 %v3643
    %v3726 = vpop.f32.mrb[0].mxu0
    %v3727 = vadd.f32 0.0, %v3726
    %v3728 = vpop.f32.mrb[0].mxu0
    %3729 = vdwg.mxu0
    %v3730 = vmax.f32 %v3727, 0.0
    %v3731 = vld [vmem:[%s8] sm:$0xff]
    %v3732 = vld [vmem:[%s8 + $0x8] sm:$0xff]
    %v3733 = vld [vmem:[%s8 + $0x10] sm:$0xff]
    %v3734 = vld [vmem:[%s8 + $0x18] sm:$0xff]
    %v3735 = vld [vmem:[%s8 + $0x20] sm:$0xff]
    %v3736 = vld [vmem:[%s8 + $0x28] sm:$0xff]
    %v3737 = vld [vmem:[%s8 + $0x30] sm:$0xff]
    %v3738 = vld [vmem:[%s8 + $0x38] sm:$0xff]
    %v3739 = vld [vmem:[%s8 + $0x40] sm:$0xff]
    %v3740 = vld [vmem:[%s8 + $0x48] sm:$0xff]
    %v3741 = vld [vmem:[%s8 + $0x50] sm:$0xff]
    %v3742 = vld [vmem:[%s8 + $0x58] sm:$0xff]
    %v3743 = vld [vmem:[%s8 + $0x60] sm:$0xff]
    %v3744 = vld [vmem:[%s8 + $0x68] sm:$0xff]
    %v3745 = vld [vmem:[%s8 + $0x70] sm:$0xff]
    %v3746 = vld [vmem:[%s8 + $0x78] sm:$0xff]
    %3747 = vmatprep.subr.mxu0 0.0
    %3748 = vmatpush1.msra.mxu0 %v3731
    %3749 = vmatprep.subr.mxu0 0.0
    %3750 = vmatpush1.msra.mxu0 %v3732
    %3751 = vmatprep.subr.mxu0 0.0
    %3752 = vmatpush1.msra.mxu0 %v3733
    %3753 = vmatprep.subr.mxu0 0.0
    %3754 = vmatpush1.msra.mxu0 %v3734
    %3755 = vmatprep.subr.mxu0 0.0
    %3756 = vmatpush1.msra.mxu0 %v3735
    %3757 = vmatprep.subr.mxu0 0.0
    %3758 = vmatpush1.msra.mxu0 %v3736
    %3759 = vmatprep.subr.mxu0 0.0
    %3760 = vmatpush1.msra.mxu0 %v3737
    %3761 = vmatprep.subr.mxu0 0.0
    %3762 = vmatpush1.msra.mxu0 %v3738
    %3763 = vmatprep.subr.mxu0 0.0
    %3764 = vmatpush1.msra.mxu0 %v3739
    %3765 = vmatprep.subr.mxu0 0.0
    %3766 = vmatpush1.msra.mxu0 %v3740
    %3767 = vmatprep.subr.mxu0 0.0
    %3768 = vmatpush1.msra.mxu0 %v3741
    %3769 = vmatprep.subr.mxu0 0.0
    %3770 = vmatpush1.msra.mxu0 %v3742
    %3771 = vmatprep.subr.mxu0 0.0
    %3772 = vmatpush1.msra.mxu0 %v3743
    %3773 = vmatprep.subr.mxu0 0.0
    %3774 = vmatpush1.msra.mxu0 %v3744
    %3775 = vmatprep.subr.mxu0 0.0
    %3776 = vmatpush1.msra.mxu0 %v3745
    %3777 = vmatprep.subr.mxu0 0.0
    %3778 = vmatpush1.msra.mxu0 %v3746
    %3779 = vmatprep.subr.mxu0 0.0
    %3780 = vmatpush1.msra.mxu0 0.0
    %3781 = vmatprep.subr.mxu0 0.0
    %3782 = vmatpush1.msra.mxu0 0.0
    %3783 = vmatprep.subr.mxu0 0.0
    %3784 = vmatpush1.msra.mxu0 0.0
    %3785 = vmatprep.subr.mxu0 0.0
    %3786 = vmatpush1.msra.mxu0 0.0
    %3787 = vmatprep.subr.mxu0 0.0
    %3788 = vmatpush1.msra.mxu0 0.0
    %3789 = vmatprep.subr.mxu0 0.0
    %3790 = vmatpush1.msra.mxu0 0.0
    %3791 = vmatprep.subr.mxu0 0.0
    %3792 = vmatpush1.msra.mxu0 0.0
    %3793 = vmatprep.subr.mxu0 0.0
    %3794 = vmatpush1.msra.mxu0 0.0
    %3795 = vmatprep.subr.mxu0 0.0
    %3796 = vmatpush1.msra.mxu0 0.0
    %3797 = vmatprep.subr.mxu0 0.0
    %3798 = vmatpush1.msra.mxu0 0.0
    %3799 = vmatprep.subr.mxu0 0.0
    %3800 = vmatpush1.msra.mxu0 0.0
    %3801 = vmatprep.subr.mxu0 0.0
    %3802 = vmatpush1.msra.mxu0 0.0
    %3803 = vmatprep.subr.mxu0 0.0
    %3804 = vmatpush1.msra.mxu0 0.0
    %3805 = vmatprep.subr.mxu0 0.0
    %3806 = vmatpush1.msra.mxu0 0.0
    %3807 = vmatprep.subr.mxu0 0.0
    %3808 = vmatpush1.msra.mxu0 0.0
    %3809 = vmatprep.subr.mxu0 0.0
    %3810 = vmatpush1.msra.mxu0 0.0
    %3811 = vmatprep.mubr.f32.mxu0 0.0
    %3812 = vmatmul.mubr.f32.gmra.mrb[0].mxu0 %v3730
    %v3813 = vpop.f32.mrb[0].mxu0
    %v3814 = vadd.f32 0.0, %v3813
    %v3815 = vpop.f32.mrb[0].mxu0
    %3816 = vdwg.mxu0
    %vm3817 = vcmask 74752
    %3818 = vst.msk [vmem:[#allocation2] sm:$0x3] %vm3817, %v3814
    // Predicated region
    $region38: #{net_forward.1} parent=1 // pred_check
      _
    $region39: #{net_forward.1} parent=1 // pred_check_branch
      %3820 = sbr.rel (0) target = $region41
    $region40: #{net_forward.1} parent=1 // pred_region
      %s3822 = ssub.s32 32, 32
      %3823 = vsyncadd [#allocation3], %s3822
      %s3825 = sshll.u32 [#allocation2], 4
      %s3826 = int_to_ptr.vmem [resolvable:$true] %s3825
      %3828 = dma.vmem_to_hbm [thread:$0]  %s3826, 32, %s9, [#allocation3]
    $region41: #{net_forward.1} parent=1 // pred_fallthru
      _
    // Predicated region
    $region42: #{net_forward.1} parent=1 // pred_check
      _
    $region43: #{net_forward.1} parent=1 // pred_check_branch
      %3830 = sbr.rel (0) target = $region45
    $region44: #{net_forward.1} parent=1 // pred_region
      %3831 = dma.done [#allocation3], 32
    $region45: #{net_forward.1} parent=1 // pred_fallthru
      _
    %3832 = vsyncpa [#allocation3], 1

</llo_original>
